<compile_context>
chip_gen: v6e
topology: v6e:2x2x1
jax: 0.10.0
libtpu: 0.0.40
codegen_flags: <defaults>
</compile_context>

<pallas_src>
import functools
import math

import jax
import jax.numpy as jnp
from jax import lax
from jax.experimental import pallas as pl
from jax.experimental.pallas import tpu as pltpu


# -----------------------------------------------------------------------------
# Fused kernel: 1x1 conv -> depthwise 3x3 -> all-head channel attention ->
# output projection.  One grid step per batch element.
# -----------------------------------------------------------------------------
def _self_attention_kernel(x_ref, wqkv_ref, bqkv_ref, wdw_ref, bdw_ref,
                           mask_ref, temp_ref, hbias_ref, wproj_ref, bproj_ref,
                           o_ref, dw_ref, *, H, W, C):
    L = H * W
    # tap order matches wdw/mask layout: t = (dy+1)*3 + (dx+1)
    offsets = [dy * W + dx for dy in (-1, 0, 1) for dx in (-1, 0, 1)]

    x = x_ref[0]                                              # (C, L) bf16

    # ---- 1x1 conv + depthwise 3x3 (zero padded), one q/k/v chunk at a time --
    for part in range(3):
        lo, hi = part * C, (part + 1) * C
        z = jnp.dot(wqkv_ref[lo:hi, :], x,
                    preferred_element_type=jnp.float32)       # (C, L) f32
        z = z + bqkv_ref[lo:hi, :]                            # + bias (C, 1)

        acc = jnp.zeros((C, L), jnp.float32)
        for t, off in enumerate(offsets):
            if off == 0:
                tap = z                                       # center tap
            else:
                # neighbour (y+dy, x+dx): circular lane roll, wrapped/out-of-
                # image lanes zeroed by the precomputed mask.
                tap = pltpu.roll(z, (-off) % L, axis=1) * mask_ref[t]
            acc = acc + tap * wdw_ref[t, lo:hi, :]            # per-channel weight
        dw_ref[lo:hi, :] = acc + bdw_ref[lo:hi, :]

    # ---- all-head channel attention (block-diagonal masked) -----------------
    q = dw_ref[0:C, :]                                        # (C, L) f32
    k = dw_ref[C:2 * C, :]
    v = dw_ref[2 * C:3 * C, :]

    # F.normalize(dim=-1): x * rsqrt(max(sum x^2, 1e-24)).  Temperature is
    # folded into the q scale (per row); valid since cross-head entries are
    # masked out before the softmax.
    q_scale = lax.rsqrt(jnp.maximum(jnp.sum(q * q, axis=-1, keepdims=True),
                                    1e-24)) * temp_ref[...]
    k_scale = lax.rsqrt(jnp.maximum(jnp.sum(k * k, axis=-1, keepdims=True),
                                    1e-24))
    qn = (q * q_scale).astype(jnp.bfloat16)
    kn = (k * k_scale).astype(jnp.bfloat16)

    # One MXU matmul for all heads: (C, C) = qn @ kn^T (contraction over L).
    attn = lax.dot_general(qn, kn, (((1,), (1,)), ((), ())),
                           preferred_element_type=jnp.float32)
    attn = attn + hbias_ref[...]                              # -1e30 off head blocks
    attn = attn - jnp.max(attn, axis=-1, keepdims=True)
    e = jnp.exp(attn)
    p = e * pl.reciprocal(jnp.sum(e, axis=-1, keepdims=True), approx=True)

    # Merged P @ V: block-diagonal p makes this exactly the per-head result.
    ctx = jnp.dot(p.astype(jnp.bfloat16), v.astype(jnp.bfloat16),
                  preferred_element_type=jnp.float32)         # (C, L)

    # Fused output projection: (dim_out, C) @ (C, L) -> lane-dense NCHW tile.
    out = jnp.dot(wproj_ref[...], ctx.astype(jnp.bfloat16),
                  preferred_element_type=jnp.float32)
    o_ref[0] = (out + bproj_ref[...]).astype(o_ref.dtype)


# -----------------------------------------------------------------------------
# Forward wrapper (PyTorch-layout params; NCHW in, NCHW out)
# -----------------------------------------------------------------------------
def self_attention_forward(params, x_nchw, *, num_heads):
    B, C, H, W = x_nchw.shape
    dim_out = params["w_proj"].shape[0]
    C3 = 3 * C
    ch = C // num_heads
    L = H * W

    # Channel-major (C, H*W): a pure reshape of NCHW (no transpose); bf16 for MXU.
    x_cml = x_nchw.reshape(B, C, L).astype(jnp.bfloat16)

    # Kernel-layout parameters (tiny).
    wqkv = params["w_qkv"].astype(jnp.bfloat16)                      # (3C, C)
    bqkv = params["b_qkv"].reshape(C3, 1)
    wdw = params["w_dw"].reshape(C3, 9).T.reshape(9, C3, 1)          # tap-major
    bdw = params["b_dw"].reshape(C3, 1)
    wproj = params["w_proj"].astype(jnp.bfloat16)                    # (dim_out, C)
    bproj = params["b_proj"].reshape(dim_out, 1)

    # Per-tap zero-padding masks over the flattened H*W lane axis.
    ys = jnp.repeat(jnp.arange(H), W)
    xs = jnp.tile(jnp.arange(W), H)
    masks = jnp.stack([
        ((ys + dy >= 0) & (ys + dy < H) & (xs + dx >= 0) & (xs + dx < W))
        for dy in (-1, 0, 1) for dx in (-1, 0, 1)
    ]).astype(jnp.float32).reshape(9, 1, L)

    # Per-row temperature (head of each channel row) and additive
    # block-diagonal head mask (applied before the softmax row max).
    head_id = jnp.repeat(jnp.arange(num_heads), ch)
    temp_rows = jnp.repeat(params["temperature"], ch).reshape(C, 1)
    hbias = jnp.where(head_id[:, None] == head_id[None, :],
                      0.0, -1e30).astype(jnp.float32)                # (C, C)

    kernel = functools.partial(_self_attention_kernel, H=H, W=W, C=C)
    out = pl.pallas_call(
        kernel,
        out_shape=jax.ShapeDtypeStruct((B, dim_out, L), jnp.float32),
        grid=(B,),
        in_specs=[
            pl.BlockSpec((1, C, L), lambda b: (b, 0, 0)),       # x (channel-major)
            pl.BlockSpec((C3, C), lambda b: (0, 0)),            # w_qkv
            pl.BlockSpec((C3, 1), lambda b: (0, 0)),            # b_qkv
            pl.BlockSpec((9, C3, 1), lambda b: (0, 0, 0)),      # w_dw (tap-major)
            pl.BlockSpec((C3, 1), lambda b: (0, 0)),            # b_dw
            pl.BlockSpec((9, 1, L), lambda b: (0, 0, 0)),       # pad masks
            pl.BlockSpec((C, 1), lambda b: (0, 0)),             # temperature rows
            pl.BlockSpec((C, C), lambda b: (0, 0)),             # head block mask
            pl.BlockSpec((dim_out, C), lambda b: (0, 0)),       # w_proj
            pl.BlockSpec((dim_out, 1), lambda b: (0, 0)),       # b_proj
        ],
        out_specs=pl.BlockSpec((1, dim_out, L), lambda b: (b, 0, 0)),
        scratch_shapes=[pltpu.VMEM((C3, L), jnp.float32)],      # depthwise result
        compiler_params=pltpu.CompilerParams(
            dimension_semantics=("parallel",),
            vmem_limit_bytes=32 * 1024 * 1024),
    )(x_cml, wqkv, bqkv, wdw, bdw, masks, temp_rows, hbias, wproj, bproj)

    return out.reshape(B, dim_out, H, W)                        # NCHW (free reshape)


# -----------------------------------------------------------------------------
# Pure-JAX f32 reference (mirrors the PyTorch module) for a sanity check.
# -----------------------------------------------------------------------------
def self_attention_reference(params, x, *, num_heads):
    B, C, H, W = x.shape
    dim_out = params["w_proj"].shape[0]
    ch = C // num_heads
    L = H * W
    qkv = jnp.einsum("bchw,oc->bohw", x, params["w_qkv"]) + params["b_qkv"][None, :, None, None]
    qkv_p = jnp.pad(qkv, ((0, 0), (0, 0), (1, 1), (1, 1)))
    dw = jnp.zeros_like(qkv)
    for dy in range(3):
        for dx in range(3):
            dw = dw + qkv_p[:, :, dy:dy + H, dx:dx + W] * params["w_dw"][None, :, dy, dx, None, None]
    dw = dw + params["b_dw"][None, :, None, None]
    q, k, v = jnp.split(dw, 3, axis=1)
    q = q.reshape(B, num_heads, ch, L)
    k = k.reshape(B, num_heads, ch, L)
    v = v.reshape(B, num_heads, ch, L)
    q = q / jnp.maximum(jnp.linalg.norm(q, axis=-1, keepdims=True), 1e-12)
    k = k / jnp.maximum(jnp.linalg.norm(k, axis=-1, keepdims=True), 1e-12)
    attn = jnp.einsum("bhcl,bhdl->bhcd", q, k) * params["temperature"][None, :, None, None]
    attn = jax.nn.softmax(attn, axis=-1)
    out = jnp.einsum("bhcd,bhdl->bhcl", attn, v).reshape(B, C, L)
    out = jnp.einsum("bcl,oc->bol", out, params["w_proj"]) + params["b_proj"][None, :, None]
    return out.reshape(B, dim_out, H, W)


# -----------------------------------------------------------------------------
# Deterministic parameter init (PyTorch-like uniform bounds)
# -----------------------------------------------------------------------------
def init_self_attention(key, dim, dim_out, num_heads, bias):
    ks = jax.random.split(key, 6)

    def u(k, shape, fan_in):
        bnd = 1.0 / math.sqrt(fan_in)
        return jax.random.uniform(k, shape, jnp.float32, -bnd, bnd)

    C3 = 3 * dim
    zeros = lambda n: jnp.zeros((n,), jnp.float32)
    return {
        "w_qkv": u(ks[0], (C3, dim), dim),                  # Conv2d(dim, 3*dim, 1)
        "b_qkv": u(ks[1], (C3,), dim) if bias else zeros(C3),
        "w_dw": u(ks[2], (C3, 3, 3), 9),                    # depthwise, fan_in=9
        "b_dw": u(ks[3], (C3,), 9) if bias else zeros(C3),
        "w_proj": u(ks[4], (dim_out, dim), dim),            # Conv2d(dim, dim_out, 1)
        "b_proj": u(ks[5], (dim_out,), dim) if bias else zeros(dim_out),
        "temperature": jnp.ones((num_heads,), jnp.float32),
    }


# -----------------------------------------------------------------------------
# Main
# -----------------------------------------------------------------------------
if __name__ == "__main__":
    B, H, W = 2, 16, 16
    dim, dim_out, num_heads, bias = 32, 16, 4, False       # as used in Alignformer

    root = jax.random.PRNGKey(0)
    k_x, k_p = jax.random.split(root)
    x = jax.random.normal(k_x, (B, dim, H, W), jnp.float32)    # NCHW, PyTorch convention
    params = init_self_attention(k_p, dim, dim_out, num_heads, bias)

    fwd = jax.jit(functools.partial(self_attention_forward, num_heads=num_heads))
    out = jax.block_until_ready(fwd(params, x))

    assert out.shape == (B, dim_out, H, W), out.shape
    assert bool(jnp.all(jnp.isfinite(out)))

    # Loose check vs an f32 reference (kernel uses bf16 MXU operands + approx
    # reciprocal, so allow a small relative L2 error).
    ref = self_attention_reference(params, x, num_heads=num_heads)
    rel_l2 = float(jnp.linalg.norm(out - ref) / (jnp.linalg.norm(ref) + 1e-8))
    assert rel_l2 < 3e-2, f"mismatch vs reference: rel_l2={rel_l2:.4f}"

    print("KERNEL_OK")
</pallas_src>

<mosaic_0001>
module attributes {stable_mosaic.version = 11 : i64} {
  func.func @_self_attention_kernel(%arg0: i32, %arg1: memref<1x32x256xbf16, #tpu.memory_space<vmem>>, %arg2: memref<96x32xbf16, #tpu.memory_space<vmem>>, %arg3: memref<96x1xf32, #tpu.memory_space<vmem>>, %arg4: memref<9x96x1xf32, #tpu.memory_space<vmem>>, %arg5: memref<96x1xf32, #tpu.memory_space<vmem>>, %arg6: memref<9x1x256xf32, #tpu.memory_space<vmem>>, %arg7: memref<32x1xf32, #tpu.memory_space<vmem>>, %arg8: memref<32x32xf32, #tpu.memory_space<vmem>>, %arg9: memref<16x32xbf16, #tpu.memory_space<vmem>>, %arg10: memref<16x1xf32, #tpu.memory_space<vmem>>, %arg11: memref<1x16x256xf32, #tpu.memory_space<vmem>>, %arg12: memref<96x256xf32, #tpu.memory_space<vmem>>) attributes {dimension_semantics = [#tpu.dimension_semantics<parallel>], iteration_bounds = array<i64: 2>, scalar_prefetch = 0 : i64, scratch_operands = 1 : i64, tpu.core_type = #tpu.core_type<tc>, window_params = [{transform_indices = @transform_0, window_bounds = array<i64: 1, 32, 256>}, {pipeline_mode = #tpu.pipeline_mode<synchronous>, transform_indices = @transform_1, window_bounds = array<i64: 96, 32>}, {pipeline_mode = #tpu.pipeline_mode<synchronous>, transform_indices = @transform_2, window_bounds = array<i64: 96, 1>}, {pipeline_mode = #tpu.pipeline_mode<synchronous>, transform_indices = @transform_3, window_bounds = array<i64: 9, 96, 1>}, {pipeline_mode = #tpu.pipeline_mode<synchronous>, transform_indices = @transform_4, window_bounds = array<i64: 96, 1>}, {pipeline_mode = #tpu.pipeline_mode<synchronous>, transform_indices = @transform_5, window_bounds = array<i64: 9, 1, 256>}, {pipeline_mode = #tpu.pipeline_mode<synchronous>, transform_indices = @transform_6, window_bounds = array<i64: 32, 1>}, {pipeline_mode = #tpu.pipeline_mode<synchronous>, transform_indices = @transform_7, window_bounds = array<i64: 32, 32>}, {pipeline_mode = #tpu.pipeline_mode<synchronous>, transform_indices = @transform_8, window_bounds = array<i64: 16, 32>}, {pipeline_mode = #tpu.pipeline_mode<synchronous>, transform_indices = @transform_9, window_bounds = array<i64: 16, 1>}, {transform_indices = @transform_10, window_bounds = array<i64: 1, 16, 256>}]} {
    %c0 = arith.constant 0 : index
    %c0_0 = arith.constant 0 : index
    %c0_1 = arith.constant 0 : index
    %0 = vector.load %arg1[%c0, %c0_0, %c0_1] : memref<1x32x256xbf16, #tpu.memory_space<vmem>>, vector<1x32x256xbf16>
    %1 = vector.shape_cast %0 : vector<1x32x256xbf16> to vector<32x256xbf16>
    %c0_2 = arith.constant 0 : index
    %c0_3 = arith.constant 0 : index
    %2 = vector.load %arg2[%c0_2, %c0_3] : memref<96x32xbf16, #tpu.memory_space<vmem>>, vector<32x32xbf16>
    %cst = arith.constant dense<0.000000e+00> : vector<32x256xf32>
    %3 = tpu.matmul %2, %1, %cst {dimension_numbers = #tpu.dot_dimension_numbers<[1], [0], [0], [1], [0, 0, 1, 1], [], []>} : vector<32x32xbf16>, vector<32x256xbf16>, vector<32x256xf32> -> vector<32x256xf32>
    %c0_4 = arith.constant 0 : index
    %c0_5 = arith.constant 0 : index
    %4 = vector.load %arg3[%c0_4, %c0_5] : memref<96x1xf32, #tpu.memory_space<vmem>>, vector<32x1xf32>
    %5 = vector.broadcast %4 : vector<32x1xf32> to vector<32x256xf32>
    %6 = arith.addf %3, %5 : vector<32x256xf32>
    %cst_6 = arith.constant 0.000000e+00 : f32
    %7 = vector.broadcast %cst_6 : f32 to vector<32x256xf32>
    %c17_i32 = arith.constant 17 : i32
    %8 = tpu.dynamic_rotate %6 by %c17_i32 dim 1 : vector<32x256xf32>, i32 -> vector<32x256xf32>
    %c0_7 = arith.constant 0 : index
    %c0_8 = arith.constant 0 : index
    %c0_9 = arith.constant 0 : index
    %9 = vector.load %arg6[%c0_7, %c0_8, %c0_9] : memref<9x1x256xf32, #tpu.memory_space<vmem>>, vector<1x1x256xf32>
    %10 = vector.shape_cast %9 : vector<1x1x256xf32> to vector<1x256xf32>
    %11 = vector.broadcast %10 : vector<1x256xf32> to vector<32x256xf32>
    %12 = arith.mulf %8, %11 : vector<32x256xf32>
    %c0_10 = arith.constant 0 : index
    %c0_11 = arith.constant 0 : index
    %c0_12 = arith.constant 0 : index
    %13 = vector.load %arg4[%c0_10, %c0_11, %c0_12] : memref<9x96x1xf32, #tpu.memory_space<vmem>>, vector<1x32x1xf32>
    %14 = vector.shape_cast %13 : vector<1x32x1xf32> to vector<32x1xf32>
    %15 = vector.broadcast %14 : vector<32x1xf32> to vector<32x256xf32>
    %16 = arith.mulf %12, %15 : vector<32x256xf32>
    %17 = arith.addf %7, %16 : vector<32x256xf32>
    %c16_i32 = arith.constant 16 : i32
    %18 = tpu.dynamic_rotate %6 by %c16_i32 dim 1 : vector<32x256xf32>, i32 -> vector<32x256xf32>
    %c1 = arith.constant 1 : index
    %c0_13 = arith.constant 0 : index
    %c0_14 = arith.constant 0 : index
    %19 = vector.load %arg6[%c1, %c0_13, %c0_14] : memref<9x1x256xf32, #tpu.memory_space<vmem>>, vector<1x1x256xf32>
    %20 = vector.shape_cast %19 : vector<1x1x256xf32> to vector<1x256xf32>
    %21 = vector.broadcast %20 : vector<1x256xf32> to vector<32x256xf32>
    %22 = arith.mulf %18, %21 : vector<32x256xf32>
    %c1_15 = arith.constant 1 : index
    %c0_16 = arith.constant 0 : index
    %c0_17 = arith.constant 0 : index
    %23 = vector.load %arg4[%c1_15, %c0_16, %c0_17] : memref<9x96x1xf32, #tpu.memory_space<vmem>>, vector<1x32x1xf32>
    %24 = vector.shape_cast %23 : vector<1x32x1xf32> to vector<32x1xf32>
    %25 = vector.broadcast %24 : vector<32x1xf32> to vector<32x256xf32>
    %26 = arith.mulf %22, %25 : vector<32x256xf32>
    %27 = arith.addf %17, %26 : vector<32x256xf32>
    %c15_i32 = arith.constant 15 : i32
    %28 = tpu.dynamic_rotate %6 by %c15_i32 dim 1 : vector<32x256xf32>, i32 -> vector<32x256xf32>
    %c2 = arith.constant 2 : index
    %c0_18 = arith.constant 0 : index
    %c0_19 = arith.constant 0 : index
    %29 = vector.load %arg6[%c2, %c0_18, %c0_19] : memref<9x1x256xf32, #tpu.memory_space<vmem>>, vector<1x1x256xf32>
    %30 = vector.shape_cast %29 : vector<1x1x256xf32> to vector<1x256xf32>
    %31 = vector.broadcast %30 : vector<1x256xf32> to vector<32x256xf32>
    %32 = arith.mulf %28, %31 : vector<32x256xf32>
    %c2_20 = arith.constant 2 : index
    %c0_21 = arith.constant 0 : index
    %c0_22 = arith.constant 0 : index
    %33 = vector.load %arg4[%c2_20, %c0_21, %c0_22] : memref<9x96x1xf32, #tpu.memory_space<vmem>>, vector<1x32x1xf32>
    %34 = vector.shape_cast %33 : vector<1x32x1xf32> to vector<32x1xf32>
    %35 = vector.broadcast %34 : vector<32x1xf32> to vector<32x256xf32>
    %36 = arith.mulf %32, %35 : vector<32x256xf32>
    %37 = arith.addf %27, %36 : vector<32x256xf32>
    %c1_i32 = arith.constant 1 : i32
    %38 = tpu.dynamic_rotate %6 by %c1_i32 dim 1 : vector<32x256xf32>, i32 -> vector<32x256xf32>
    %c3 = arith.constant 3 : index
    %c0_23 = arith.constant 0 : index
    %c0_24 = arith.constant 0 : index
    %39 = vector.load %arg6[%c3, %c0_23, %c0_24] : memref<9x1x256xf32, #tpu.memory_space<vmem>>, vector<1x1x256xf32>
    %40 = vector.shape_cast %39 : vector<1x1x256xf32> to vector<1x256xf32>
    %41 = vector.broadcast %40 : vector<1x256xf32> to vector<32x256xf32>
    %42 = arith.mulf %38, %41 : vector<32x256xf32>
    %c3_25 = arith.constant 3 : index
    %c0_26 = arith.constant 0 : index
    %c0_27 = arith.constant 0 : index
    %43 = vector.load %arg4[%c3_25, %c0_26, %c0_27] : memref<9x96x1xf32, #tpu.memory_space<vmem>>, vector<1x32x1xf32>
    %44 = vector.shape_cast %43 : vector<1x32x1xf32> to vector<32x1xf32>
    %45 = vector.broadcast %44 : vector<32x1xf32> to vector<32x256xf32>
    %46 = arith.mulf %42, %45 : vector<32x256xf32>
    %47 = arith.addf %37, %46 : vector<32x256xf32>
    %c4 = arith.constant 4 : index
    %c0_28 = arith.constant 0 : index
    %c0_29 = arith.constant 0 : index
    %48 = vector.load %arg4[%c4, %c0_28, %c0_29] : memref<9x96x1xf32, #tpu.memory_space<vmem>>, vector<1x32x1xf32>
    %49 = vector.shape_cast %48 : vector<1x32x1xf32> to vector<32x1xf32>
    %50 = vector.broadcast %49 : vector<32x1xf32> to vector<32x256xf32>
    %51 = arith.mulf %6, %50 : vector<32x256xf32>
    %52 = arith.addf %47, %51 : vector<32x256xf32>
    %c255_i32 = arith.constant 255 : i32
    %53 = tpu.dynamic_rotate %6 by %c255_i32 dim 1 : vector<32x256xf32>, i32 -> vector<32x256xf32>
    %c5 = arith.constant 5 : index
    %c0_30 = arith.constant 0 : index
    %c0_31 = arith.constant 0 : index
    %54 = vector.load %arg6[%c5, %c0_30, %c0_31] : memref<9x1x256xf32, #tpu.memory_space<vmem>>, vector<1x1x256xf32>
    %55 = vector.shape_cast %54 : vector<1x1x256xf32> to vector<1x256xf32>
    %56 = vector.broadcast %55 : vector<1x256xf32> to vector<32x256xf32>
    %57 = arith.mulf %53, %56 : vector<32x256xf32>
    %c5_32 = arith.constant 5 : index
    %c0_33 = arith.constant 0 : index
    %c0_34 = arith.constant 0 : index
    %58 = vector.load %arg4[%c5_32, %c0_33, %c0_34] : memref<9x96x1xf32, #tpu.memory_space<vmem>>, vector<1x32x1xf32>
    %59 = vector.shape_cast %58 : vector<1x32x1xf32> to vector<32x1xf32>
    %60 = vector.broadcast %59 : vector<32x1xf32> to vector<32x256xf32>
    %61 = arith.mulf %57, %60 : vector<32x256xf32>
    %62 = arith.addf %52, %61 : vector<32x256xf32>
    %c241_i32 = arith.constant 241 : i32
    %63 = tpu.dynamic_rotate %6 by %c241_i32 dim 1 : vector<32x256xf32>, i32 -> vector<32x256xf32>
    %c6 = arith.constant 6 : index
    %c0_35 = arith.constant 0 : index
    %c0_36 = arith.constant 0 : index
    %64 = vector.load %arg6[%c6, %c0_35, %c0_36] : memref<9x1x256xf32, #tpu.memory_space<vmem>>, vector<1x1x256xf32>
    %65 = vector.shape_cast %64 : vector<1x1x256xf32> to vector<1x256xf32>
    %66 = vector.broadcast %65 : vector<1x256xf32> to vector<32x256xf32>
    %67 = arith.mulf %63, %66 : vector<32x256xf32>
    %c6_37 = arith.constant 6 : index
    %c0_38 = arith.constant 0 : index
    %c0_39 = arith.constant 0 : index
    %68 = vector.load %arg4[%c6_37, %c0_38, %c0_39] : memref<9x96x1xf32, #tpu.memory_space<vmem>>, vector<1x32x1xf32>
    %69 = vector.shape_cast %68 : vector<1x32x1xf32> to vector<32x1xf32>
    %70 = vector.broadcast %69 : vector<32x1xf32> to vector<32x256xf32>
    %71 = arith.mulf %67, %70 : vector<32x256xf32>
    %72 = arith.addf %62, %71 : vector<32x256xf32>
    %c240_i32 = arith.constant 240 : i32
    %73 = tpu.dynamic_rotate %6 by %c240_i32 dim 1 : vector<32x256xf32>, i32 -> vector<32x256xf32>
    %c7 = arith.constant 7 : index
    %c0_40 = arith.constant 0 : index
    %c0_41 = arith.constant 0 : index
    %74 = vector.load %arg6[%c7, %c0_40, %c0_41] : memref<9x1x256xf32, #tpu.memory_space<vmem>>, vector<1x1x256xf32>
    %75 = vector.shape_cast %74 : vector<1x1x256xf32> to vector<1x256xf32>
    %76 = vector.broadcast %75 : vector<1x256xf32> to vector<32x256xf32>
    %77 = arith.mulf %73, %76 : vector<32x256xf32>
    %c7_42 = arith.constant 7 : index
    %c0_43 = arith.constant 0 : index
    %c0_44 = arith.constant 0 : index
    %78 = vector.load %arg4[%c7_42, %c0_43, %c0_44] : memref<9x96x1xf32, #tpu.memory_space<vmem>>, vector<1x32x1xf32>
    %79 = vector.shape_cast %78 : vector<1x32x1xf32> to vector<32x1xf32>
    %80 = vector.broadcast %79 : vector<32x1xf32> to vector<32x256xf32>
    %81 = arith.mulf %77, %80 : vector<32x256xf32>
    %82 = arith.addf %72, %81 : vector<32x256xf32>
    %c239_i32 = arith.constant 239 : i32
    %83 = tpu.dynamic_rotate %6 by %c239_i32 dim 1 : vector<32x256xf32>, i32 -> vector<32x256xf32>
    %c8 = arith.constant 8 : index
    %c0_45 = arith.constant 0 : index
    %c0_46 = arith.constant 0 : index
    %84 = vector.load %arg6[%c8, %c0_45, %c0_46] : memref<9x1x256xf32, #tpu.memory_space<vmem>>, vector<1x1x256xf32>
    %85 = vector.shape_cast %84 : vector<1x1x256xf32> to vector<1x256xf32>
    %86 = vector.broadcast %85 : vector<1x256xf32> to vector<32x256xf32>
    %87 = arith.mulf %83, %86 : vector<32x256xf32>
    %c8_47 = arith.constant 8 : index
    %c0_48 = arith.constant 0 : index
    %c0_49 = arith.constant 0 : index
    %88 = vector.load %arg4[%c8_47, %c0_48, %c0_49] : memref<9x96x1xf32, #tpu.memory_space<vmem>>, vector<1x32x1xf32>
    %89 = vector.shape_cast %88 : vector<1x32x1xf32> to vector<32x1xf32>
    %90 = vector.broadcast %89 : vector<32x1xf32> to vector<32x256xf32>
    %91 = arith.mulf %87, %90 : vector<32x256xf32>
    %92 = arith.addf %82, %91 : vector<32x256xf32>
    %c0_50 = arith.constant 0 : index
    %c0_51 = arith.constant 0 : index
    %93 = vector.load %arg5[%c0_50, %c0_51] : memref<96x1xf32, #tpu.memory_space<vmem>>, vector<32x1xf32>
    %94 = vector.broadcast %93 : vector<32x1xf32> to vector<32x256xf32>
    %95 = arith.addf %92, %94 : vector<32x256xf32>
    %c0_52 = arith.constant 0 : index
    %c0_53 = arith.constant 0 : index
    %96 = vector.load %arg12[%c0_52, %c0_53] : memref<96x256xf32, #tpu.memory_space<vmem>>, vector<32x256xf32>
    tpu.vector_store %arg12[%c0_52, %c0_53], %95 {strides = array<i32>} : memref<96x256xf32, #tpu.memory_space<vmem>>, vector<32x256xf32>,
    %c32 = arith.constant 32 : index
    %c0_54 = arith.constant 0 : index
    %97 = vector.load %arg2[%c32, %c0_54] : memref<96x32xbf16, #tpu.memory_space<vmem>>, vector<32x32xbf16>
    %cst_55 = arith.constant dense<0.000000e+00> : vector<32x256xf32>
    %98 = tpu.matmul %97, %1, %cst_55 {dimension_numbers = #tpu.dot_dimension_numbers<[1], [0], [0], [1], [0, 0, 1, 1], [], []>} : vector<32x32xbf16>, vector<32x256xbf16>, vector<32x256xf32> -> vector<32x256xf32>
    %c32_56 = arith.constant 32 : index
    %c0_57 = arith.constant 0 : index
    %99 = vector.load %arg3[%c32_56, %c0_57] : memref<96x1xf32, #tpu.memory_space<vmem>>, vector<32x1xf32>
    %100 = vector.broadcast %99 : vector<32x1xf32> to vector<32x256xf32>
    %101 = arith.addf %98, %100 : vector<32x256xf32>
    %cst_58 = arith.constant 0.000000e+00 : f32
    %102 = vector.broadcast %cst_58 : f32 to vector<32x256xf32>
    %c17_i32_59 = arith.constant 17 : i32
    %103 = tpu.dynamic_rotate %101 by %c17_i32_59 dim 1 : vector<32x256xf32>, i32 -> vector<32x256xf32>
    %c0_60 = arith.constant 0 : index
    %c0_61 = arith.constant 0 : index
    %c0_62 = arith.constant 0 : index
    %104 = vector.load %arg6[%c0_60, %c0_61, %c0_62] : memref<9x1x256xf32, #tpu.memory_space<vmem>>, vector<1x1x256xf32>
    %105 = vector.shape_cast %104 : vector<1x1x256xf32> to vector<1x256xf32>
    %106 = vector.broadcast %105 : vector<1x256xf32> to vector<32x256xf32>
    %107 = arith.mulf %103, %106 : vector<32x256xf32>
    %c0_63 = arith.constant 0 : index
    %c32_64 = arith.constant 32 : index
    %c0_65 = arith.constant 0 : index
    %108 = vector.load %arg4[%c0_63, %c32_64, %c0_65] : memref<9x96x1xf32, #tpu.memory_space<vmem>>, vector<1x32x1xf32>
    %109 = vector.shape_cast %108 : vector<1x32x1xf32> to vector<32x1xf32>
    %110 = vector.broadcast %109 : vector<32x1xf32> to vector<32x256xf32>
    %111 = arith.mulf %107, %110 : vector<32x256xf32>
    %112 = arith.addf %102, %111 : vector<32x256xf32>
    %c16_i32_66 = arith.constant 16 : i32
    %113 = tpu.dynamic_rotate %101 by %c16_i32_66 dim 1 : vector<32x256xf32>, i32 -> vector<32x256xf32>
    %c1_67 = arith.constant 1 : index
    %c0_68 = arith.constant 0 : index
    %c0_69 = arith.constant 0 : index
    %114 = vector.load %arg6[%c1_67, %c0_68, %c0_69] : memref<9x1x256xf32, #tpu.memory_space<vmem>>, vector<1x1x256xf32>
    %115 = vector.shape_cast %114 : vector<1x1x256xf32> to vector<1x256xf32>
    %116 = vector.broadcast %115 : vector<1x256xf32> to vector<32x256xf32>
    %117 = arith.mulf %113, %116 : vector<32x256xf32>
    %c1_70 = arith.constant 1 : index
    %c32_71 = arith.constant 32 : index
    %c0_72 = arith.constant 0 : index
    %118 = vector.load %arg4[%c1_70, %c32_71, %c0_72] : memref<9x96x1xf32, #tpu.memory_space<vmem>>, vector<1x32x1xf32>
    %119 = vector.shape_cast %118 : vector<1x32x1xf32> to vector<32x1xf32>
    %120 = vector.broadcast %119 : vector<32x1xf32> to vector<32x256xf32>
    %121 = arith.mulf %117, %120 : vector<32x256xf32>
    %122 = arith.addf %112, %121 : vector<32x256xf32>
    %c15_i32_73 = arith.constant 15 : i32
    %123 = tpu.dynamic_rotate %101 by %c15_i32_73 dim 1 : vector<32x256xf32>, i32 -> vector<32x256xf32>
    %c2_74 = arith.constant 2 : index
    %c0_75 = arith.constant 0 : index
    %c0_76 = arith.constant 0 : index
    %124 = vector.load %arg6[%c2_74, %c0_75, %c0_76] : memref<9x1x256xf32, #tpu.memory_space<vmem>>, vector<1x1x256xf32>
    %125 = vector.shape_cast %124 : vector<1x1x256xf32> to vector<1x256xf32>
    %126 = vector.broadcast %125 : vector<1x256xf32> to vector<32x256xf32>
    %127 = arith.mulf %123, %126 : vector<32x256xf32>
    %c2_77 = arith.constant 2 : index
    %c32_78 = arith.constant 32 : index
    %c0_79 = arith.constant 0 : index
    %128 = vector.load %arg4[%c2_77, %c32_78, %c0_79] : memref<9x96x1xf32, #tpu.memory_space<vmem>>, vector<1x32x1xf32>
    %129 = vector.shape_cast %128 : vector<1x32x1xf32> to vector<32x1xf32>
    %130 = vector.broadcast %129 : vector<32x1xf32> to vector<32x256xf32>
    %131 = arith.mulf %127, %130 : vector<32x256xf32>
    %132 = arith.addf %122, %131 : vector<32x256xf32>
    %c1_i32_80 = arith.constant 1 : i32
    %133 = tpu.dynamic_rotate %101 by %c1_i32_80 dim 1 : vector<32x256xf32>, i32 -> vector<32x256xf32>
    %c3_81 = arith.constant 3 : index
    %c0_82 = arith.constant 0 : index
    %c0_83 = arith.constant 0 : index
    %134 = vector.load %arg6[%c3_81, %c0_82, %c0_83] : memref<9x1x256xf32, #tpu.memory_space<vmem>>, vector<1x1x256xf32>
    %135 = vector.shape_cast %134 : vector<1x1x256xf32> to vector<1x256xf32>
    %136 = vector.broadcast %135 : vector<1x256xf32> to vector<32x256xf32>
    %137 = arith.mulf %133, %136 : vector<32x256xf32>
    %c3_84 = arith.constant 3 : index
    %c32_85 = arith.constant 32 : index
    %c0_86 = arith.constant 0 : index
    %138 = vector.load %arg4[%c3_84, %c32_85, %c0_86] : memref<9x96x1xf32, #tpu.memory_space<vmem>>, vector<1x32x1xf32>
    %139 = vector.shape_cast %138 : vector<1x32x1xf32> to vector<32x1xf32>
    %140 = vector.broadcast %139 : vector<32x1xf32> to vector<32x256xf32>
    %141 = arith.mulf %137, %140 : vector<32x256xf32>
    %142 = arith.addf %132, %141 : vector<32x256xf32>
    %c4_87 = arith.constant 4 : index
    %c32_88 = arith.constant 32 : index
    %c0_89 = arith.constant 0 : index
    %143 = vector.load %arg4[%c4_87, %c32_88, %c0_89] : memref<9x96x1xf32, #tpu.memory_space<vmem>>, vector<1x32x1xf32>
    %144 = vector.shape_cast %143 : vector<1x32x1xf32> to vector<32x1xf32>
    %145 = vector.broadcast %144 : vector<32x1xf32> to vector<32x256xf32>
    %146 = arith.mulf %101, %145 : vector<32x256xf32>
    %147 = arith.addf %142, %146 : vector<32x256xf32>
    %c255_i32_90 = arith.constant 255 : i32
    %148 = tpu.dynamic_rotate %101 by %c255_i32_90 dim 1 : vector<32x256xf32>, i32 -> vector<32x256xf32>
    %c5_91 = arith.constant 5 : index
    %c0_92 = arith.constant 0 : index
    %c0_93 = arith.constant 0 : index
    %149 = vector.load %arg6[%c5_91, %c0_92, %c0_93] : memref<9x1x256xf32, #tpu.memory_space<vmem>>, vector<1x1x256xf32>
    %150 = vector.shape_cast %149 : vector<1x1x256xf32> to vector<1x256xf32>
    %151 = vector.broadcast %150 : vector<1x256xf32> to vector<32x256xf32>
    %152 = arith.mulf %148, %151 : vector<32x256xf32>
    %c5_94 = arith.constant 5 : index
    %c32_95 = arith.constant 32 : index
    %c0_96 = arith.constant 0 : index
    %153 = vector.load %arg4[%c5_94, %c32_95, %c0_96] : memref<9x96x1xf32, #tpu.memory_space<vmem>>, vector<1x32x1xf32>
    %154 = vector.shape_cast %153 : vector<1x32x1xf32> to vector<32x1xf32>
    %155 = vector.broadcast %154 : vector<32x1xf32> to vector<32x256xf32>
    %156 = arith.mulf %152, %155 : vector<32x256xf32>
    %157 = arith.addf %147, %156 : vector<32x256xf32>
    %c241_i32_97 = arith.constant 241 : i32
    %158 = tpu.dynamic_rotate %101 by %c241_i32_97 dim 1 : vector<32x256xf32>, i32 -> vector<32x256xf32>
    %c6_98 = arith.constant 6 : index
    %c0_99 = arith.constant 0 : index
    %c0_100 = arith.constant 0 : index
    %159 = vector.load %arg6[%c6_98, %c0_99, %c0_100] : memref<9x1x256xf32, #tpu.memory_space<vmem>>, vector<1x1x256xf32>
    %160 = vector.shape_cast %159 : vector<1x1x256xf32> to vector<1x256xf32>
    %161 = vector.broadcast %160 : vector<1x256xf32> to vector<32x256xf32>
    %162 = arith.mulf %158, %161 : vector<32x256xf32>
    %c6_101 = arith.constant 6 : index
    %c32_102 = arith.constant 32 : index
    %c0_103 = arith.constant 0 : index
    %163 = vector.load %arg4[%c6_101, %c32_102, %c0_103] : memref<9x96x1xf32, #tpu.memory_space<vmem>>, vector<1x32x1xf32>
    %164 = vector.shape_cast %163 : vector<1x32x1xf32> to vector<32x1xf32>
    %165 = vector.broadcast %164 : vector<32x1xf32> to vector<32x256xf32>
    %166 = arith.mulf %162, %165 : vector<32x256xf32>
    %167 = arith.addf %157, %166 : vector<32x256xf32>
    %c240_i32_104 = arith.constant 240 : i32
    %168 = tpu.dynamic_rotate %101 by %c240_i32_104 dim 1 : vector<32x256xf32>, i32 -> vector<32x256xf32>
    %c7_105 = arith.constant 7 : index
    %c0_106 = arith.constant 0 : index
    %c0_107 = arith.constant 0 : index
    %169 = vector.load %arg6[%c7_105, %c0_106, %c0_107] : memref<9x1x256xf32, #tpu.memory_space<vmem>>, vector<1x1x256xf32>
    %170 = vector.shape_cast %169 : vector<1x1x256xf32> to vector<1x256xf32>
    %171 = vector.broadcast %170 : vector<1x256xf32> to vector<32x256xf32>
    %172 = arith.mulf %168, %171 : vector<32x256xf32>
    %c7_108 = arith.constant 7 : index
    %c32_109 = arith.constant 32 : index
    %c0_110 = arith.constant 0 : index
    %173 = vector.load %arg4[%c7_108, %c32_109, %c0_110] : memref<9x96x1xf32, #tpu.memory_space<vmem>>, vector<1x32x1xf32>
    %174 = vector.shape_cast %173 : vector<1x32x1xf32> to vector<32x1xf32>
    %175 = vector.broadcast %174 : vector<32x1xf32> to vector<32x256xf32>
    %176 = arith.mulf %172, %175 : vector<32x256xf32>
    %177 = arith.addf %167, %176 : vector<32x256xf32>
    %c239_i32_111 = arith.constant 239 : i32
    %178 = tpu.dynamic_rotate %101 by %c239_i32_111 dim 1 : vector<32x256xf32>, i32 -> vector<32x256xf32>
    %c8_112 = arith.constant 8 : index
    %c0_113 = arith.constant 0 : index
    %c0_114 = arith.constant 0 : index
    %179 = vector.load %arg6[%c8_112, %c0_113, %c0_114] : memref<9x1x256xf32, #tpu.memory_space<vmem>>, vector<1x1x256xf32>
    %180 = vector.shape_cast %179 : vector<1x1x256xf32> to vector<1x256xf32>
    %181 = vector.broadcast %180 : vector<1x256xf32> to vector<32x256xf32>
    %182 = arith.mulf %178, %181 : vector<32x256xf32>
    %c8_115 = arith.constant 8 : index
    %c32_116 = arith.constant 32 : index
    %c0_117 = arith.constant 0 : index
    %183 = vector.load %arg4[%c8_115, %c32_116, %c0_117] : memref<9x96x1xf32, #tpu.memory_space<vmem>>, vector<1x32x1xf32>
    %184 = vector.shape_cast %183 : vector<1x32x1xf32> to vector<32x1xf32>
    %185 = vector.broadcast %184 : vector<32x1xf32> to vector<32x256xf32>
    %186 = arith.mulf %182, %185 : vector<32x256xf32>
    %187 = arith.addf %177, %186 : vector<32x256xf32>
    %c32_118 = arith.constant 32 : index
    %c0_119 = arith.constant 0 : index
    %188 = vector.load %arg5[%c32_118, %c0_119] : memref<96x1xf32, #tpu.memory_space<vmem>>, vector<32x1xf32>
    %189 = vector.broadcast %188 : vector<32x1xf32> to vector<32x256xf32>
    %190 = arith.addf %187, %189 : vector<32x256xf32>
    %c32_120 = arith.constant 32 : index
    %c0_121 = arith.constant 0 : index
    %191 = vector.load %arg12[%c32_120, %c0_121] : memref<96x256xf32, #tpu.memory_space<vmem>>, vector<32x256xf32>
    tpu.vector_store %arg12[%c32_120, %c0_121], %190 {strides = array<i32>} : memref<96x256xf32, #tpu.memory_space<vmem>>, vector<32x256xf32>,
    %c64 = arith.constant 64 : index
    %c0_122 = arith.constant 0 : index
    %192 = vector.load %arg2[%c64, %c0_122] : memref<96x32xbf16, #tpu.memory_space<vmem>>, vector<32x32xbf16>
    %cst_123 = arith.constant dense<0.000000e+00> : vector<32x256xf32>
    %193 = tpu.matmul %192, %1, %cst_123 {dimension_numbers = #tpu.dot_dimension_numbers<[1], [0], [0], [1], [0, 0, 1, 1], [], []>} : vector<32x32xbf16>, vector<32x256xbf16>, vector<32x256xf32> -> vector<32x256xf32>
    %c64_124 = arith.constant 64 : index
    %c0_125 = arith.constant 0 : index
    %194 = vector.load %arg3[%c64_124, %c0_125] : memref<96x1xf32, #tpu.memory_space<vmem>>, vector<32x1xf32>
    %195 = vector.broadcast %194 : vector<32x1xf32> to vector<32x256xf32>
    %196 = arith.addf %193, %195 : vector<32x256xf32>
    %cst_126 = arith.constant 0.000000e+00 : f32
    %197 = vector.broadcast %cst_126 : f32 to vector<32x256xf32>
    %c17_i32_127 = arith.constant 17 : i32
    %198 = tpu.dynamic_rotate %196 by %c17_i32_127 dim 1 : vector<32x256xf32>, i32 -> vector<32x256xf32>
    %c0_128 = arith.constant 0 : index
    %c0_129 = arith.constant 0 : index
    %c0_130 = arith.constant 0 : index
    %199 = vector.load %arg6[%c0_128, %c0_129, %c0_130] : memref<9x1x256xf32, #tpu.memory_space<vmem>>, vector<1x1x256xf32>
    %200 = vector.shape_cast %199 : vector<1x1x256xf32> to vector<1x256xf32>
    %201 = vector.broadcast %200 : vector<1x256xf32> to vector<32x256xf32>
    %202 = arith.mulf %198, %201 : vector<32x256xf32>
    %c0_131 = arith.constant 0 : index
    %c64_132 = arith.constant 64 : index
    %c0_133 = arith.constant 0 : index
    %203 = vector.load %arg4[%c0_131, %c64_132, %c0_133] : memref<9x96x1xf32, #tpu.memory_space<vmem>>, vector<1x32x1xf32>
    %204 = vector.shape_cast %203 : vector<1x32x1xf32> to vector<32x1xf32>
    %205 = vector.broadcast %204 : vector<32x1xf32> to vector<32x256xf32>
    %206 = arith.mulf %202, %205 : vector<32x256xf32>
    %207 = arith.addf %197, %206 : vector<32x256xf32>
    %c16_i32_134 = arith.constant 16 : i32
    %208 = tpu.dynamic_rotate %196 by %c16_i32_134 dim 1 : vector<32x256xf32>, i32 -> vector<32x256xf32>
    %c1_135 = arith.constant 1 : index
    %c0_136 = arith.constant 0 : index
    %c0_137 = arith.constant 0 : index
    %209 = vector.load %arg6[%c1_135, %c0_136, %c0_137] : memref<9x1x256xf32, #tpu.memory_space<vmem>>, vector<1x1x256xf32>
    %210 = vector.shape_cast %209 : vector<1x1x256xf32> to vector<1x256xf32>
    %211 = vector.broadcast %210 : vector<1x256xf32> to vector<32x256xf32>
    %212 = arith.mulf %208, %211 : vector<32x256xf32>
    %c1_138 = arith.constant 1 : index
    %c64_139 = arith.constant 64 : index
    %c0_140 = arith.constant 0 : index
    %213 = vector.load %arg4[%c1_138, %c64_139, %c0_140] : memref<9x96x1xf32, #tpu.memory_space<vmem>>, vector<1x32x1xf32>
    %214 = vector.shape_cast %213 : vector<1x32x1xf32> to vector<32x1xf32>
    %215 = vector.broadcast %214 : vector<32x1xf32> to vector<32x256xf32>
    %216 = arith.mulf %212, %215 : vector<32x256xf32>
    %217 = arith.addf %207, %216 : vector<32x256xf32>
    %c15_i32_141 = arith.constant 15 : i32
    %218 = tpu.dynamic_rotate %196 by %c15_i32_141 dim 1 : vector<32x256xf32>, i32 -> vector<32x256xf32>
    %c2_142 = arith.constant 2 : index
    %c0_143 = arith.constant 0 : index
    %c0_144 = arith.constant 0 : index
    %219 = vector.load %arg6[%c2_142, %c0_143, %c0_144] : memref<9x1x256xf32, #tpu.memory_space<vmem>>, vector<1x1x256xf32>
    %220 = vector.shape_cast %219 : vector<1x1x256xf32> to vector<1x256xf32>
    %221 = vector.broadcast %220 : vector<1x256xf32> to vector<32x256xf32>
    %222 = arith.mulf %218, %221 : vector<32x256xf32>
    %c2_145 = arith.constant 2 : index
    %c64_146 = arith.constant 64 : index
    %c0_147 = arith.constant 0 : index
    %223 = vector.load %arg4[%c2_145, %c64_146, %c0_147] : memref<9x96x1xf32, #tpu.memory_space<vmem>>, vector<1x32x1xf32>
    %224 = vector.shape_cast %223 : vector<1x32x1xf32> to vector<32x1xf32>
    %225 = vector.broadcast %224 : vector<32x1xf32> to vector<32x256xf32>
    %226 = arith.mulf %222, %225 : vector<32x256xf32>
    %227 = arith.addf %217, %226 : vector<32x256xf32>
    %c1_i32_148 = arith.constant 1 : i32
    %228 = tpu.dynamic_rotate %196 by %c1_i32_148 dim 1 : vector<32x256xf32>, i32 -> vector<32x256xf32>
    %c3_149 = arith.constant 3 : index
    %c0_150 = arith.constant 0 : index
    %c0_151 = arith.constant 0 : index
    %229 = vector.load %arg6[%c3_149, %c0_150, %c0_151] : memref<9x1x256xf32, #tpu.memory_space<vmem>>, vector<1x1x256xf32>
    %230 = vector.shape_cast %229 : vector<1x1x256xf32> to vector<1x256xf32>
    %231 = vector.broadcast %230 : vector<1x256xf32> to vector<32x256xf32>
    %232 = arith.mulf %228, %231 : vector<32x256xf32>
    %c3_152 = arith.constant 3 : index
    %c64_153 = arith.constant 64 : index
    %c0_154 = arith.constant 0 : index
    %233 = vector.load %arg4[%c3_152, %c64_153, %c0_154] : memref<9x96x1xf32, #tpu.memory_space<vmem>>, vector<1x32x1xf32>
    %234 = vector.shape_cast %233 : vector<1x32x1xf32> to vector<32x1xf32>
    %235 = vector.broadcast %234 : vector<32x1xf32> to vector<32x256xf32>
    %236 = arith.mulf %232, %235 : vector<32x256xf32>
    %237 = arith.addf %227, %236 : vector<32x256xf32>
    %c4_155 = arith.constant 4 : index
    %c64_156 = arith.constant 64 : index
    %c0_157 = arith.constant 0 : index
    %238 = vector.load %arg4[%c4_155, %c64_156, %c0_157] : memref<9x96x1xf32, #tpu.memory_space<vmem>>, vector<1x32x1xf32>
    %239 = vector.shape_cast %238 : vector<1x32x1xf32> to vector<32x1xf32>
    %240 = vector.broadcast %239 : vector<32x1xf32> to vector<32x256xf32>
    %241 = arith.mulf %196, %240 : vector<32x256xf32>
    %242 = arith.addf %237, %241 : vector<32x256xf32>
    %c255_i32_158 = arith.constant 255 : i32
    %243 = tpu.dynamic_rotate %196 by %c255_i32_158 dim 1 : vector<32x256xf32>, i32 -> vector<32x256xf32>
    %c5_159 = arith.constant 5 : index
    %c0_160 = arith.constant 0 : index
    %c0_161 = arith.constant 0 : index
    %244 = vector.load %arg6[%c5_159, %c0_160, %c0_161] : memref<9x1x256xf32, #tpu.memory_space<vmem>>, vector<1x1x256xf32>
    %245 = vector.shape_cast %244 : vector<1x1x256xf32> to vector<1x256xf32>
    %246 = vector.broadcast %245 : vector<1x256xf32> to vector<32x256xf32>
    %247 = arith.mulf %243, %246 : vector<32x256xf32>
    %c5_162 = arith.constant 5 : index
    %c64_163 = arith.constant 64 : index
    %c0_164 = arith.constant 0 : index
    %248 = vector.load %arg4[%c5_162, %c64_163, %c0_164] : memref<9x96x1xf32, #tpu.memory_space<vmem>>, vector<1x32x1xf32>
    %249 = vector.shape_cast %248 : vector<1x32x1xf32> to vector<32x1xf32>
    %250 = vector.broadcast %249 : vector<32x1xf32> to vector<32x256xf32>
    %251 = arith.mulf %247, %250 : vector<32x256xf32>
    %252 = arith.addf %242, %251 : vector<32x256xf32>
    %c241_i32_165 = arith.constant 241 : i32
    %253 = tpu.dynamic_rotate %196 by %c241_i32_165 dim 1 : vector<32x256xf32>, i32 -> vector<32x256xf32>
    %c6_166 = arith.constant 6 : index
    %c0_167 = arith.constant 0 : index
    %c0_168 = arith.constant 0 : index
    %254 = vector.load %arg6[%c6_166, %c0_167, %c0_168] : memref<9x1x256xf32, #tpu.memory_space<vmem>>, vector<1x1x256xf32>
    %255 = vector.shape_cast %254 : vector<1x1x256xf32> to vector<1x256xf32>
    %256 = vector.broadcast %255 : vector<1x256xf32> to vector<32x256xf32>
    %257 = arith.mulf %253, %256 : vector<32x256xf32>
    %c6_169 = arith.constant 6 : index
    %c64_170 = arith.constant 64 : index
    %c0_171 = arith.constant 0 : index
    %258 = vector.load %arg4[%c6_169, %c64_170, %c0_171] : memref<9x96x1xf32, #tpu.memory_space<vmem>>, vector<1x32x1xf32>
    %259 = vector.shape_cast %258 : vector<1x32x1xf32> to vector<32x1xf32>
    %260 = vector.broadcast %259 : vector<32x1xf32> to vector<32x256xf32>
    %261 = arith.mulf %257, %260 : vector<32x256xf32>
    %262 = arith.addf %252, %261 : vector<32x256xf32>
    %c240_i32_172 = arith.constant 240 : i32
    %263 = tpu.dynamic_rotate %196 by %c240_i32_172 dim 1 : vector<32x256xf32>, i32 -> vector<32x256xf32>
    %c7_173 = arith.constant 7 : index
    %c0_174 = arith.constant 0 : index
    %c0_175 = arith.constant 0 : index
    %264 = vector.load %arg6[%c7_173, %c0_174, %c0_175] : memref<9x1x256xf32, #tpu.memory_space<vmem>>, vector<1x1x256xf32>
    %265 = vector.shape_cast %264 : vector<1x1x256xf32> to vector<1x256xf32>
    %266 = vector.broadcast %265 : vector<1x256xf32> to vector<32x256xf32>
    %267 = arith.mulf %263, %266 : vector<32x256xf32>
    %c7_176 = arith.constant 7 : index
    %c64_177 = arith.constant 64 : index
    %c0_178 = arith.constant 0 : index
    %268 = vector.load %arg4[%c7_176, %c64_177, %c0_178] : memref<9x96x1xf32, #tpu.memory_space<vmem>>, vector<1x32x1xf32>
    %269 = vector.shape_cast %268 : vector<1x32x1xf32> to vector<32x1xf32>
    %270 = vector.broadcast %269 : vector<32x1xf32> to vector<32x256xf32>
    %271 = arith.mulf %267, %270 : vector<32x256xf32>
    %272 = arith.addf %262, %271 : vector<32x256xf32>
    %c239_i32_179 = arith.constant 239 : i32
    %273 = tpu.dynamic_rotate %196 by %c239_i32_179 dim 1 : vector<32x256xf32>, i32 -> vector<32x256xf32>
    %c8_180 = arith.constant 8 : index
    %c0_181 = arith.constant 0 : index
    %c0_182 = arith.constant 0 : index
    %274 = vector.load %arg6[%c8_180, %c0_181, %c0_182] : memref<9x1x256xf32, #tpu.memory_space<vmem>>, vector<1x1x256xf32>
    %275 = vector.shape_cast %274 : vector<1x1x256xf32> to vector<1x256xf32>
    %276 = vector.broadcast %275 : vector<1x256xf32> to vector<32x256xf32>
    %277 = arith.mulf %273, %276 : vector<32x256xf32>
    %c8_183 = arith.constant 8 : index
    %c64_184 = arith.constant 64 : index
    %c0_185 = arith.constant 0 : index
    %278 = vector.load %arg4[%c8_183, %c64_184, %c0_185] : memref<9x96x1xf32, #tpu.memory_space<vmem>>, vector<1x32x1xf32>
    %279 = vector.shape_cast %278 : vector<1x32x1xf32> to vector<32x1xf32>
    %280 = vector.broadcast %279 : vector<32x1xf32> to vector<32x256xf32>
    %281 = arith.mulf %277, %280 : vector<32x256xf32>
    %282 = arith.addf %272, %281 : vector<32x256xf32>
    %c64_186 = arith.constant 64 : index
    %c0_187 = arith.constant 0 : index
    %283 = vector.load %arg5[%c64_186, %c0_187] : memref<96x1xf32, #tpu.memory_space<vmem>>, vector<32x1xf32>
    %284 = vector.broadcast %283 : vector<32x1xf32> to vector<32x256xf32>
    %285 = arith.addf %282, %284 : vector<32x256xf32>
    %c64_188 = arith.constant 64 : index
    %c0_189 = arith.constant 0 : index
    %286 = vector.load %arg12[%c64_188, %c0_189] : memref<96x256xf32, #tpu.memory_space<vmem>>, vector<32x256xf32>
    tpu.vector_store %arg12[%c64_188, %c0_189], %285 {strides = array<i32>} : memref<96x256xf32, #tpu.memory_space<vmem>>, vector<32x256xf32>,
    %c0_190 = arith.constant 0 : index
    %c0_191 = arith.constant 0 : index
    %287 = vector.load %arg12[%c0_190, %c0_191] : memref<96x256xf32, #tpu.memory_space<vmem>>, vector<32x256xf32>
    %c32_192 = arith.constant 32 : index
    %c0_193 = arith.constant 0 : index
    %288 = vector.load %arg12[%c32_192, %c0_193] : memref<96x256xf32, #tpu.memory_space<vmem>>, vector<32x256xf32>
    %c64_194 = arith.constant 64 : index
    %c0_195 = arith.constant 0 : index
    %289 = vector.load %arg12[%c64_194, %c0_195] : memref<96x256xf32, #tpu.memory_space<vmem>>, vector<32x256xf32>
    %290 = arith.mulf %287, %287 : vector<32x256xf32>
    %cst_196 = arith.constant dense<0.000000e+00> : vector<32xf32>
    %291 = vector.multi_reduction <add>, %290, %cst_196 [1] : vector<32x256xf32> to vector<32xf32>
    %292 = vector.shape_cast %291 : vector<32xf32> to vector<32x1xf32>
    %cst_197 = arith.constant 1.000000e-24 : f32
    %293 = vector.broadcast %cst_197 : f32 to vector<32x1xf32>
    %294 = arith.maximumf %292, %293 : vector<32x1xf32>
    %295 = math.rsqrt %294 : vector<32x1xf32>
    %c0_198 = arith.constant 0 : index
    %c0_199 = arith.constant 0 : index
    %296 = vector.load %arg7[%c0_198, %c0_199] : memref<32x1xf32, #tpu.memory_space<vmem>>, vector<32x1xf32>
    %297 = arith.mulf %295, %296 : vector<32x1xf32>
    %298 = arith.mulf %288, %288 : vector<32x256xf32>
    %cst_200 = arith.constant dense<0.000000e+00> : vector<32xf32>
    %299 = vector.multi_reduction <add>, %298, %cst_200 [1] : vector<32x256xf32> to vector<32xf32>
    %300 = vector.shape_cast %299 : vector<32xf32> to vector<32x1xf32>
    %cst_201 = arith.constant 1.000000e-24 : f32
    %301 = vector.broadcast %cst_201 : f32 to vector<32x1xf32>
    %302 = arith.maximumf %300, %301 : vector<32x1xf32>
    %303 = math.rsqrt %302 : vector<32x1xf32>
    %304 = vector.broadcast %297 : vector<32x1xf32> to vector<32x256xf32>
    %305 = arith.mulf %287, %304 : vector<32x256xf32>
    %306 = arith.truncf %305 : vector<32x256xf32> to vector<32x256xbf16>
    %307 = vector.broadcast %303 : vector<32x1xf32> to vector<32x256xf32>
    %308 = arith.mulf %288, %307 : vector<32x256xf32>
    %309 = arith.truncf %308 : vector<32x256xf32> to vector<32x256xbf16>
    %cst_202 = arith.constant dense<0.000000e+00> : vector<32x32xf32>
    %310 = tpu.matmul %306, %309, %cst_202 {dimension_numbers = #tpu.dot_dimension_numbers<[1], [1], [0], [0], [0, 0, 1, 0], [], []>} : vector<32x256xbf16>, vector<32x256xbf16>, vector<32x32xf32> -> vector<32x32xf32>
    %c0_203 = arith.constant 0 : index
    %c0_204 = arith.constant 0 : index
    %311 = vector.load %arg8[%c0_203, %c0_204] : memref<32x32xf32, #tpu.memory_space<vmem>>, vector<32x32xf32>
    %312 = arith.addf %310, %311 : vector<32x32xf32>
    %cst_205 = arith.constant dense<0xFF800000> : vector<32xf32>
    %313 = vector.multi_reduction <maximumf>, %312, %cst_205 [1] : vector<32x32xf32> to vector<32xf32>
    %314 = vector.shape_cast %313 : vector<32xf32> to vector<32x1xf32>
    %315 = vector.broadcast %314 : vector<32x1xf32> to vector<32x32xf32>
    %316 = arith.subf %312, %315 : vector<32x32xf32>
    %317 = math.exp %316 : vector<32x32xf32>
    %cst_206 = arith.constant dense<0.000000e+00> : vector<32xf32>
    %318 = vector.multi_reduction <add>, %317, %cst_206 [1] : vector<32x32xf32> to vector<32xf32>
    %319 = vector.shape_cast %318 : vector<32xf32> to vector<32x1xf32>
    %320 = tpu.reciprocal %319 {approx = true} : vector<32x1xf32> -> vector<32x1xf32>
    %321 = vector.broadcast %320 : vector<32x1xf32> to vector<32x32xf32>
    %322 = arith.mulf %317, %321 : vector<32x32xf32>
    %323 = arith.truncf %322 : vector<32x32xf32> to vector<32x32xbf16>
    %324 = arith.truncf %289 : vector<32x256xf32> to vector<32x256xbf16>
    %cst_207 = arith.constant dense<0.000000e+00> : vector<32x256xf32>
    %325 = tpu.matmul %323, %324, %cst_207 {dimension_numbers = #tpu.dot_dimension_numbers<[1], [0], [0], [1], [0, 0, 1, 1], [], []>} : vector<32x32xbf16>, vector<32x256xbf16>, vector<32x256xf32> -> vector<32x256xf32>
    %c0_208 = arith.constant 0 : index
    %c0_209 = arith.constant 0 : index
    %326 = vector.load %arg9[%c0_208, %c0_209] : memref<16x32xbf16, #tpu.memory_space<vmem>>, vector<16x32xbf16>
    %327 = arith.truncf %325 : vector<32x256xf32> to vector<32x256xbf16>
    %cst_210 = arith.constant dense<0.000000e+00> : vector<16x256xf32>
    %328 = tpu.matmul %326, %327, %cst_210 {dimension_numbers = #tpu.dot_dimension_numbers<[1], [0], [0], [1], [0, 0, 1, 1], [], []>} : vector<16x32xbf16>, vector<32x256xbf16>, vector<16x256xf32> -> vector<16x256xf32>
    %c0_211 = arith.constant 0 : index
    %c0_212 = arith.constant 0 : index
    %329 = vector.load %arg10[%c0_211, %c0_212] : memref<16x1xf32, #tpu.memory_space<vmem>>, vector<16x1xf32>
    %330 = vector.broadcast %329 : vector<16x1xf32> to vector<16x256xf32>
    %331 = arith.addf %328, %330 : vector<16x256xf32>
    %c0_213 = arith.constant 0 : index
    %c0_214 = arith.constant 0 : index
    %c0_215 = arith.constant 0 : index
    %332 = vector.load %arg11[%c0_213, %c0_214, %c0_215] : memref<1x16x256xf32, #tpu.memory_space<vmem>>, vector<1x16x256xf32>
    %333 = vector.shape_cast %332 : vector<1x16x256xf32> to vector<16x256xf32>
    %334 = vector.shape_cast %331 : vector<16x256xf32> to vector<1x16x256xf32>
    tpu.vector_store %arg11[%c0_213, %c0_214, %c0_215], %334 {strides = array<i32>} : memref<1x16x256xf32, #tpu.memory_space<vmem>>, vector<1x16x256xf32>,
    return
  }
  func.func @transform_0(%arg0: i32) -> (i32, i32, i32) {
    %c0_i32 = arith.constant 0 : i32
    %c0_i32_0 = arith.constant 0 : i32
    %c0_i32_1 = arith.constant 0 : i32
    return %arg0, %c0_i32, %c0_i32_0 : i32, i32, i32
  }
  func.func @transform_1(%arg0: i32) -> (i32, i32) {
    %c0_i32 = arith.constant 0 : i32
    %c0_i32_0 = arith.constant 0 : i32
    %c0_i32_1 = arith.constant 0 : i32
    return %c0_i32, %c0_i32_0 : i32, i32
  }
  func.func @transform_2(%arg0: i32) -> (i32, i32) {
    %c0_i32 = arith.constant 0 : i32
    %c0_i32_0 = arith.constant 0 : i32
    %c0_i32_1 = arith.constant 0 : i32
    return %c0_i32, %c0_i32_0 : i32, i32
  }
  func.func @transform_3(%arg0: i32) -> (i32, i32, i32) {
    %c0_i32 = arith.constant 0 : i32
    %c0_i32_0 = arith.constant 0 : i32
    %c0_i32_1 = arith.constant 0 : i32
    %c0_i32_2 = arith.constant 0 : i32
    return %c0_i32, %c0_i32_0, %c0_i32_1 : i32, i32, i32
  }
  func.func @transform_4(%arg0: i32) -> (i32, i32) {
    %c0_i32 = arith.constant 0 : i32
    %c0_i32_0 = arith.constant 0 : i32
    %c0_i32_1 = arith.constant 0 : i32
    return %c0_i32, %c0_i32_0 : i32, i32
  }
  func.func @transform_5(%arg0: i32) -> (i32, i32, i32) {
    %c0_i32 = arith.constant 0 : i32
    %c0_i32_0 = arith.constant 0 : i32
    %c0_i32_1 = arith.constant 0 : i32
    %c0_i32_2 = arith.constant 0 : i32
    return %c0_i32, %c0_i32_0, %c0_i32_1 : i32, i32, i32
  }
  func.func @transform_6(%arg0: i32) -> (i32, i32) {
    %c0_i32 = arith.constant 0 : i32
    %c0_i32_0 = arith.constant 0 : i32
    %c0_i32_1 = arith.constant 0 : i32
    return %c0_i32, %c0_i32_0 : i32, i32
  }
  func.func @transform_7(%arg0: i32) -> (i32, i32) {
    %c0_i32 = arith.constant 0 : i32
    %c0_i32_0 = arith.constant 0 : i32
    %c0_i32_1 = arith.constant 0 : i32
    return %c0_i32, %c0_i32_0 : i32, i32
  }
  func.func @transform_8(%arg0: i32) -> (i32, i32) {
    %c0_i32 = arith.constant 0 : i32
    %c0_i32_0 = arith.constant 0 : i32
    %c0_i32_1 = arith.constant 0 : i32
    return %c0_i32, %c0_i32_0 : i32, i32
  }
  func.func @transform_9(%arg0: i32) -> (i32, i32) {
    %c0_i32 = arith.constant 0 : i32
    %c0_i32_0 = arith.constant 0 : i32
    %c0_i32_1 = arith.constant 0 : i32
    return %c0_i32, %c0_i32_0 : i32, i32
  }
  func.func @transform_10(%arg0: i32) -> (i32, i32, i32) {
    %c0_i32 = arith.constant 0 : i32
    %c0_i32_0 = arith.constant 0 : i32
    %c0_i32_1 = arith.constant 0 : i32
    return %arg0, %c0_i32, %c0_i32_0 : i32, i32, i32
  }
}

</mosaic_0001>

<llo_original>
// kernel: eq.8
$region0: #{eq.8}
  %s0 = inlined_call_operand.vmem [shape: s32[4,8], index: 0, kind: input, shape index: {}]
  %s1 = inlined_call_operand.vmem [shape: s32[32], index: 1, kind: output, shape index: {}]
  $region1: #{eq.8} parent=0
    #allocation0 [shape = 'u8[4096]{0}', space=vmem, size = 0x1000, scoped, tag = 'scoped mem for output reshape']
    #allocation1 [shape = 'u8[4096]{0}', space=vmem, size = 0x1000, scoped, tag = 'scoped mem for input reshape']
    %s3 = sshll.u32 1, 4
    %s4 = ssub.s32 %s3, 1
    %v5 = vld [vmem:[%s0] sm:%s4]
    %6 = vst [vmem:[#allocation1] sm:%s4] %v5
    %v7 = vld [vmem:[#allocation1] sm:$0x1]
    %vm8 = vcmask 64512
    %9 = vst.msk [vmem:[#allocation0] sm:$0x1] %vm8, %v7
    %s10 = scalar_lea.vmem [#allocation1], 3
    %v11 = vld [vmem:[%s10] sm:$0x1]
    %12 = vrot.lane.b32.xlu0 %v11, 24
    %v13 = vpop.permute.xlu0 %12
    %vm14 = vcmask 261312
    %15 = vst.msk [vmem:[#allocation0] sm:$0x1] %vm14, %v13
    %s16 = scalar_lea.vmem [#allocation1], 2
    %v17 = vld [vmem:[%s16] sm:$0x1]
    %18 = vrot.lane.b32.xlu0 %v17, 16
    %v19 = vpop.permute.xlu0 %18
    %vm20 = vcmask 195712
    %21 = vst.msk [vmem:[#allocation0] sm:$0x1] %vm20, %v19
    %s22 = scalar_lea.vmem [#allocation1], 1
    %v23 = vld [vmem:[%s22] sm:$0x1]
    %24 = vrot.lane.b32.xlu0 %v23, 8
    %v25 = vpop.permute.xlu0 %24
    %vm26 = vcmask 130112
    %27 = vst.msk [vmem:[#allocation0] sm:$0x1] %vm26, %v25
    %s29 = sshll.u32 1, 1
    %s30 = ssub.s32 %s29, 1
    %v32 = vld [vmem:[#allocation0] sm:%s30]
    %s33 = sshll.u32 1, 1
    %s34 = ssub.s32 %s33, 1
    %35 = vst [vmem:[%s1] sm:%s34] %v32

// kernel: self_attention_forward.1
$region0: #{self_attention_forward.1}
  #allocation0 [shape = 'u32[]', space=smem, size = 0x4, offset = 0x4, fixed_abs, tag = 'smem constant byte address 0x4 - core index']
  #allocation1 [shape = 'u32[144,128]{1,0:T(1,128)}', space=vmem, size = 0x12000, scoped, tag = 'internal scratch']
  #allocation2 [shape = 'f32[96,256]{1,0:T(8,128)}', space=vmem, size = 0x18000, scoped, tag = 'scratch operand']
  %s0 = inlined_call_operand.vmem [shape: bf16[2,32,256], index: 0, kind: input, shape index: {}]
  %s1 = inlined_call_operand.vmem [shape: bf16[96,32], index: 1, kind: input, shape index: {}]
  %s2 = inlined_call_operand.vmem [shape: f32[96,1], index: 2, kind: input, shape index: {}]
  %s3 = inlined_call_operand.vmem [shape: f32[9,96,1], index: 3, kind: input, shape index: {}]
  %s4 = inlined_call_operand.vmem [shape: f32[96,1], index: 4, kind: input, shape index: {}]
  %s5 = inlined_call_operand.vmem [shape: f32[9,1,256], index: 5, kind: input, shape index: {}]
  %s6 = inlined_call_operand.vmem [shape: f32[32,1], index: 6, kind: input, shape index: {}]
  %s7 = inlined_call_operand.vmem [shape: f32[32,32], index: 7, kind: input, shape index: {}]
  %s8 = inlined_call_operand.vmem [shape: bf16[16,32], index: 8, kind: input, shape index: {}]
  %s9 = inlined_call_operand.vmem [shape: f32[16,1], index: 9, kind: input, shape index: {}]
  %s10 = inlined_call_operand.vmem [shape: f32[2,16,256], index: 10, kind: output, shape index: {}]
  %s11 = sld [smem:[#allocation0]]
  $region73: #{self_attention_forward.1} parent=0
    _
  %s13 = ssub.s32 1, %s11
  %s14 = scalar_select 0, %s13, %s11
  loop: start=0, step=1, limit=4
  $region2: #{self_attention_forward.1} parent=0 // loop_pre_header
    _
  $region3: #{self_attention_forward.1} parent=0 // loop_header
    %s16 = sphi 0, %s20
    %p17 = scmp.ge.s32.totalorder %s16, 4
    %s26 = sphi 0, %s28
    %s29 = sphi 0, %s26
    %s30 = sphi 0, %s29
    %s46 = sphi 0, %s30
    %s50 = sphi 0, %s50
    %s52 = sphi 0, %s50
    %s53 = sphi 0, %s52
    %s67 = sphi 0, %s53
    %s71 = sphi 0, %s71
    %s73 = sphi 0, %s71
    %s74 = sphi 0, %s73
    %s88 = sphi 0, %s74
    %s92 = sphi 0, %s92
    %s94 = sphi 0, %s92
    %s95 = sphi 0, %s94
    %s109 = sphi 0, %s95
    %s113 = sphi 0, %s113
    %s115 = sphi 0, %s113
    %s116 = sphi 0, %s115
    %s130 = sphi 0, %s116
    %s134 = sphi 0, %s134
    %s136 = sphi 0, %s134
    %s137 = sphi 0, %s136
    %s151 = sphi 0, %s137
    %s155 = sphi 0, %s155
    %s157 = sphi 0, %s155
    %s158 = sphi 0, %s157
    %s172 = sphi 0, %s158
    %s176 = sphi 0, %s176
    %s178 = sphi 0, %s176
    %s179 = sphi 0, %s178
    %s193 = sphi 0, %s179
    %s197 = sphi 0, %s197
    %s199 = sphi 0, %s197
    %s200 = sphi 0, %s199
    %s214 = sphi 0, %s200
    %s218 = sphi 0, %s218
    %s220 = sphi 0, %s218
    %s221 = sphi 0, %s220
    %s235 = sphi 0, %s221
    %s241 = sphi 0, %s243
    %s244 = sphi 0, %s241
    %s245 = sphi 0, %s244
    %s261 = sphi 0, %s245
  $region4: #{self_attention_forward.1} parent=0 // loop_header_branch
    %19 = sbr.rel (%p17) target = $region8
  $region5: #{self_attention_forward.1} parent=0 // loop_body
    %s21 = ssub.s32 %s16, 1
    %s22 = ssub.s32 %s16, 2
    %s23 = sadd.s32 %s16, 1
    %s24 = ssub.s32 %s16, %s23
    %p25 = scmp.eq.s32.totalorder %s24, 0
    %s27 = sadd.s32 %s26, 1
    %s28 = scalar_select %p25, %s26, %s27
    %p31 = pneg %p25
    %p32 = scmp.eq.s32.totalorder %s16, 1
    %p33 = por %p31, %p32
    %p34 = scmp.ne.s32.totalorder %s26, %s29
    %p35 = scmp.eq.s32.totalorder %s16, 0
    %p36 = por %p34, %p35
    %p37 = scmp.ne.s32.totalorder %s26, %s29
    %p38 = scmp.eq.s32.totalorder %s21, 1
    %p39 = por %p37, %p38
    %p40 = scmp.ne.s32.totalorder %s29, %s30
    %p41 = scmp.eq.s32.totalorder %s21, 0
    %p42 = por %p40, %p41
    %p43 = scmp.ne.s32.totalorder %s29, %s30
    %p44 = scmp.eq.s32.totalorder %s22, 1
    %p45 = por %p43, %p44
    %p47 = scmp.ne.s32.totalorder %s30, %s46
    %p48 = scmp.eq.s32.totalorder %s22, 0
    %p49 = por %p47, %p48
    %s51 = sadd.s32 %s50, 1
    %p54 = scmp.eq.s32.totalorder %s16, 1
    %p55 = scmp.ne.s32.totalorder %s50, %s52
    %p56 = scmp.eq.s32.totalorder %s16, 0
    %p57 = por %p55, %p56
    %p58 = scmp.ne.s32.totalorder %s50, %s52
    %p59 = scmp.eq.s32.totalorder %s21, 1
    %p60 = por %p58, %p59
    %p61 = scmp.ne.s32.totalorder %s52, %s53
    %p62 = scmp.eq.s32.totalorder %s21, 0
    %p63 = por %p61, %p62
    %p64 = scmp.ne.s32.totalorder %s52, %s53
    %p65 = scmp.eq.s32.totalorder %s22, 1
    %p66 = por %p64, %p65
    %p68 = scmp.ne.s32.totalorder %s53, %s67
    %p69 = scmp.eq.s32.totalorder %s22, 0
    %p70 = por %p68, %p69
    %s72 = sadd.s32 %s71, 1
    %p75 = scmp.eq.s32.totalorder %s16, 1
    %p76 = scmp.ne.s32.totalorder %s71, %s73
    %p77 = scmp.eq.s32.totalorder %s16, 0
    %p78 = por %p76, %p77
    %p79 = scmp.ne.s32.totalorder %s71, %s73
    %p80 = scmp.eq.s32.totalorder %s21, 1
    %p81 = por %p79, %p80
    %p82 = scmp.ne.s32.totalorder %s73, %s74
    %p83 = scmp.eq.s32.totalorder %s21, 0
    %p84 = por %p82, %p83
    %p85 = scmp.ne.s32.totalorder %s73, %s74
    %p86 = scmp.eq.s32.totalorder %s22, 1
    %p87 = por %p85, %p86
    %p89 = scmp.ne.s32.totalorder %s74, %s88
    %p90 = scmp.eq.s32.totalorder %s22, 0
    %p91 = por %p89, %p90
    %s93 = sadd.s32 %s92, 1
    %p96 = scmp.eq.s32.totalorder %s16, 1
    %p97 = scmp.ne.s32.totalorder %s92, %s94
    %p98 = scmp.eq.s32.totalorder %s16, 0
    %p99 = por %p97, %p98
    %p100 = scmp.ne.s32.totalorder %s92, %s94
    %p101 = scmp.eq.s32.totalorder %s21, 1
    %p102 = por %p100, %p101
    %p103 = scmp.ne.s32.totalorder %s94, %s95
    %p104 = scmp.eq.s32.totalorder %s21, 0
    %p105 = por %p103, %p104
    %p106 = scmp.ne.s32.totalorder %s94, %s95
    %p107 = scmp.eq.s32.totalorder %s22, 1
    %p108 = por %p106, %p107
    %p110 = scmp.ne.s32.totalorder %s95, %s109
    %p111 = scmp.eq.s32.totalorder %s22, 0
    %p112 = por %p110, %p111
    %s114 = sadd.s32 %s113, 1
    %p117 = scmp.eq.s32.totalorder %s16, 1
    %p118 = scmp.ne.s32.totalorder %s113, %s115
    %p119 = scmp.eq.s32.totalorder %s16, 0
    %p120 = por %p118, %p119
    %p121 = scmp.ne.s32.totalorder %s113, %s115
    %p122 = scmp.eq.s32.totalorder %s21, 1
    %p123 = por %p121, %p122
    %p124 = scmp.ne.s32.totalorder %s115, %s116
    %p125 = scmp.eq.s32.totalorder %s21, 0
    %p126 = por %p124, %p125
    %p127 = scmp.ne.s32.totalorder %s115, %s116
    %p128 = scmp.eq.s32.totalorder %s22, 1
    %p129 = por %p127, %p128
    %p131 = scmp.ne.s32.totalorder %s116, %s130
    %p132 = scmp.eq.s32.totalorder %s22, 0
    %p133 = por %p131, %p132
    %s135 = sadd.s32 %s134, 1
    %p138 = scmp.eq.s32.totalorder %s16, 1
    %p139 = scmp.ne.s32.totalorder %s134, %s136
    %p140 = scmp.eq.s32.totalorder %s16, 0
    %p141 = por %p139, %p140
    %p142 = scmp.ne.s32.totalorder %s134, %s136
    %p143 = scmp.eq.s32.totalorder %s21, 1
    %p144 = por %p142, %p143
    %p145 = scmp.ne.s32.totalorder %s136, %s137
    %p146 = scmp.eq.s32.totalorder %s21, 0
    %p147 = por %p145, %p146
    %p148 = scmp.ne.s32.totalorder %s136, %s137
    %p149 = scmp.eq.s32.totalorder %s22, 1
    %p150 = por %p148, %p149
    %p152 = scmp.ne.s32.totalorder %s137, %s151
    %p153 = scmp.eq.s32.totalorder %s22, 0
    %p154 = por %p152, %p153
    %s156 = sadd.s32 %s155, 1
    %p159 = scmp.eq.s32.totalorder %s16, 1
    %p160 = scmp.ne.s32.totalorder %s155, %s157
    %p161 = scmp.eq.s32.totalorder %s16, 0
    %p162 = por %p160, %p161
    %p163 = scmp.ne.s32.totalorder %s155, %s157
    %p164 = scmp.eq.s32.totalorder %s21, 1
    %p165 = por %p163, %p164
    %p166 = scmp.ne.s32.totalorder %s157, %s158
    %p167 = scmp.eq.s32.totalorder %s21, 0
    %p168 = por %p166, %p167
    %p169 = scmp.ne.s32.totalorder %s157, %s158
    %p170 = scmp.eq.s32.totalorder %s22, 1
    %p171 = por %p169, %p170
    %p173 = scmp.ne.s32.totalorder %s158, %s172
    %p174 = scmp.eq.s32.totalorder %s22, 0
    %p175 = por %p173, %p174
    %s177 = sadd.s32 %s176, 1
    %p180 = scmp.eq.s32.totalorder %s16, 1
    %p181 = scmp.ne.s32.totalorder %s176, %s178
    %p182 = scmp.eq.s32.totalorder %s16, 0
    %p183 = por %p181, %p182
    %p184 = scmp.ne.s32.totalorder %s176, %s178
    %p185 = scmp.eq.s32.totalorder %s21, 1
    %p186 = por %p184, %p185
    %p187 = scmp.ne.s32.totalorder %s178, %s179
    %p188 = scmp.eq.s32.totalorder %s21, 0
    %p189 = por %p187, %p188
    %p190 = scmp.ne.s32.totalorder %s178, %s179
    %p191 = scmp.eq.s32.totalorder %s22, 1
    %p192 = por %p190, %p191
    %p194 = scmp.ne.s32.totalorder %s179, %s193
    %p195 = scmp.eq.s32.totalorder %s22, 0
    %p196 = por %p194, %p195
    %s198 = sadd.s32 %s197, 1
    %p201 = scmp.eq.s32.totalorder %s16, 1
    %p202 = scmp.ne.s32.totalorder %s197, %s199
    %p203 = scmp.eq.s32.totalorder %s16, 0
    %p204 = por %p202, %p203
    %p205 = scmp.ne.s32.totalorder %s197, %s199
    %p206 = scmp.eq.s32.totalorder %s21, 1
    %p207 = por %p205, %p206
    %p208 = scmp.ne.s32.totalorder %s199, %s200
    %p209 = scmp.eq.s32.totalorder %s21, 0
    %p210 = por %p208, %p209
    %p211 = scmp.ne.s32.totalorder %s199, %s200
    %p212 = scmp.eq.s32.totalorder %s22, 1
    %p213 = por %p211, %p212
    %p215 = scmp.ne.s32.totalorder %s200, %s214
    %p216 = scmp.eq.s32.totalorder %s22, 0
    %p217 = por %p215, %p216
    %s219 = sadd.s32 %s218, 1
    %p222 = scmp.eq.s32.totalorder %s16, 1
    %p223 = scmp.ne.s32.totalorder %s218, %s220
    %p224 = scmp.eq.s32.totalorder %s16, 0
    %p225 = por %p223, %p224
    %p226 = scmp.ne.s32.totalorder %s218, %s220
    %p227 = scmp.eq.s32.totalorder %s21, 1
    %p228 = por %p226, %p227
    %p229 = scmp.ne.s32.totalorder %s220, %s221
    %p230 = scmp.eq.s32.totalorder %s21, 0
    %p231 = por %p229, %p230
    %p232 = scmp.ne.s32.totalorder %s220, %s221
    %p233 = scmp.eq.s32.totalorder %s22, 1
    %p234 = por %p232, %p233
    %p236 = scmp.ne.s32.totalorder %s221, %s235
    %p237 = scmp.eq.s32.totalorder %s22, 0
    %p238 = por %p236, %p237
    %s239 = ssub.s32 %s16, %s23
    %p240 = scmp.eq.s32.totalorder %s239, 0
    %s242 = sadd.s32 %s241, 1
    %s243 = scalar_select %p240, %s241, %s242
    %p246 = pneg %p240
    %p247 = scmp.eq.s32.totalorder %s16, 1
    %p248 = por %p246, %p247
    %p249 = scmp.ne.s32.totalorder %s241, %s244
    %p250 = scmp.eq.s32.totalorder %s16, 0
    %p251 = por %p249, %p250
    %p252 = scmp.ne.s32.totalorder %s241, %s244
    %p253 = scmp.eq.s32.totalorder %s21, 1
    %p254 = por %p252, %p253
    %p255 = scmp.ne.s32.totalorder %s244, %s245
    %p256 = scmp.eq.s32.totalorder %s21, 0
    %p257 = por %p255, %p256
    %p258 = scmp.ne.s32.totalorder %s244, %s245
    %p259 = scmp.eq.s32.totalorder %s22, 1
    %p260 = por %p258, %p259
    %p262 = scmp.ne.s32.totalorder %s245, %s261
    %p263 = scmp.eq.s32.totalorder %s22, 0
    %p264 = por %p262, %p263
    %p265 = scmp.le.s32.totalorder 1, %s16
    %p266 = scmp.lt.s32.totalorder %s16, 3
    %p267 = pnand %p265, %p266
    %p268 = pneg %p267
    // Predicated region
    $region9: #{self_attention_forward.1} parent=5 // pred_check
      _
    $region10: #{self_attention_forward.1} parent=5 // pred_check_branch
      %270 = sbr.rel (%p267) target = $region12
    $region11: #{self_attention_forward.1} parent=5 // pred_region
      %s271 = ssub.s32 %s16, 1
      // Predicated region
      $region13: #{self_attention_forward.1} parent=11 // pred_check
        %p272 = pneg %p63
      $region14: #{self_attention_forward.1} parent=11 // pred_check_branch
        %274 = sbr.rel (%p272) target = $region16
      $region15: #{self_attention_forward.1} parent=11 // pred_region
        _
      $region16: #{self_attention_forward.1} parent=11 // pred_fallthru
        _
      // Predicated region
      $region17: #{self_attention_forward.1} parent=11 // pred_check
        %p275 = pneg %p84
      $region18: #{self_attention_forward.1} parent=11 // pred_check_branch
        %277 = sbr.rel (%p275) target = $region20
      $region19: #{self_attention_forward.1} parent=11 // pred_region
        _
      $region20: #{self_attention_forward.1} parent=11 // pred_fallthru
        _
      // Predicated region
      $region21: #{self_attention_forward.1} parent=11 // pred_check
        %p278 = pneg %p105
      $region22: #{self_attention_forward.1} parent=11 // pred_check_branch
        %280 = sbr.rel (%p278) target = $region24
      $region23: #{self_attention_forward.1} parent=11 // pred_region
        _
      $region24: #{self_attention_forward.1} parent=11 // pred_fallthru
        _
      // Predicated region
      $region25: #{self_attention_forward.1} parent=11 // pred_check
        %p281 = pneg %p126
      $region26: #{self_attention_forward.1} parent=11 // pred_check_branch
        %283 = sbr.rel (%p281) target = $region28
      $region27: #{self_attention_forward.1} parent=11 // pred_region
        _
      $region28: #{self_attention_forward.1} parent=11 // pred_fallthru
        _
      // Predicated region
      $region29: #{self_attention_forward.1} parent=11 // pred_check
        %p284 = pneg %p147
      $region30: #{self_attention_forward.1} parent=11 // pred_check_branch
        %286 = sbr.rel (%p284) target = $region32
      $region31: #{self_attention_forward.1} parent=11 // pred_region
        _
      $region32: #{self_attention_forward.1} parent=11 // pred_fallthru
        _
      // Predicated region
      $region33: #{self_attention_forward.1} parent=11 // pred_check
        %p287 = pneg %p168
      $region34: #{self_attention_forward.1} parent=11 // pred_check_branch
        %289 = sbr.rel (%p287) target = $region36
      $region35: #{self_attention_forward.1} parent=11 // pred_region
        _
      $region36: #{self_attention_forward.1} parent=11 // pred_fallthru
        _
      // Predicated region
      $region37: #{self_attention_forward.1} parent=11 // pred_check
        %p290 = pneg %p189
      $region38: #{self_attention_forward.1} parent=11 // pred_check_branch
        %292 = sbr.rel (%p290) target = $region40
      $region39: #{self_attention_forward.1} parent=11 // pred_region
        _
      $region40: #{self_attention_forward.1} parent=11 // pred_fallthru
        _
      // Predicated region
      $region41: #{self_attention_forward.1} parent=11 // pred_check
        %p293 = pneg %p210
      $region42: #{self_attention_forward.1} parent=11 // pred_check_branch
        %295 = sbr.rel (%p293) target = $region44
      $region43: #{self_attention_forward.1} parent=11 // pred_region
        _
      $region44: #{self_attention_forward.1} parent=11 // pred_fallthru
        _
      // Predicated region
      $region45: #{self_attention_forward.1} parent=11 // pred_check
        %p296 = pneg %p231
      $region46: #{self_attention_forward.1} parent=11 // pred_check_branch
        %298 = sbr.rel (%p296) target = $region48
      $region47: #{self_attention_forward.1} parent=11 // pred_region
        _
      $region48: #{self_attention_forward.1} parent=11 // pred_fallthru
        _
    $region12: #{self_attention_forward.1} parent=5 // pred_fallthru
      _
    %p299 = scmp.lt.s32.totalorder %s16, 2
    // Predicated region
    $region49: #{self_attention_forward.1} parent=5 // pred_check
      %p300 = pneg %p299
    $region50: #{self_attention_forward.1} parent=5 // pred_check_branch
      %302 = sbr.rel (%p300) target = $region52
    $region51: #{self_attention_forward.1} parent=5 // pred_region
      // Predicated region
      $region53: #{self_attention_forward.1} parent=51 // pred_check
        %p303 = pneg %p36
      $region54: #{self_attention_forward.1} parent=51 // pred_check_branch
        %305 = sbr.rel (%p303) target = $region56
      $region55: #{self_attention_forward.1} parent=51 // pred_region
        %p306 = scmp.lt.s32.totalorder %s16, 1
        %s307 = scalar_select %p306, %s16, 1
        %s308 = smul.addr %s307, 8
        %s309 = smul.addr %s308, 4
        %s310 = scalar_lea.vmem %s0, %s309
      $region56: #{self_attention_forward.1} parent=51 // pred_fallthru
        _
    $region52: #{self_attention_forward.1} parent=5 // pred_fallthru
      _
    %p311 = scmp.le.s32.totalorder 1, %s16
    %p312 = scmp.lt.s32.totalorder %s16, 3
    %p313 = pnand %p311, %p312
    %p314 = pneg %p313
    // Predicated region
    $region57: #{self_attention_forward.1} parent=5 // pred_check
      _
    $region58: #{self_attention_forward.1} parent=5 // pred_check_branch
      %316 = sbr.rel (%p313) target = $region60
    $region59: #{self_attention_forward.1} parent=5 // pred_region
      %s317 = ssub.s32 %s16, 1
      %p318 = scmp.lt.s32.totalorder %s21, 1
      %s319 = scalar_select %p318, %s21, 1
      %s320 = smul.addr %s319, 8
      %s321 = smul.addr %s320, 4
      %s322 = scalar_lea.vmem %s0, %s321
      %p323 = pneg %p42
      %p324 = pneg %p39
      %p325 = pneg %p63
      %p326 = pneg %p60
      %p327 = pneg %p84
      %p328 = pneg %p81
      %p329 = pneg %p105
      %p330 = pneg %p102
      %p331 = pneg %p126
      %p332 = pneg %p123
      %p333 = pneg %p147
      %p334 = pneg %p144
      %p335 = pneg %p168
      %p336 = pneg %p165
      %p337 = pneg %p189
      %p338 = pneg %p186
      %p339 = pneg %p210
      %p340 = pneg %p207
      %p341 = pneg %p231
      %p342 = pneg %p228
      %p343 = pneg %p257
      %p344 = pneg %p254
      %p345 = scmp.lt.s32.totalorder %s21, 1
      %s346 = scalar_select %p345, %s21, 1
      %s347 = smul.addr %s346, 4
      %s348 = smul.addr %s347, 8
      %s349 = scalar_lea.vmem %s10, %s348
      %p350 = scmp.lt.s32.totalorder %s21, 1
      %s351 = scalar_select %p350, %s21, 1
      %s352 = smul.addr %s351, 8
      %s353 = smul.addr %s352, 4
      %s354 = scalar_lea.vmem %s0, %s353
      %p355 = scmp.lt.s32.totalorder %s21, 1
      %s356 = scalar_select %p355, %s21, 1
      %s357 = smul.addr %s356, 4
      %s358 = smul.addr %s357, 8
      %s359 = scalar_lea.vmem %s10, %s358
      %v361 = vld [vmem:[%s354] sm:$0xff]
      %v362 = vld [vmem:[%s354 + $0x8] sm:$0xff]
      %v363 = vld [vmem:[%s354 + $0x10] sm:$0xff]
      %v364 = vld [vmem:[%s354 + $0x18] sm:$0xff]
      %v365 = vld [vmem:[%s1] sm:$0xf]
      %v366 = vld [vmem:[%s1 + $0x4] sm:$0xf]
      %v367 = vld [vmem:[%s1 + $0x8] sm:$0xf]
      %v368 = vld [vmem:[%s1 + $0xc] sm:$0xf]
      %v369 = vld [vmem:[%s2] sm:$0xff]
      %v370 = vld [vmem:[%s2 + $0x8] sm:$0xff]
      %v371 = vld [vmem:[%s2 + $0x10] sm:$0xff]
      %v372 = vld [vmem:[%s2 + $0x18] sm:$0xff]
      %374 = vset.pattern.permute.xlu0 0
      %375 = vperm.xlu0 %374, %v369
      %v376 = vpop.permute.xlu0 %375
      %379 = vset.pattern.permute.xlu0 0
      %380 = vperm.xlu0 %379, %v370
      %v381 = vpop.permute.xlu0 %380
      %384 = vset.pattern.permute.xlu0 0
      %385 = vperm.xlu0 %384, %v371
      %v386 = vpop.permute.xlu0 %385
      %389 = vset.pattern.permute.xlu0 0
      %390 = vperm.xlu0 %389, %v372
      %v391 = vpop.permute.xlu0 %390
      %v397 = vunpack.c.l.b16 %v365
      %v398 = vunpack.c.l.b16 %v366
      %v399 = vunpack.c.l.b16 %v367
      %v400 = vunpack.c.l.b16 %v368
      %v401 = vpack.c.b16 %v398, %v397
      %v402 = vpack.c.b16 %v400, %v399
      %v407 = vunpack.c.l.b16 %v361
      %v408 = vunpack.c.h.b16 %v361
      %v409 = vunpack.c.l.b16 %v362
      %v410 = vunpack.c.h.b16 %v362
      %v411 = vunpack.c.l.b16 %v363
      %v412 = vunpack.c.h.b16 %v363
      %v413 = vunpack.c.l.b16 %v364
      %v414 = vunpack.c.h.b16 %v364
      %v415 = vpack.c.b16 %v409, %v407
      %v416 = vpack.c.b16 %v410, %v408
      %v417 = vpack.c.b16 %v413, %v411
      %v418 = vpack.c.b16 %v414, %v412
      %vm423 = vcmask 261120
      %v425 = vsel %vm423, %v401, 0
      %v428 = vsel %vm423, %v402, 0
      %430 = vmatprep.subr.bf16.mxu0 0
      %431 = vmatpush1.bf16.msra.mxu0 0
      %432 = vmatprep.subr.bf16.mxu0 0
      %433 = vmatpush1.bf16.msra.mxu0 0
      %434 = vmatprep.subr.bf16.mxu0 0
      %435 = vmatpush1.bf16.msra.mxu0 0
      %436 = vmatprep.subr.bf16.mxu0 0
      %437 = vmatpush1.bf16.msra.mxu0 0
      %438 = vmatprep.subr.bf16.mxu0 0
      %439 = vmatpush1.bf16.msra.mxu0 0
      %440 = vmatprep.subr.bf16.mxu0 0
      %441 = vmatpush1.bf16.msra.mxu0 0
      %442 = vmatprep.subr.bf16.mxu0 %v418
      %443 = vmatpush1.bf16.msra.mxu0 %v417
      %444 = vmatprep.subr.bf16.mxu0 %v416
      %445 = vmatpush1.bf16.msra.mxu0 %v415
      %446 = vmatprep.subr.bf16.mxu0 0
      %447 = vmatpush2.bf16.msra.mxu0 0
      %448 = vmatprep.subr.bf16.mxu0 0
      %449 = vmatpush2.bf16.msra.mxu0 0
      %450 = vmatprep.subr.bf16.mxu0 0
      %451 = vmatpush2.bf16.msra.mxu0 0
      %452 = vmatprep.subr.bf16.mxu0 0
      %453 = vmatpush2.bf16.msra.mxu0 0
      %454 = vmatprep.subr.bf16.mxu0 0
      %455 = vmatpush2.bf16.msra.mxu0 0
      %456 = vmatprep.subr.bf16.mxu0 0
      %457 = vmatpush2.bf16.msra.mxu0 0
      %458 = vmatprep.subr.bf16.mxu0 0
      %459 = vmatpush2.bf16.msra.mxu0 0
      %460 = vmatprep.subr.bf16.mxu0 0
      %461 = vmatpush2.bf16.msra.mxu0 0
      %462 = vmatprep.mubr.bf16.mxu0 0
      %463 = vmatmul.mubr.bf16.gmra.mxu0 %v425
      %v464 = vpop.f32.mrf.mxu0
      %v465 = vadd.f32 %v376, %v464
      %v466 = vpop.f32.mrf.mxu0
      %v467 = vadd.f32 %v376, %v466
      %v468 = vpop.f32.mrf.mxu0
      %v469 = vadd.f32 %v381, %v468
      %v470 = vpop.f32.mrf.mxu0
      %v471 = vadd.f32 %v381, %v470
      %472 = vmatprep.mubr.bf16.mxu0 0
      %473 = vmatmul.mubr.bf16.gmra.mxu0 %v428
      %v474 = vpop.f32.mrf.mxu0
      %v475 = vadd.f32 %v386, %v474
      %v476 = vpop.f32.mrf.mxu0
      %v477 = vadd.f32 %v386, %v476
      %v478 = vpop.f32.mrf.mxu0
      %v479 = vadd.f32 %v391, %v478
      %v480 = vpop.f32.mrf.mxu0
      %v481 = vadd.f32 %v391, %v480
      %482 = vdwg.mxu0
      %483 = vrot.lane.b32.xlu0 %v465, 17
      %v484 = vpop.permute.xlu0 %483
      %485 = vrot.lane.b32.xlu0 %v469, 17
      %v486 = vpop.permute.xlu0 %485
      %487 = vrot.lane.b32.xlu0 %v475, 17
      %v488 = vpop.permute.xlu0 %487
      %489 = vrot.lane.b32.xlu0 %v479, 17
      %v490 = vpop.permute.xlu0 %489
      %491 = vrot.lane.b32.xlu0 %v467, 17
      %v492 = vpop.permute.xlu0 %491
      %493 = vrot.lane.b32.xlu0 %v471, 17
      %v494 = vpop.permute.xlu0 %493
      %495 = vrot.lane.b32.xlu0 %v477, 17
      %v496 = vpop.permute.xlu0 %495
      %497 = vrot.lane.b32.xlu0 %v481, 17
      %v498 = vpop.permute.xlu0 %497
      %v499 = vlaneseq
      %v500 = vand.u32 %v499, 127
      %vm501 = vcmp.lt.s32.totalorder %v500, 17
      %v502 = vsel %vm501, %v484, %v492
      %v503 = vsel %vm501, %v486, %v494
      %v504 = vsel %vm501, %v488, %v496
      %v505 = vsel %vm501, %v490, %v498
      %v506 = vsel %vm501, %v492, %v484
      %v507 = vsel %vm501, %v494, %v486
      %v508 = vsel %vm501, %v496, %v488
      %v509 = vsel %vm501, %v498, %v490
      %v510 = vld [vmem:[%s5] sm:$0x3]
      %v512 = vlaneseq
      %v513 = vshrl.u32 %v512, 7
      %v514 = vsub.s32 0, %v513
      %v515 = vrot.slane %v510, %v514
      %v516 = vlaneseq
      %v517 = vshrl.u32 %v516, 7
      %v518 = vsub.s32 1, %v517
      %v519 = vrot.slane %v510, %v518
      %v522 = vmul.f32 %v506, %v515
      %v523 = vmul.f32 %v502, %v519
      %v524 = vmul.f32 %v507, %v515
      %v525 = vmul.f32 %v503, %v519
      %v526 = vmul.f32 %v508, %v515
      %v527 = vmul.f32 %v504, %v519
      %v528 = vmul.f32 %v509, %v515
      %v529 = vmul.f32 %v505, %v519
      %v530 = vld [vmem:[%s3] sm:$0xff]
      %v531 = vld [vmem:[%s3 + $0x8] sm:$0xff]
      %v532 = vld [vmem:[%s3 + $0x10] sm:$0xff]
      %v533 = vld [vmem:[%s3 + $0x18] sm:$0xff]
      %535 = vset.pattern.permute.xlu0 0
      %536 = vperm.xlu0 %535, %v530
      %v537 = vpop.permute.xlu0 %536
      %540 = vset.pattern.permute.xlu0 0
      %541 = vperm.xlu0 %540, %v531
      %v542 = vpop.permute.xlu0 %541
      %545 = vset.pattern.permute.xlu0 0
      %546 = vperm.xlu0 %545, %v532
      %v547 = vpop.permute.xlu0 %546
      %550 = vset.pattern.permute.xlu0 0
      %551 = vperm.xlu0 %550, %v533
      %v552 = vpop.permute.xlu0 %551
      %v554 = vmul.f32 %v522, %v537
      %v555 = vmul.f32 %v523, %v537
      %v556 = vmul.f32 %v524, %v542
      %v557 = vmul.f32 %v525, %v542
      %v558 = vmul.f32 %v526, %v547
      %v559 = vmul.f32 %v527, %v547
      %v560 = vmul.f32 %v528, %v552
      %v561 = vmul.f32 %v529, %v552
      %v562 = vadd.f32 %v554, 0.0
      %v563 = vadd.f32 %v555, 0.0
      %v564 = vadd.f32 %v556, 0.0
      %v565 = vadd.f32 %v557, 0.0
      %v566 = vadd.f32 %v558, 0.0
      %v567 = vadd.f32 %v559, 0.0
      %v568 = vadd.f32 %v560, 0.0
      %v569 = vadd.f32 %v561, 0.0
      %570 = vrot.lane.b32.xlu0 %v465, 16
      %v571 = vpop.permute.xlu0 %570
      %572 = vrot.lane.b32.xlu0 %v469, 16
      %v573 = vpop.permute.xlu0 %572
      %574 = vrot.lane.b32.xlu0 %v475, 16
      %v575 = vpop.permute.xlu0 %574
      %576 = vrot.lane.b32.xlu0 %v479, 16
      %v577 = vpop.permute.xlu0 %576
      %578 = vrot.lane.b32.xlu0 %v467, 16
      %v579 = vpop.permute.xlu0 %578
      %580 = vrot.lane.b32.xlu0 %v471, 16
      %v581 = vpop.permute.xlu0 %580
      %582 = vrot.lane.b32.xlu0 %v477, 16
      %v583 = vpop.permute.xlu0 %582
      %584 = vrot.lane.b32.xlu0 %v481, 16
      %v585 = vpop.permute.xlu0 %584
      %vm586 = vcmp.lt.s32.totalorder %v500, 16
      %v587 = vsel %vm586, %v571, %v579
      %v588 = vsel %vm586, %v573, %v581
      %v589 = vsel %vm586, %v575, %v583
      %v590 = vsel %vm586, %v577, %v585
      %v591 = vsel %vm586, %v579, %v571
      %v592 = vsel %vm586, %v581, %v573
      %v593 = vsel %vm586, %v583, %v575
      %v594 = vsel %vm586, %v585, %v577
      %s595 = scalar_lea.vmem %s5, 2
      %v596 = vld [vmem:[%s595] sm:$0x3]
      %v598 = vlaneseq
      %v599 = vshrl.u32 %v598, 7
      %v600 = vsub.s32 0, %v599
      %v601 = vrot.slane %v596, %v600
      %v602 = vlaneseq
      %v603 = vshrl.u32 %v602, 7
      %v604 = vsub.s32 1, %v603
      %v605 = vrot.slane %v596, %v604
      %v608 = vmul.f32 %v591, %v601
      %v609 = vmul.f32 %v587, %v605
      %v610 = vmul.f32 %v592, %v601
      %v611 = vmul.f32 %v588, %v605
      %v612 = vmul.f32 %v593, %v601
      %v613 = vmul.f32 %v589, %v605
      %v614 = vmul.f32 %v594, %v601
      %v615 = vmul.f32 %v590, %v605
      %s616 = scalar_lea.vmem %s3, 96
      %v617 = vld [vmem:[%s616] sm:$0xff]
      %v618 = vld [vmem:[%s616 + $0x8] sm:$0xff]
      %v619 = vld [vmem:[%s616 + $0x10] sm:$0xff]
      %v620 = vld [vmem:[%s616 + $0x18] sm:$0xff]
      %622 = vset.pattern.permute.xlu0 0
      %623 = vperm.xlu0 %622, %v617
      %v624 = vpop.permute.xlu0 %623
      %627 = vset.pattern.permute.xlu0 0
      %628 = vperm.xlu0 %627, %v618
      %v629 = vpop.permute.xlu0 %628
      %632 = vset.pattern.permute.xlu0 0
      %633 = vperm.xlu0 %632, %v619
      %v634 = vpop.permute.xlu0 %633
      %637 = vset.pattern.permute.xlu0 0
      %638 = vperm.xlu0 %637, %v620
      %v639 = vpop.permute.xlu0 %638
      %v641 = vmul.f32 %v608, %v624
      %v642 = vmul.f32 %v609, %v624
      %v643 = vmul.f32 %v610, %v629
      %v644 = vmul.f32 %v611, %v629
      %v645 = vmul.f32 %v612, %v634
      %v646 = vmul.f32 %v613, %v634
      %v647 = vmul.f32 %v614, %v639
      %v648 = vmul.f32 %v615, %v639
      %v649 = vadd.f32 %v562, %v641
      %v650 = vadd.f32 %v563, %v642
      %v651 = vadd.f32 %v564, %v643
      %v652 = vadd.f32 %v565, %v644
      %v653 = vadd.f32 %v566, %v645
      %v654 = vadd.f32 %v567, %v646
      %v655 = vadd.f32 %v568, %v647
      %v656 = vadd.f32 %v569, %v648
      %657 = vrot.lane.b32.xlu0 %v465, 15
      %v658 = vpop.permute.xlu0 %657
      %659 = vrot.lane.b32.xlu0 %v469, 15
      %v660 = vpop.permute.xlu0 %659
      %661 = vrot.lane.b32.xlu0 %v475, 15
      %v662 = vpop.permute.xlu0 %661
      %663 = vrot.lane.b32.xlu0 %v479, 15
      %v664 = vpop.permute.xlu0 %663
      %665 = vrot.lane.b32.xlu0 %v467, 15
      %v666 = vpop.permute.xlu0 %665
      %667 = vrot.lane.b32.xlu0 %v471, 15
      %v668 = vpop.permute.xlu0 %667
      %669 = vrot.lane.b32.xlu0 %v477, 15
      %v670 = vpop.permute.xlu0 %669
      %671 = vrot.lane.b32.xlu0 %v481, 15
      %v672 = vpop.permute.xlu0 %671
      %vm673 = vcmp.lt.s32.totalorder %v500, 15
      %v674 = vsel %vm673, %v658, %v666
      %v675 = vsel %vm673, %v660, %v668
      %v676 = vsel %vm673, %v662, %v670
      %v677 = vsel %vm673, %v664, %v672
      %v678 = vsel %vm673, %v666, %v658
      %v679 = vsel %vm673, %v668, %v660
      %v680 = vsel %vm673, %v670, %v662
      %v681 = vsel %vm673, %v672, %v664
      %s682 = scalar_lea.vmem %s5, 4
      %v683 = vld [vmem:[%s682] sm:$0x3]
      %v685 = vlaneseq
      %v686 = vshrl.u32 %v685, 7
      %v687 = vsub.s32 0, %v686
      %v688 = vrot.slane %v683, %v687
      %v689 = vlaneseq
      %v690 = vshrl.u32 %v689, 7
      %v691 = vsub.s32 1, %v690
      %v692 = vrot.slane %v683, %v691
      %v695 = vmul.f32 %v678, %v688
      %v696 = vmul.f32 %v674, %v692
      %v697 = vmul.f32 %v679, %v688
      %v698 = vmul.f32 %v675, %v692
      %v699 = vmul.f32 %v680, %v688
      %v700 = vmul.f32 %v676, %v692
      %v701 = vmul.f32 %v681, %v688
      %v702 = vmul.f32 %v677, %v692
      %s703 = scalar_lea.vmem %s3, 192
      %v704 = vld [vmem:[%s703] sm:$0xff]
      %v705 = vld [vmem:[%s703 + $0x8] sm:$0xff]
      %v706 = vld [vmem:[%s703 + $0x10] sm:$0xff]
      %v707 = vld [vmem:[%s703 + $0x18] sm:$0xff]
      %709 = vset.pattern.permute.xlu0 0
      %710 = vperm.xlu0 %709, %v704
      %v711 = vpop.permute.xlu0 %710
      %714 = vset.pattern.permute.xlu0 0
      %715 = vperm.xlu0 %714, %v705
      %v716 = vpop.permute.xlu0 %715
      %719 = vset.pattern.permute.xlu0 0
      %720 = vperm.xlu0 %719, %v706
      %v721 = vpop.permute.xlu0 %720
      %724 = vset.pattern.permute.xlu0 0
      %725 = vperm.xlu0 %724, %v707
      %v726 = vpop.permute.xlu0 %725
      %v728 = vmul.f32 %v695, %v711
      %v729 = vmul.f32 %v696, %v711
      %v730 = vmul.f32 %v697, %v716
      %v731 = vmul.f32 %v698, %v716
      %v732 = vmul.f32 %v699, %v721
      %v733 = vmul.f32 %v700, %v721
      %v734 = vmul.f32 %v701, %v726
      %v735 = vmul.f32 %v702, %v726
      %v736 = vadd.f32 %v649, %v728
      %v737 = vadd.f32 %v650, %v729
      %v738 = vadd.f32 %v651, %v730
      %v739 = vadd.f32 %v652, %v731
      %v740 = vadd.f32 %v653, %v732
      %v741 = vadd.f32 %v654, %v733
      %v742 = vadd.f32 %v655, %v734
      %v743 = vadd.f32 %v656, %v735
      %744 = vrot.lane.b32.xlu0 %v465, 1
      %v745 = vpop.permute.xlu0 %744
      %746 = vrot.lane.b32.xlu0 %v469, 1
      %v747 = vpop.permute.xlu0 %746
      %748 = vrot.lane.b32.xlu0 %v475, 1
      %v749 = vpop.permute.xlu0 %748
      %750 = vrot.lane.b32.xlu0 %v479, 1
      %v751 = vpop.permute.xlu0 %750
      %752 = vrot.lane.b32.xlu0 %v467, 1
      %v753 = vpop.permute.xlu0 %752
      %754 = vrot.lane.b32.xlu0 %v471, 1
      %v755 = vpop.permute.xlu0 %754
      %756 = vrot.lane.b32.xlu0 %v477, 1
      %v757 = vpop.permute.xlu0 %756
      %758 = vrot.lane.b32.xlu0 %v481, 1
      %v759 = vpop.permute.xlu0 %758
      %vm760 = vcmp.lt.s32.totalorder %v500, 1
      %v761 = vsel %vm760, %v745, %v753
      %v762 = vsel %vm760, %v747, %v755
      %v763 = vsel %vm760, %v749, %v757
      %v764 = vsel %vm760, %v751, %v759
      %v765 = vsel %vm760, %v753, %v745
      %v766 = vsel %vm760, %v755, %v747
      %v767 = vsel %vm760, %v757, %v749
      %v768 = vsel %vm760, %v759, %v751
      %s769 = scalar_lea.vmem %s5, 6
      %v770 = vld [vmem:[%s769] sm:$0x3]
      %v772 = vlaneseq
      %v773 = vshrl.u32 %v772, 7
      %v774 = vsub.s32 0, %v773
      %v775 = vrot.slane %v770, %v774
      %v776 = vlaneseq
      %v777 = vshrl.u32 %v776, 7
      %v778 = vsub.s32 1, %v777
      %v779 = vrot.slane %v770, %v778
      %v782 = vmul.f32 %v765, %v775
      %v783 = vmul.f32 %v761, %v779
      %v784 = vmul.f32 %v766, %v775
      %v785 = vmul.f32 %v762, %v779
      %v786 = vmul.f32 %v767, %v775
      %v787 = vmul.f32 %v763, %v779
      %v788 = vmul.f32 %v768, %v775
      %v789 = vmul.f32 %v764, %v779
      %s790 = scalar_lea.vmem %s3, 288
      %v791 = vld [vmem:[%s790] sm:$0xff]
      %v792 = vld [vmem:[%s790 + $0x8] sm:$0xff]
      %v793 = vld [vmem:[%s790 + $0x10] sm:$0xff]
      %v794 = vld [vmem:[%s790 + $0x18] sm:$0xff]
      %796 = vset.pattern.permute.xlu0 0
      %797 = vperm.xlu0 %796, %v791
      %v798 = vpop.permute.xlu0 %797
      %801 = vset.pattern.permute.xlu0 0
      %802 = vperm.xlu0 %801, %v792
      %v803 = vpop.permute.xlu0 %802
      %806 = vset.pattern.permute.xlu0 0
      %807 = vperm.xlu0 %806, %v793
      %v808 = vpop.permute.xlu0 %807
      %811 = vset.pattern.permute.xlu0 0
      %812 = vperm.xlu0 %811, %v794
      %v813 = vpop.permute.xlu0 %812
      %v815 = vmul.f32 %v782, %v798
      %v816 = vmul.f32 %v783, %v798
      %v817 = vmul.f32 %v784, %v803
      %v818 = vmul.f32 %v785, %v803
      %v819 = vmul.f32 %v786, %v808
      %v820 = vmul.f32 %v787, %v808
      %v821 = vmul.f32 %v788, %v813
      %v822 = vmul.f32 %v789, %v813
      %v823 = vadd.f32 %v736, %v815
      %v824 = vadd.f32 %v737, %v816
      %v825 = vadd.f32 %v738, %v817
      %v826 = vadd.f32 %v739, %v818
      %v827 = vadd.f32 %v740, %v819
      %v828 = vadd.f32 %v741, %v820
      %v829 = vadd.f32 %v742, %v821
      %v830 = vadd.f32 %v743, %v822
      %s831 = scalar_lea.vmem %s3, 384
      %v832 = vld [vmem:[%s831] sm:$0xff]
      %v833 = vld [vmem:[%s831 + $0x8] sm:$0xff]
      %v834 = vld [vmem:[%s831 + $0x10] sm:$0xff]
      %v835 = vld [vmem:[%s831 + $0x18] sm:$0xff]
      %837 = vset.pattern.permute.xlu0 0
      %838 = vperm.xlu0 %837, %v832
      %v839 = vpop.permute.xlu0 %838
      %842 = vset.pattern.permute.xlu0 0
      %843 = vperm.xlu0 %842, %v833
      %v844 = vpop.permute.xlu0 %843
      %847 = vset.pattern.permute.xlu0 0
      %848 = vperm.xlu0 %847, %v834
      %v849 = vpop.permute.xlu0 %848
      %852 = vset.pattern.permute.xlu0 0
      %853 = vperm.xlu0 %852, %v835
      %v854 = vpop.permute.xlu0 %853
      %v856 = vmul.f32 %v465, %v839
      %v857 = vmul.f32 %v467, %v839
      %v858 = vmul.f32 %v469, %v844
      %v859 = vmul.f32 %v471, %v844
      %v860 = vmul.f32 %v475, %v849
      %v861 = vmul.f32 %v477, %v849
      %v862 = vmul.f32 %v479, %v854
      %v863 = vmul.f32 %v481, %v854
      %v864 = vadd.f32 %v823, %v856
      %v865 = vadd.f32 %v824, %v857
      %v866 = vadd.f32 %v825, %v858
      %v867 = vadd.f32 %v826, %v859
      %v868 = vadd.f32 %v827, %v860
      %v869 = vadd.f32 %v828, %v861
      %v870 = vadd.f32 %v829, %v862
      %v871 = vadd.f32 %v830, %v863
      %872 = vrot.lane.b32.xlu0 %v465, 127
      %v873 = vpop.permute.xlu0 %872
      %874 = vrot.lane.b32.xlu0 %v469, 127
      %v875 = vpop.permute.xlu0 %874
      %876 = vrot.lane.b32.xlu0 %v475, 127
      %v877 = vpop.permute.xlu0 %876
      %878 = vrot.lane.b32.xlu0 %v479, 127
      %v879 = vpop.permute.xlu0 %878
      %880 = vrot.lane.b32.xlu0 %v467, 127
      %v881 = vpop.permute.xlu0 %880
      %882 = vrot.lane.b32.xlu0 %v471, 127
      %v883 = vpop.permute.xlu0 %882
      %884 = vrot.lane.b32.xlu0 %v477, 127
      %v885 = vpop.permute.xlu0 %884
      %886 = vrot.lane.b32.xlu0 %v481, 127
      %v887 = vpop.permute.xlu0 %886
      %vm888 = vcmp.lt.s32.totalorder %v500, 127
      %v889 = vsel %vm888, %v873, %v881
      %v890 = vsel %vm888, %v875, %v883
      %v891 = vsel %vm888, %v877, %v885
      %v892 = vsel %vm888, %v879, %v887
      %v893 = vsel %vm888, %v881, %v873
      %v894 = vsel %vm888, %v883, %v875
      %v895 = vsel %vm888, %v885, %v877
      %v896 = vsel %vm888, %v887, %v879
      %s897 = scalar_lea.vmem %s5, 10
      %v898 = vld [vmem:[%s897] sm:$0x3]
      %v900 = vlaneseq
      %v901 = vshrl.u32 %v900, 7
      %v902 = vsub.s32 0, %v901
      %v903 = vrot.slane %v898, %v902
      %v904 = vlaneseq
      %v905 = vshrl.u32 %v904, 7
      %v906 = vsub.s32 1, %v905
      %v907 = vrot.slane %v898, %v906
      %v910 = vmul.f32 %v889, %v903
      %v911 = vmul.f32 %v893, %v907
      %v912 = vmul.f32 %v890, %v903
      %v913 = vmul.f32 %v894, %v907
      %v914 = vmul.f32 %v891, %v903
      %v915 = vmul.f32 %v895, %v907
      %v916 = vmul.f32 %v892, %v903
      %v917 = vmul.f32 %v896, %v907
      %s918 = scalar_lea.vmem %s3, 480
      %v919 = vld [vmem:[%s918] sm:$0xff]
      %v920 = vld [vmem:[%s918 + $0x8] sm:$0xff]
      %v921 = vld [vmem:[%s918 + $0x10] sm:$0xff]
      %v922 = vld [vmem:[%s918 + $0x18] sm:$0xff]
      %924 = vset.pattern.permute.xlu0 0
      %925 = vperm.xlu0 %924, %v919
      %v926 = vpop.permute.xlu0 %925
      %929 = vset.pattern.permute.xlu0 0
      %930 = vperm.xlu0 %929, %v920
      %v931 = vpop.permute.xlu0 %930
      %934 = vset.pattern.permute.xlu0 0
      %935 = vperm.xlu0 %934, %v921
      %v936 = vpop.permute.xlu0 %935
      %939 = vset.pattern.permute.xlu0 0
      %940 = vperm.xlu0 %939, %v922
      %v941 = vpop.permute.xlu0 %940
      %v943 = vmul.f32 %v910, %v926
      %v944 = vmul.f32 %v911, %v926
      %v945 = vmul.f32 %v912, %v931
      %v946 = vmul.f32 %v913, %v931
      %v947 = vmul.f32 %v914, %v936
      %v948 = vmul.f32 %v915, %v936
      %v949 = vmul.f32 %v916, %v941
      %v950 = vmul.f32 %v917, %v941
      %v951 = vadd.f32 %v864, %v943
      %v952 = vadd.f32 %v865, %v944
      %v953 = vadd.f32 %v866, %v945
      %v954 = vadd.f32 %v867, %v946
      %v955 = vadd.f32 %v868, %v947
      %v956 = vadd.f32 %v869, %v948
      %v957 = vadd.f32 %v870, %v949
      %v958 = vadd.f32 %v871, %v950
      %959 = vrot.lane.b32.xlu0 %v465, 113
      %v960 = vpop.permute.xlu0 %959
      %961 = vrot.lane.b32.xlu0 %v469, 113
      %v962 = vpop.permute.xlu0 %961
      %963 = vrot.lane.b32.xlu0 %v475, 113
      %v964 = vpop.permute.xlu0 %963
      %965 = vrot.lane.b32.xlu0 %v479, 113
      %v966 = vpop.permute.xlu0 %965
      %967 = vrot.lane.b32.xlu0 %v467, 113
      %v968 = vpop.permute.xlu0 %967
      %969 = vrot.lane.b32.xlu0 %v471, 113
      %v970 = vpop.permute.xlu0 %969
      %971 = vrot.lane.b32.xlu0 %v477, 113
      %v972 = vpop.permute.xlu0 %971
      %973 = vrot.lane.b32.xlu0 %v481, 113
      %v974 = vpop.permute.xlu0 %973
      %vm975 = vcmp.lt.s32.totalorder %v500, 113
      %v976 = vsel %vm975, %v960, %v968
      %v977 = vsel %vm975, %v962, %v970
      %v978 = vsel %vm975, %v964, %v972
      %v979 = vsel %vm975, %v966, %v974
      %v980 = vsel %vm975, %v968, %v960
      %v981 = vsel %vm975, %v970, %v962
      %v982 = vsel %vm975, %v972, %v964
      %v983 = vsel %vm975, %v974, %v966
      %s984 = scalar_lea.vmem %s5, 12
      %v985 = vld [vmem:[%s984] sm:$0x3]
      %v987 = vlaneseq
      %v988 = vshrl.u32 %v987, 7
      %v989 = vsub.s32 0, %v988
      %v990 = vrot.slane %v985, %v989
      %v991 = vlaneseq
      %v992 = vshrl.u32 %v991, 7
      %v993 = vsub.s32 1, %v992
      %v994 = vrot.slane %v985, %v993
      %v997 = vmul.f32 %v976, %v990
      %v998 = vmul.f32 %v980, %v994
      %v999 = vmul.f32 %v977, %v990
      %v1000 = vmul.f32 %v981, %v994
      %v1001 = vmul.f32 %v978, %v990
      %v1002 = vmul.f32 %v982, %v994
      %v1003 = vmul.f32 %v979, %v990
      %v1004 = vmul.f32 %v983, %v994
      %s1005 = scalar_lea.vmem %s3, 576
      %v1006 = vld [vmem:[%s1005] sm:$0xff]
      %v1007 = vld [vmem:[%s1005 + $0x8] sm:$0xff]
      %v1008 = vld [vmem:[%s1005 + $0x10] sm:$0xff]
      %v1009 = vld [vmem:[%s1005 + $0x18] sm:$0xff]
      %1011 = vset.pattern.permute.xlu0 0
      %1012 = vperm.xlu0 %1011, %v1006
      %v1013 = vpop.permute.xlu0 %1012
      %1016 = vset.pattern.permute.xlu0 0
      %1017 = vperm.xlu0 %1016, %v1007
      %v1018 = vpop.permute.xlu0 %1017
      %1021 = vset.pattern.permute.xlu0 0
      %1022 = vperm.xlu0 %1021, %v1008
      %v1023 = vpop.permute.xlu0 %1022
      %1026 = vset.pattern.permute.xlu0 0
      %1027 = vperm.xlu0 %1026, %v1009
      %v1028 = vpop.permute.xlu0 %1027
      %v1030 = vmul.f32 %v997, %v1013
      %v1031 = vmul.f32 %v998, %v1013
      %v1032 = vmul.f32 %v999, %v1018
      %v1033 = vmul.f32 %v1000, %v1018
      %v1034 = vmul.f32 %v1001, %v1023
      %v1035 = vmul.f32 %v1002, %v1023
      %v1036 = vmul.f32 %v1003, %v1028
      %v1037 = vmul.f32 %v1004, %v1028
      %v1038 = vadd.f32 %v951, %v1030
      %v1039 = vadd.f32 %v952, %v1031
      %v1040 = vadd.f32 %v953, %v1032
      %v1041 = vadd.f32 %v954, %v1033
      %v1042 = vadd.f32 %v955, %v1034
      %v1043 = vadd.f32 %v956, %v1035
      %v1044 = vadd.f32 %v957, %v1036
      %v1045 = vadd.f32 %v958, %v1037
      %1046 = vrot.lane.b32.xlu0 %v465, 112
      %v1047 = vpop.permute.xlu0 %1046
      %1048 = vrot.lane.b32.xlu0 %v469, 112
      %v1049 = vpop.permute.xlu0 %1048
      %1050 = vrot.lane.b32.xlu0 %v475, 112
      %v1051 = vpop.permute.xlu0 %1050
      %1052 = vrot.lane.b32.xlu0 %v479, 112
      %v1053 = vpop.permute.xlu0 %1052
      %1054 = vrot.lane.b32.xlu0 %v467, 112
      %v1055 = vpop.permute.xlu0 %1054
      %1056 = vrot.lane.b32.xlu0 %v471, 112
      %v1057 = vpop.permute.xlu0 %1056
      %1058 = vrot.lane.b32.xlu0 %v477, 112
      %v1059 = vpop.permute.xlu0 %1058
      %1060 = vrot.lane.b32.xlu0 %v481, 112
      %v1061 = vpop.permute.xlu0 %1060
      %vm1062 = vcmp.lt.s32.totalorder %v500, 112
      %v1063 = vsel %vm1062, %v1047, %v1055
      %v1064 = vsel %vm1062, %v1049, %v1057
      %v1065 = vsel %vm1062, %v1051, %v1059
      %v1066 = vsel %vm1062, %v1053, %v1061
      %v1067 = vsel %vm1062, %v1055, %v1047
      %v1068 = vsel %vm1062, %v1057, %v1049
      %v1069 = vsel %vm1062, %v1059, %v1051
      %v1070 = vsel %vm1062, %v1061, %v1053
      %s1071 = scalar_lea.vmem %s5, 14
      %v1072 = vld [vmem:[%s1071] sm:$0x3]
      %v1074 = vlaneseq
      %v1075 = vshrl.u32 %v1074, 7
      %v1076 = vsub.s32 0, %v1075
      %v1077 = vrot.slane %v1072, %v1076
      %v1078 = vlaneseq
      %v1079 = vshrl.u32 %v1078, 7
      %v1080 = vsub.s32 1, %v1079
      %v1081 = vrot.slane %v1072, %v1080
      %v1084 = vmul.f32 %v1063, %v1077
      %v1085 = vmul.f32 %v1067, %v1081
      %v1086 = vmul.f32 %v1064, %v1077
      %v1087 = vmul.f32 %v1068, %v1081
      %v1088 = vmul.f32 %v1065, %v1077
      %v1089 = vmul.f32 %v1069, %v1081
      %v1090 = vmul.f32 %v1066, %v1077
      %v1091 = vmul.f32 %v1070, %v1081
      %s1092 = scalar_lea.vmem %s3, 672
      %v1093 = vld [vmem:[%s1092] sm:$0xff]
      %v1094 = vld [vmem:[%s1092 + $0x8] sm:$0xff]
      %v1095 = vld [vmem:[%s1092 + $0x10] sm:$0xff]
      %v1096 = vld [vmem:[%s1092 + $0x18] sm:$0xff]
      %1098 = vset.pattern.permute.xlu0 0
      %1099 = vperm.xlu0 %1098, %v1093
      %v1100 = vpop.permute.xlu0 %1099
      %1103 = vset.pattern.permute.xlu0 0
      %1104 = vperm.xlu0 %1103, %v1094
      %v1105 = vpop.permute.xlu0 %1104
      %1108 = vset.pattern.permute.xlu0 0
      %1109 = vperm.xlu0 %1108, %v1095
      %v1110 = vpop.permute.xlu0 %1109
      %1113 = vset.pattern.permute.xlu0 0
      %1114 = vperm.xlu0 %1113, %v1096
      %v1115 = vpop.permute.xlu0 %1114
      %v1117 = vmul.f32 %v1084, %v1100
      %v1118 = vmul.f32 %v1085, %v1100
      %v1119 = vmul.f32 %v1086, %v1105
      %v1120 = vmul.f32 %v1087, %v1105
      %v1121 = vmul.f32 %v1088, %v1110
      %v1122 = vmul.f32 %v1089, %v1110
      %v1123 = vmul.f32 %v1090, %v1115
      %v1124 = vmul.f32 %v1091, %v1115
      %v1125 = vadd.f32 %v1038, %v1117
      %v1126 = vadd.f32 %v1039, %v1118
      %v1127 = vadd.f32 %v1040, %v1119
      %v1128 = vadd.f32 %v1041, %v1120
      %v1129 = vadd.f32 %v1042, %v1121
      %v1130 = vadd.f32 %v1043, %v1122
      %v1131 = vadd.f32 %v1044, %v1123
      %v1132 = vadd.f32 %v1045, %v1124
      %1133 = vrot.lane.b32.xlu0 %v465, 111
      %v1134 = vpop.permute.xlu0 %1133
      %1135 = vrot.lane.b32.xlu0 %v469, 111
      %v1136 = vpop.permute.xlu0 %1135
      %1137 = vrot.lane.b32.xlu0 %v475, 111
      %v1138 = vpop.permute.xlu0 %1137
      %1139 = vrot.lane.b32.xlu0 %v479, 111
      %v1140 = vpop.permute.xlu0 %1139
      %1141 = vrot.lane.b32.xlu0 %v467, 111
      %v1142 = vpop.permute.xlu0 %1141
      %1143 = vrot.lane.b32.xlu0 %v471, 111
      %v1144 = vpop.permute.xlu0 %1143
      %1145 = vrot.lane.b32.xlu0 %v477, 111
      %v1146 = vpop.permute.xlu0 %1145
      %1147 = vrot.lane.b32.xlu0 %v481, 111
      %v1148 = vpop.permute.xlu0 %1147
      %vm1149 = vcmp.lt.s32.totalorder %v500, 111
      %v1150 = vsel %vm1149, %v1134, %v1142
      %v1151 = vsel %vm1149, %v1136, %v1144
      %v1152 = vsel %vm1149, %v1138, %v1146
      %v1153 = vsel %vm1149, %v1140, %v1148
      %v1154 = vsel %vm1149, %v1142, %v1134
      %v1155 = vsel %vm1149, %v1144, %v1136
      %v1156 = vsel %vm1149, %v1146, %v1138
      %v1157 = vsel %vm1149, %v1148, %v1140
      %s1158 = scalar_lea.vmem %s5, 16
      %v1159 = vld [vmem:[%s1158] sm:$0x3]
      %v1161 = vlaneseq
      %v1162 = vshrl.u32 %v1161, 7
      %v1163 = vsub.s32 0, %v1162
      %v1164 = vrot.slane %v1159, %v1163
      %v1165 = vlaneseq
      %v1166 = vshrl.u32 %v1165, 7
      %v1167 = vsub.s32 1, %v1166
      %v1168 = vrot.slane %v1159, %v1167
      %v1171 = vmul.f32 %v1150, %v1164
      %v1172 = vmul.f32 %v1154, %v1168
      %v1173 = vmul.f32 %v1151, %v1164
      %v1174 = vmul.f32 %v1155, %v1168
      %v1175 = vmul.f32 %v1152, %v1164
      %v1176 = vmul.f32 %v1156, %v1168
      %v1177 = vmul.f32 %v1153, %v1164
      %v1178 = vmul.f32 %v1157, %v1168
      %s1179 = scalar_lea.vmem %s3, 768
      %v1180 = vld [vmem:[%s1179] sm:$0xff]
      %v1181 = vld [vmem:[%s1179 + $0x8] sm:$0xff]
      %v1182 = vld [vmem:[%s1179 + $0x10] sm:$0xff]
      %v1183 = vld [vmem:[%s1179 + $0x18] sm:$0xff]
      %1185 = vset.pattern.permute.xlu0 0
      %1186 = vperm.xlu0 %1185, %v1180
      %v1187 = vpop.permute.xlu0 %1186
      %1190 = vset.pattern.permute.xlu0 0
      %1191 = vperm.xlu0 %1190, %v1181
      %v1192 = vpop.permute.xlu0 %1191
      %1195 = vset.pattern.permute.xlu0 0
      %1196 = vperm.xlu0 %1195, %v1182
      %v1197 = vpop.permute.xlu0 %1196
      %1200 = vset.pattern.permute.xlu0 0
      %1201 = vperm.xlu0 %1200, %v1183
      %v1202 = vpop.permute.xlu0 %1201
      %v1204 = vmul.f32 %v1171, %v1187
      %v1205 = vmul.f32 %v1172, %v1187
      %v1206 = vmul.f32 %v1173, %v1192
      %v1207 = vmul.f32 %v1174, %v1192
      %v1208 = vmul.f32 %v1175, %v1197
      %v1209 = vmul.f32 %v1176, %v1197
      %v1210 = vmul.f32 %v1177, %v1202
      %v1211 = vmul.f32 %v1178, %v1202
      %v1212 = vadd.f32 %v1125, %v1204
      %v1213 = vadd.f32 %v1126, %v1205
      %v1214 = vadd.f32 %v1127, %v1206
      %v1215 = vadd.f32 %v1128, %v1207
      %v1216 = vadd.f32 %v1129, %v1208
      %v1217 = vadd.f32 %v1130, %v1209
      %v1218 = vadd.f32 %v1131, %v1210
      %v1219 = vadd.f32 %v1132, %v1211
      %v1220 = vld [vmem:[%s4] sm:$0xff]
      %v1221 = vld [vmem:[%s4 + $0x8] sm:$0xff]
      %v1222 = vld [vmem:[%s4 + $0x10] sm:$0xff]
      %v1223 = vld [vmem:[%s4 + $0x18] sm:$0xff]
      %1225 = vset.pattern.permute.xlu0 0
      %1226 = vperm.xlu0 %1225, %v1220
      %v1227 = vpop.permute.xlu0 %1226
      %1230 = vset.pattern.permute.xlu0 0
      %1231 = vperm.xlu0 %1230, %v1221
      %v1232 = vpop.permute.xlu0 %1231
      %1235 = vset.pattern.permute.xlu0 0
      %1236 = vperm.xlu0 %1235, %v1222
      %v1237 = vpop.permute.xlu0 %1236
      %1240 = vset.pattern.permute.xlu0 0
      %1241 = vperm.xlu0 %1240, %v1223
      %v1242 = vpop.permute.xlu0 %1241
      %v1244 = vadd.f32 %v1212, %v1227
      %v1245 = vadd.f32 %v1213, %v1227
      %v1246 = vadd.f32 %v1214, %v1232
      %v1247 = vadd.f32 %v1215, %v1232
      %v1248 = vadd.f32 %v1216, %v1237
      %v1249 = vadd.f32 %v1217, %v1237
      %v1250 = vadd.f32 %v1218, %v1242
      %v1251 = vadd.f32 %v1219, %v1242
      %1252 = vst [vmem:[#allocation2] sm:$0xff] %v1244
      %1253 = vst [vmem:[#allocation2 + $0x8] sm:$0xff] %v1245
      %1254 = vst [vmem:[#allocation2 + $0x10] sm:$0xff] %v1246
      %1255 = vst [vmem:[#allocation2 + $0x18] sm:$0xff] %v1247
      %1256 = vst [vmem:[#allocation2 + $0x20] sm:$0xff] %v1248
      %1257 = vst [vmem:[#allocation2 + $0x28] sm:$0xff] %v1249
      %1258 = vst [vmem:[#allocation2 + $0x30] sm:$0xff] %v1250
      %1259 = vst [vmem:[#allocation2 + $0x38] sm:$0xff] %v1251
      %v1260 = vld [vmem:[%s1 + $0x10] sm:$0xf]
      %v1261 = vld [vmem:[%s1 + $0x14] sm:$0xf]
      %v1262 = vld [vmem:[%s1 + $0x18] sm:$0xf]
      %v1263 = vld [vmem:[%s1 + $0x1c] sm:$0xf]
      %v1264 = vld [vmem:[%s2 + $0x20] sm:$0xff]
      %v1265 = vld [vmem:[%s2 + $0x28] sm:$0xff]
      %v1266 = vld [vmem:[%s2 + $0x30] sm:$0xff]
      %v1267 = vld [vmem:[%s2 + $0x38] sm:$0xff]
      %1269 = vset.pattern.permute.xlu0 0
      %1270 = vperm.xlu0 %1269, %v1264
      %v1271 = vpop.permute.xlu0 %1270
      %1274 = vset.pattern.permute.xlu0 0
      %1275 = vperm.xlu0 %1274, %v1265
      %v1276 = vpop.permute.xlu0 %1275
      %1279 = vset.pattern.permute.xlu0 0
      %1280 = vperm.xlu0 %1279, %v1266
      %v1281 = vpop.permute.xlu0 %1280
      %1284 = vset.pattern.permute.xlu0 0
      %1285 = vperm.xlu0 %1284, %v1267
      %v1286 = vpop.permute.xlu0 %1285
      %v1292 = vunpack.c.l.b16 %v1260
      %v1293 = vunpack.c.l.b16 %v1261
      %v1294 = vunpack.c.l.b16 %v1262
      %v1295 = vunpack.c.l.b16 %v1263
      %v1296 = vpack.c.b16 %v1293, %v1292
      %v1297 = vpack.c.b16 %v1295, %v1294
      %v1299 = vsel %vm423, %v1296, 0
      %v1302 = vsel %vm423, %v1297, 0
      %1304 = vmatprep.subr.bf16.mxu0 0
      %1305 = vmatpush1.bf16.msra.mxu0 0
      %1306 = vmatprep.subr.bf16.mxu0 0
      %1307 = vmatpush1.bf16.msra.mxu0 0
      %1308 = vmatprep.subr.bf16.mxu0 0
      %1309 = vmatpush1.bf16.msra.mxu0 0
      %1310 = vmatprep.subr.bf16.mxu0 0
      %1311 = vmatpush1.bf16.msra.mxu0 0
      %1312 = vmatprep.subr.bf16.mxu0 0
      %1313 = vmatpush1.bf16.msra.mxu0 0
      %1314 = vmatprep.subr.bf16.mxu0 0
      %1315 = vmatpush1.bf16.msra.mxu0 0
      %1316 = vmatprep.subr.bf16.mxu0 %v418
      %1317 = vmatpush1.bf16.msra.mxu0 %v417
      %1318 = vmatprep.subr.bf16.mxu0 %v416
      %1319 = vmatpush1.bf16.msra.mxu0 %v415
      %1320 = vmatprep.subr.bf16.mxu0 0
      %1321 = vmatpush2.bf16.msra.mxu0 0
      %1322 = vmatprep.subr.bf16.mxu0 0
      %1323 = vmatpush2.bf16.msra.mxu0 0
      %1324 = vmatprep.subr.bf16.mxu0 0
      %1325 = vmatpush2.bf16.msra.mxu0 0
      %1326 = vmatprep.subr.bf16.mxu0 0
      %1327 = vmatpush2.bf16.msra.mxu0 0
      %1328 = vmatprep.subr.bf16.mxu0 0
      %1329 = vmatpush2.bf16.msra.mxu0 0
      %1330 = vmatprep.subr.bf16.mxu0 0
      %1331 = vmatpush2.bf16.msra.mxu0 0
      %1332 = vmatprep.subr.bf16.mxu0 0
      %1333 = vmatpush2.bf16.msra.mxu0 0
      %1334 = vmatprep.subr.bf16.mxu0 0
      %1335 = vmatpush2.bf16.msra.mxu0 0
      %1336 = vmatprep.mubr.bf16.mxu0 0
      %1337 = vmatmul.mubr.bf16.gmra.mxu0 %v1299
      %v1338 = vpop.f32.mrf.mxu0
      %v1339 = vadd.f32 %v1271, %v1338
      %v1340 = vpop.f32.mrf.mxu0
      %v1341 = vadd.f32 %v1271, %v1340
      %v1342 = vpop.f32.mrf.mxu0
      %v1343 = vadd.f32 %v1276, %v1342
      %v1344 = vpop.f32.mrf.mxu0
      %v1345 = vadd.f32 %v1276, %v1344
      %1346 = vmatprep.mubr.bf16.mxu0 0
      %1347 = vmatmul.mubr.bf16.gmra.mxu0 %v1302
      %v1348 = vpop.f32.mrf.mxu0
      %v1349 = vadd.f32 %v1281, %v1348
      %v1350 = vpop.f32.mrf.mxu0
      %v1351 = vadd.f32 %v1281, %v1350
      %v1352 = vpop.f32.mrf.mxu0
      %v1353 = vadd.f32 %v1286, %v1352
      %v1354 = vpop.f32.mrf.mxu0
      %v1355 = vadd.f32 %v1286, %v1354
      %1356 = vdwg.mxu0
      %1357 = vrot.lane.b32.xlu0 %v1339, 17
      %v1358 = vpop.permute.xlu0 %1357
      %1359 = vrot.lane.b32.xlu0 %v1343, 17
      %v1360 = vpop.permute.xlu0 %1359
      %1361 = vrot.lane.b32.xlu0 %v1349, 17
      %v1362 = vpop.permute.xlu0 %1361
      %1363 = vrot.lane.b32.xlu0 %v1353, 17
      %v1364 = vpop.permute.xlu0 %1363
      %1365 = vrot.lane.b32.xlu0 %v1341, 17
      %v1366 = vpop.permute.xlu0 %1365
      %1367 = vrot.lane.b32.xlu0 %v1345, 17
      %v1368 = vpop.permute.xlu0 %1367
      %1369 = vrot.lane.b32.xlu0 %v1351, 17
      %v1370 = vpop.permute.xlu0 %1369
      %1371 = vrot.lane.b32.xlu0 %v1355, 17
      %v1372 = vpop.permute.xlu0 %1371
      %v1373 = vsel %vm501, %v1358, %v1366
      %v1374 = vsel %vm501, %v1360, %v1368
      %v1375 = vsel %vm501, %v1362, %v1370
      %v1376 = vsel %vm501, %v1364, %v1372
      %v1377 = vsel %vm501, %v1366, %v1358
      %v1378 = vsel %vm501, %v1368, %v1360
      %v1379 = vsel %vm501, %v1370, %v1362
      %v1380 = vsel %vm501, %v1372, %v1364
      %v1381 = vld [vmem:[%s5] sm:$0x3]
      %v1383 = vlaneseq
      %v1384 = vshrl.u32 %v1383, 7
      %v1385 = vsub.s32 0, %v1384
      %v1386 = vrot.slane %v1381, %v1385
      %v1387 = vlaneseq
      %v1388 = vshrl.u32 %v1387, 7
      %v1389 = vsub.s32 1, %v1388
      %v1390 = vrot.slane %v1381, %v1389
      %v1393 = vmul.f32 %v1377, %v1386
      %v1394 = vmul.f32 %v1373, %v1390
      %v1395 = vmul.f32 %v1378, %v1386
      %v1396 = vmul.f32 %v1374, %v1390
      %v1397 = vmul.f32 %v1379, %v1386
      %v1398 = vmul.f32 %v1375, %v1390
      %v1399 = vmul.f32 %v1380, %v1386
      %v1400 = vmul.f32 %v1376, %v1390
      %v1401 = vld [vmem:[%s3 + $0x20] sm:$0xff]
      %v1402 = vld [vmem:[%s3 + $0x28] sm:$0xff]
      %v1403 = vld [vmem:[%s3 + $0x30] sm:$0xff]
      %v1404 = vld [vmem:[%s3 + $0x38] sm:$0xff]
      %1406 = vset.pattern.permute.xlu0 0
      %1407 = vperm.xlu0 %1406, %v1401
      %v1408 = vpop.permute.xlu0 %1407
      %1411 = vset.pattern.permute.xlu0 0
      %1412 = vperm.xlu0 %1411, %v1402
      %v1413 = vpop.permute.xlu0 %1412
      %1416 = vset.pattern.permute.xlu0 0
      %1417 = vperm.xlu0 %1416, %v1403
      %v1418 = vpop.permute.xlu0 %1417
      %1421 = vset.pattern.permute.xlu0 0
      %1422 = vperm.xlu0 %1421, %v1404
      %v1423 = vpop.permute.xlu0 %1422
      %v1425 = vmul.f32 %v1393, %v1408
      %v1426 = vmul.f32 %v1394, %v1408
      %v1427 = vmul.f32 %v1395, %v1413
      %v1428 = vmul.f32 %v1396, %v1413
      %v1429 = vmul.f32 %v1397, %v1418
      %v1430 = vmul.f32 %v1398, %v1418
      %v1431 = vmul.f32 %v1399, %v1423
      %v1432 = vmul.f32 %v1400, %v1423
      %v1433 = vadd.f32 %v1425, 0.0
      %v1434 = vadd.f32 %v1426, 0.0
      %v1435 = vadd.f32 %v1427, 0.0
      %v1436 = vadd.f32 %v1428, 0.0
      %v1437 = vadd.f32 %v1429, 0.0
      %v1438 = vadd.f32 %v1430, 0.0
      %v1439 = vadd.f32 %v1431, 0.0
      %v1440 = vadd.f32 %v1432, 0.0
      %1441 = vrot.lane.b32.xlu0 %v1339, 16
      %v1442 = vpop.permute.xlu0 %1441
      %1443 = vrot.lane.b32.xlu0 %v1343, 16
      %v1444 = vpop.permute.xlu0 %1443
      %1445 = vrot.lane.b32.xlu0 %v1349, 16
      %v1446 = vpop.permute.xlu0 %1445
      %1447 = vrot.lane.b32.xlu0 %v1353, 16
      %v1448 = vpop.permute.xlu0 %1447
      %1449 = vrot.lane.b32.xlu0 %v1341, 16
      %v1450 = vpop.permute.xlu0 %1449
      %1451 = vrot.lane.b32.xlu0 %v1345, 16
      %v1452 = vpop.permute.xlu0 %1451
      %1453 = vrot.lane.b32.xlu0 %v1351, 16
      %v1454 = vpop.permute.xlu0 %1453
      %1455 = vrot.lane.b32.xlu0 %v1355, 16
      %v1456 = vpop.permute.xlu0 %1455
      %v1457 = vsel %vm586, %v1442, %v1450
      %v1458 = vsel %vm586, %v1444, %v1452
      %v1459 = vsel %vm586, %v1446, %v1454
      %v1460 = vsel %vm586, %v1448, %v1456
      %v1461 = vsel %vm586, %v1450, %v1442
      %v1462 = vsel %vm586, %v1452, %v1444
      %v1463 = vsel %vm586, %v1454, %v1446
      %v1464 = vsel %vm586, %v1456, %v1448
      %v1465 = vld [vmem:[%s595] sm:$0x3]
      %v1467 = vlaneseq
      %v1468 = vshrl.u32 %v1467, 7
      %v1469 = vsub.s32 0, %v1468
      %v1470 = vrot.slane %v1465, %v1469
      %v1471 = vlaneseq
      %v1472 = vshrl.u32 %v1471, 7
      %v1473 = vsub.s32 1, %v1472
      %v1474 = vrot.slane %v1465, %v1473
      %v1477 = vmul.f32 %v1461, %v1470
      %v1478 = vmul.f32 %v1457, %v1474
      %v1479 = vmul.f32 %v1462, %v1470
      %v1480 = vmul.f32 %v1458, %v1474
      %v1481 = vmul.f32 %v1463, %v1470
      %v1482 = vmul.f32 %v1459, %v1474
      %v1483 = vmul.f32 %v1464, %v1470
      %v1484 = vmul.f32 %v1460, %v1474
      %v1485 = vld [vmem:[%s616 + $0x20] sm:$0xff]
      %v1486 = vld [vmem:[%s616 + $0x28] sm:$0xff]
      %v1487 = vld [vmem:[%s616 + $0x30] sm:$0xff]
      %v1488 = vld [vmem:[%s616 + $0x38] sm:$0xff]
      %1490 = vset.pattern.permute.xlu0 0
      %1491 = vperm.xlu0 %1490, %v1485
      %v1492 = vpop.permute.xlu0 %1491
      %1495 = vset.pattern.permute.xlu0 0
      %1496 = vperm.xlu0 %1495, %v1486
      %v1497 = vpop.permute.xlu0 %1496
      %1500 = vset.pattern.permute.xlu0 0
      %1501 = vperm.xlu0 %1500, %v1487
      %v1502 = vpop.permute.xlu0 %1501
      %1505 = vset.pattern.permute.xlu0 0
      %1506 = vperm.xlu0 %1505, %v1488
      %v1507 = vpop.permute.xlu0 %1506
      %v1509 = vmul.f32 %v1477, %v1492
      %v1510 = vmul.f32 %v1478, %v1492
      %v1511 = vmul.f32 %v1479, %v1497
      %v1512 = vmul.f32 %v1480, %v1497
      %v1513 = vmul.f32 %v1481, %v1502
      %v1514 = vmul.f32 %v1482, %v1502
      %v1515 = vmul.f32 %v1483, %v1507
      %v1516 = vmul.f32 %v1484, %v1507
      %v1517 = vadd.f32 %v1433, %v1509
      %v1518 = vadd.f32 %v1434, %v1510
      %v1519 = vadd.f32 %v1435, %v1511
      %v1520 = vadd.f32 %v1436, %v1512
      %v1521 = vadd.f32 %v1437, %v1513
      %v1522 = vadd.f32 %v1438, %v1514
      %v1523 = vadd.f32 %v1439, %v1515
      %v1524 = vadd.f32 %v1440, %v1516
      %1525 = vrot.lane.b32.xlu0 %v1339, 15
      %v1526 = vpop.permute.xlu0 %1525
      %1527 = vrot.lane.b32.xlu0 %v1343, 15
      %v1528 = vpop.permute.xlu0 %1527
      %1529 = vrot.lane.b32.xlu0 %v1349, 15
      %v1530 = vpop.permute.xlu0 %1529
      %1531 = vrot.lane.b32.xlu0 %v1353, 15
      %v1532 = vpop.permute.xlu0 %1531
      %1533 = vrot.lane.b32.xlu0 %v1341, 15
      %v1534 = vpop.permute.xlu0 %1533
      %1535 = vrot.lane.b32.xlu0 %v1345, 15
      %v1536 = vpop.permute.xlu0 %1535
      %1537 = vrot.lane.b32.xlu0 %v1351, 15
      %v1538 = vpop.permute.xlu0 %1537
      %1539 = vrot.lane.b32.xlu0 %v1355, 15
      %v1540 = vpop.permute.xlu0 %1539
      %v1541 = vsel %vm673, %v1526, %v1534
      %v1542 = vsel %vm673, %v1528, %v1536
      %v1543 = vsel %vm673, %v1530, %v1538
      %v1544 = vsel %vm673, %v1532, %v1540
      %v1545 = vsel %vm673, %v1534, %v1526
      %v1546 = vsel %vm673, %v1536, %v1528
      %v1547 = vsel %vm673, %v1538, %v1530
      %v1548 = vsel %vm673, %v1540, %v1532
      %v1549 = vld [vmem:[%s682] sm:$0x3]
      %v1551 = vlaneseq
      %v1552 = vshrl.u32 %v1551, 7
      %v1553 = vsub.s32 0, %v1552
      %v1554 = vrot.slane %v1549, %v1553
      %v1555 = vlaneseq
      %v1556 = vshrl.u32 %v1555, 7
      %v1557 = vsub.s32 1, %v1556
      %v1558 = vrot.slane %v1549, %v1557
      %v1561 = vmul.f32 %v1545, %v1554
      %v1562 = vmul.f32 %v1541, %v1558
      %v1563 = vmul.f32 %v1546, %v1554
      %v1564 = vmul.f32 %v1542, %v1558
      %v1565 = vmul.f32 %v1547, %v1554
      %v1566 = vmul.f32 %v1543, %v1558
      %v1567 = vmul.f32 %v1548, %v1554
      %v1568 = vmul.f32 %v1544, %v1558
      %v1569 = vld [vmem:[%s703 + $0x20] sm:$0xff]
      %v1570 = vld [vmem:[%s703 + $0x28] sm:$0xff]
      %v1571 = vld [vmem:[%s703 + $0x30] sm:$0xff]
      %v1572 = vld [vmem:[%s703 + $0x38] sm:$0xff]
      %1574 = vset.pattern.permute.xlu0 0
      %1575 = vperm.xlu0 %1574, %v1569
      %v1576 = vpop.permute.xlu0 %1575
      %1579 = vset.pattern.permute.xlu0 0
      %1580 = vperm.xlu0 %1579, %v1570
      %v1581 = vpop.permute.xlu0 %1580
      %1584 = vset.pattern.permute.xlu0 0
      %1585 = vperm.xlu0 %1584, %v1571
      %v1586 = vpop.permute.xlu0 %1585
      %1589 = vset.pattern.permute.xlu0 0
      %1590 = vperm.xlu0 %1589, %v1572
      %v1591 = vpop.permute.xlu0 %1590
      %v1593 = vmul.f32 %v1561, %v1576
      %v1594 = vmul.f32 %v1562, %v1576
      %v1595 = vmul.f32 %v1563, %v1581
      %v1596 = vmul.f32 %v1564, %v1581
      %v1597 = vmul.f32 %v1565, %v1586
      %v1598 = vmul.f32 %v1566, %v1586
      %v1599 = vmul.f32 %v1567, %v1591
      %v1600 = vmul.f32 %v1568, %v1591
      %v1601 = vadd.f32 %v1517, %v1593
      %v1602 = vadd.f32 %v1518, %v1594
      %v1603 = vadd.f32 %v1519, %v1595
      %v1604 = vadd.f32 %v1520, %v1596
      %v1605 = vadd.f32 %v1521, %v1597
      %v1606 = vadd.f32 %v1522, %v1598
      %v1607 = vadd.f32 %v1523, %v1599
      %v1608 = vadd.f32 %v1524, %v1600
      %1609 = vrot.lane.b32.xlu0 %v1339, 1
      %v1610 = vpop.permute.xlu0 %1609
      %1611 = vrot.lane.b32.xlu0 %v1343, 1
      %v1612 = vpop.permute.xlu0 %1611
      %1613 = vrot.lane.b32.xlu0 %v1349, 1
      %v1614 = vpop.permute.xlu0 %1613
      %1615 = vrot.lane.b32.xlu0 %v1353, 1
      %v1616 = vpop.permute.xlu0 %1615
      %1617 = vrot.lane.b32.xlu0 %v1341, 1
      %v1618 = vpop.permute.xlu0 %1617
      %1619 = vrot.lane.b32.xlu0 %v1345, 1
      %v1620 = vpop.permute.xlu0 %1619
      %1621 = vrot.lane.b32.xlu0 %v1351, 1
      %v1622 = vpop.permute.xlu0 %1621
      %1623 = vrot.lane.b32.xlu0 %v1355, 1
      %v1624 = vpop.permute.xlu0 %1623
      %v1625 = vsel %vm760, %v1610, %v1618
      %v1626 = vsel %vm760, %v1612, %v1620
      %v1627 = vsel %vm760, %v1614, %v1622
      %v1628 = vsel %vm760, %v1616, %v1624
      %v1629 = vsel %vm760, %v1618, %v1610
      %v1630 = vsel %vm760, %v1620, %v1612
      %v1631 = vsel %vm760, %v1622, %v1614
      %v1632 = vsel %vm760, %v1624, %v1616
      %v1633 = vld [vmem:[%s769] sm:$0x3]
      %v1635 = vlaneseq
      %v1636 = vshrl.u32 %v1635, 7
      %v1637 = vsub.s32 0, %v1636
      %v1638 = vrot.slane %v1633, %v1637
      %v1639 = vlaneseq
      %v1640 = vshrl.u32 %v1639, 7
      %v1641 = vsub.s32 1, %v1640
      %v1642 = vrot.slane %v1633, %v1641
      %v1645 = vmul.f32 %v1629, %v1638
      %v1646 = vmul.f32 %v1625, %v1642
      %v1647 = vmul.f32 %v1630, %v1638
      %v1648 = vmul.f32 %v1626, %v1642
      %v1649 = vmul.f32 %v1631, %v1638
      %v1650 = vmul.f32 %v1627, %v1642
      %v1651 = vmul.f32 %v1632, %v1638
      %v1652 = vmul.f32 %v1628, %v1642
      %v1653 = vld [vmem:[%s790 + $0x20] sm:$0xff]
      %v1654 = vld [vmem:[%s790 + $0x28] sm:$0xff]
      %v1655 = vld [vmem:[%s790 + $0x30] sm:$0xff]
      %v1656 = vld [vmem:[%s790 + $0x38] sm:$0xff]
      %1658 = vset.pattern.permute.xlu0 0
      %1659 = vperm.xlu0 %1658, %v1653
      %v1660 = vpop.permute.xlu0 %1659
      %1663 = vset.pattern.permute.xlu0 0
      %1664 = vperm.xlu0 %1663, %v1654
      %v1665 = vpop.permute.xlu0 %1664
      %1668 = vset.pattern.permute.xlu0 0
      %1669 = vperm.xlu0 %1668, %v1655
      %v1670 = vpop.permute.xlu0 %1669
      %1673 = vset.pattern.permute.xlu0 0
      %1674 = vperm.xlu0 %1673, %v1656
      %v1675 = vpop.permute.xlu0 %1674
      %v1677 = vmul.f32 %v1645, %v1660
      %v1678 = vmul.f32 %v1646, %v1660
      %v1679 = vmul.f32 %v1647, %v1665
      %v1680 = vmul.f32 %v1648, %v1665
      %v1681 = vmul.f32 %v1649, %v1670
      %v1682 = vmul.f32 %v1650, %v1670
      %v1683 = vmul.f32 %v1651, %v1675
      %v1684 = vmul.f32 %v1652, %v1675
      %v1685 = vadd.f32 %v1601, %v1677
      %v1686 = vadd.f32 %v1602, %v1678
      %v1687 = vadd.f32 %v1603, %v1679
      %v1688 = vadd.f32 %v1604, %v1680
      %v1689 = vadd.f32 %v1605, %v1681
      %v1690 = vadd.f32 %v1606, %v1682
      %v1691 = vadd.f32 %v1607, %v1683
      %v1692 = vadd.f32 %v1608, %v1684
      %v1693 = vld [vmem:[%s831 + $0x20] sm:$0xff]
      %v1694 = vld [vmem:[%s831 + $0x28] sm:$0xff]
      %v1695 = vld [vmem:[%s831 + $0x30] sm:$0xff]
      %v1696 = vld [vmem:[%s831 + $0x38] sm:$0xff]
      %1698 = vset.pattern.permute.xlu0 0
      %1699 = vperm.xlu0 %1698, %v1693
      %v1700 = vpop.permute.xlu0 %1699
      %1703 = vset.pattern.permute.xlu0 0
      %1704 = vperm.xlu0 %1703, %v1694
      %v1705 = vpop.permute.xlu0 %1704
      %1708 = vset.pattern.permute.xlu0 0
      %1709 = vperm.xlu0 %1708, %v1695
      %v1710 = vpop.permute.xlu0 %1709
      %1713 = vset.pattern.permute.xlu0 0
      %1714 = vperm.xlu0 %1713, %v1696
      %v1715 = vpop.permute.xlu0 %1714
      %v1717 = vmul.f32 %v1339, %v1700
      %v1718 = vmul.f32 %v1341, %v1700
      %v1719 = vmul.f32 %v1343, %v1705
      %v1720 = vmul.f32 %v1345, %v1705
      %v1721 = vmul.f32 %v1349, %v1710
      %v1722 = vmul.f32 %v1351, %v1710
      %v1723 = vmul.f32 %v1353, %v1715
      %v1724 = vmul.f32 %v1355, %v1715
      %v1725 = vadd.f32 %v1685, %v1717
      %v1726 = vadd.f32 %v1686, %v1718
      %v1727 = vadd.f32 %v1687, %v1719
      %v1728 = vadd.f32 %v1688, %v1720
      %v1729 = vadd.f32 %v1689, %v1721
      %v1730 = vadd.f32 %v1690, %v1722
      %v1731 = vadd.f32 %v1691, %v1723
      %v1732 = vadd.f32 %v1692, %v1724
      %1733 = vrot.lane.b32.xlu0 %v1339, 127
      %v1734 = vpop.permute.xlu0 %1733
      %1735 = vrot.lane.b32.xlu0 %v1343, 127
      %v1736 = vpop.permute.xlu0 %1735
      %1737 = vrot.lane.b32.xlu0 %v1349, 127
      %v1738 = vpop.permute.xlu0 %1737
      %1739 = vrot.lane.b32.xlu0 %v1353, 127
      %v1740 = vpop.permute.xlu0 %1739
      %1741 = vrot.lane.b32.xlu0 %v1341, 127
      %v1742 = vpop.permute.xlu0 %1741
      %1743 = vrot.lane.b32.xlu0 %v1345, 127
      %v1744 = vpop.permute.xlu0 %1743
      %1745 = vrot.lane.b32.xlu0 %v1351, 127
      %v1746 = vpop.permute.xlu0 %1745
      %1747 = vrot.lane.b32.xlu0 %v1355, 127
      %v1748 = vpop.permute.xlu0 %1747
      %v1749 = vsel %vm888, %v1734, %v1742
      %v1750 = vsel %vm888, %v1736, %v1744
      %v1751 = vsel %vm888, %v1738, %v1746
      %v1752 = vsel %vm888, %v1740, %v1748
      %v1753 = vsel %vm888, %v1742, %v1734
      %v1754 = vsel %vm888, %v1744, %v1736
      %v1755 = vsel %vm888, %v1746, %v1738
      %v1756 = vsel %vm888, %v1748, %v1740
      %v1757 = vld [vmem:[%s897] sm:$0x3]
      %v1759 = vlaneseq
      %v1760 = vshrl.u32 %v1759, 7
      %v1761 = vsub.s32 0, %v1760
      %v1762 = vrot.slane %v1757, %v1761
      %v1763 = vlaneseq
      %v1764 = vshrl.u32 %v1763, 7
      %v1765 = vsub.s32 1, %v1764
      %v1766 = vrot.slane %v1757, %v1765
      %v1769 = vmul.f32 %v1749, %v1762
      %v1770 = vmul.f32 %v1753, %v1766
      %v1771 = vmul.f32 %v1750, %v1762
      %v1772 = vmul.f32 %v1754, %v1766
      %v1773 = vmul.f32 %v1751, %v1762
      %v1774 = vmul.f32 %v1755, %v1766
      %v1775 = vmul.f32 %v1752, %v1762
      %v1776 = vmul.f32 %v1756, %v1766
      %v1777 = vld [vmem:[%s918 + $0x20] sm:$0xff]
      %v1778 = vld [vmem:[%s918 + $0x28] sm:$0xff]
      %v1779 = vld [vmem:[%s918 + $0x30] sm:$0xff]
      %v1780 = vld [vmem:[%s918 + $0x38] sm:$0xff]
      %1782 = vset.pattern.permute.xlu0 0
      %1783 = vperm.xlu0 %1782, %v1777
      %v1784 = vpop.permute.xlu0 %1783
      %1787 = vset.pattern.permute.xlu0 0
      %1788 = vperm.xlu0 %1787, %v1778
      %v1789 = vpop.permute.xlu0 %1788
      %1792 = vset.pattern.permute.xlu0 0
      %1793 = vperm.xlu0 %1792, %v1779
      %v1794 = vpop.permute.xlu0 %1793
      %1797 = vset.pattern.permute.xlu0 0
      %1798 = vperm.xlu0 %1797, %v1780
      %v1799 = vpop.permute.xlu0 %1798
      %v1801 = vmul.f32 %v1769, %v1784
      %v1802 = vmul.f32 %v1770, %v1784
      %v1803 = vmul.f32 %v1771, %v1789
      %v1804 = vmul.f32 %v1772, %v1789
      %v1805 = vmul.f32 %v1773, %v1794
      %v1806 = vmul.f32 %v1774, %v1794
      %v1807 = vmul.f32 %v1775, %v1799
      %v1808 = vmul.f32 %v1776, %v1799
      %v1809 = vadd.f32 %v1725, %v1801
      %v1810 = vadd.f32 %v1726, %v1802
      %v1811 = vadd.f32 %v1727, %v1803
      %v1812 = vadd.f32 %v1728, %v1804
      %v1813 = vadd.f32 %v1729, %v1805
      %v1814 = vadd.f32 %v1730, %v1806
      %v1815 = vadd.f32 %v1731, %v1807
      %v1816 = vadd.f32 %v1732, %v1808
      %1817 = vrot.lane.b32.xlu0 %v1339, 113
      %v1818 = vpop.permute.xlu0 %1817
      %1819 = vrot.lane.b32.xlu0 %v1343, 113
      %v1820 = vpop.permute.xlu0 %1819
      %1821 = vrot.lane.b32.xlu0 %v1349, 113
      %v1822 = vpop.permute.xlu0 %1821
      %1823 = vrot.lane.b32.xlu0 %v1353, 113
      %v1824 = vpop.permute.xlu0 %1823
      %1825 = vrot.lane.b32.xlu0 %v1341, 113
      %v1826 = vpop.permute.xlu0 %1825
      %1827 = vrot.lane.b32.xlu0 %v1345, 113
      %v1828 = vpop.permute.xlu0 %1827
      %1829 = vrot.lane.b32.xlu0 %v1351, 113
      %v1830 = vpop.permute.xlu0 %1829
      %1831 = vrot.lane.b32.xlu0 %v1355, 113
      %v1832 = vpop.permute.xlu0 %1831
      %v1833 = vsel %vm975, %v1818, %v1826
      %v1834 = vsel %vm975, %v1820, %v1828
      %v1835 = vsel %vm975, %v1822, %v1830
      %v1836 = vsel %vm975, %v1824, %v1832
      %v1837 = vsel %vm975, %v1826, %v1818
      %v1838 = vsel %vm975, %v1828, %v1820
      %v1839 = vsel %vm975, %v1830, %v1822
      %v1840 = vsel %vm975, %v1832, %v1824
      %v1841 = vld [vmem:[%s984] sm:$0x3]
      %v1843 = vlaneseq
      %v1844 = vshrl.u32 %v1843, 7
      %v1845 = vsub.s32 0, %v1844
      %v1846 = vrot.slane %v1841, %v1845
      %v1847 = vlaneseq
      %v1848 = vshrl.u32 %v1847, 7
      %v1849 = vsub.s32 1, %v1848
      %v1850 = vrot.slane %v1841, %v1849
      %v1853 = vmul.f32 %v1833, %v1846
      %v1854 = vmul.f32 %v1837, %v1850
      %v1855 = vmul.f32 %v1834, %v1846
      %v1856 = vmul.f32 %v1838, %v1850
      %v1857 = vmul.f32 %v1835, %v1846
      %v1858 = vmul.f32 %v1839, %v1850
      %v1859 = vmul.f32 %v1836, %v1846
      %v1860 = vmul.f32 %v1840, %v1850
      %v1861 = vld [vmem:[%s1005 + $0x20] sm:$0xff]
      %v1862 = vld [vmem:[%s1005 + $0x28] sm:$0xff]
      %v1863 = vld [vmem:[%s1005 + $0x30] sm:$0xff]
      %v1864 = vld [vmem:[%s1005 + $0x38] sm:$0xff]
      %1866 = vset.pattern.permute.xlu0 0
      %1867 = vperm.xlu0 %1866, %v1861
      %v1868 = vpop.permute.xlu0 %1867
      %1871 = vset.pattern.permute.xlu0 0
      %1872 = vperm.xlu0 %1871, %v1862
      %v1873 = vpop.permute.xlu0 %1872
      %1876 = vset.pattern.permute.xlu0 0
      %1877 = vperm.xlu0 %1876, %v1863
      %v1878 = vpop.permute.xlu0 %1877
      %1881 = vset.pattern.permute.xlu0 0
      %1882 = vperm.xlu0 %1881, %v1864
      %v1883 = vpop.permute.xlu0 %1882
      %v1885 = vmul.f32 %v1853, %v1868
      %v1886 = vmul.f32 %v1854, %v1868
      %v1887 = vmul.f32 %v1855, %v1873
      %v1888 = vmul.f32 %v1856, %v1873
      %v1889 = vmul.f32 %v1857, %v1878
      %v1890 = vmul.f32 %v1858, %v1878
      %v1891 = vmul.f32 %v1859, %v1883
      %v1892 = vmul.f32 %v1860, %v1883
      %v1893 = vadd.f32 %v1809, %v1885
      %v1894 = vadd.f32 %v1810, %v1886
      %v1895 = vadd.f32 %v1811, %v1887
      %v1896 = vadd.f32 %v1812, %v1888
      %v1897 = vadd.f32 %v1813, %v1889
      %v1898 = vadd.f32 %v1814, %v1890
      %v1899 = vadd.f32 %v1815, %v1891
      %v1900 = vadd.f32 %v1816, %v1892
      %1901 = vrot.lane.b32.xlu0 %v1339, 112
      %v1902 = vpop.permute.xlu0 %1901
      %1903 = vrot.lane.b32.xlu0 %v1343, 112
      %v1904 = vpop.permute.xlu0 %1903
      %1905 = vrot.lane.b32.xlu0 %v1349, 112
      %v1906 = vpop.permute.xlu0 %1905
      %1907 = vrot.lane.b32.xlu0 %v1353, 112
      %v1908 = vpop.permute.xlu0 %1907
      %1909 = vrot.lane.b32.xlu0 %v1341, 112
      %v1910 = vpop.permute.xlu0 %1909
      %1911 = vrot.lane.b32.xlu0 %v1345, 112
      %v1912 = vpop.permute.xlu0 %1911
      %1913 = vrot.lane.b32.xlu0 %v1351, 112
      %v1914 = vpop.permute.xlu0 %1913
      %1915 = vrot.lane.b32.xlu0 %v1355, 112
      %v1916 = vpop.permute.xlu0 %1915
      %v1917 = vsel %vm1062, %v1902, %v1910
      %v1918 = vsel %vm1062, %v1904, %v1912
      %v1919 = vsel %vm1062, %v1906, %v1914
      %v1920 = vsel %vm1062, %v1908, %v1916
      %v1921 = vsel %vm1062, %v1910, %v1902
      %v1922 = vsel %vm1062, %v1912, %v1904
      %v1923 = vsel %vm1062, %v1914, %v1906
      %v1924 = vsel %vm1062, %v1916, %v1908
      %v1925 = vld [vmem:[%s1071] sm:$0x3]
      %v1927 = vlaneseq
      %v1928 = vshrl.u32 %v1927, 7
      %v1929 = vsub.s32 0, %v1928
      %v1930 = vrot.slane %v1925, %v1929
      %v1931 = vlaneseq
      %v1932 = vshrl.u32 %v1931, 7
      %v1933 = vsub.s32 1, %v1932
      %v1934 = vrot.slane %v1925, %v1933
      %v1937 = vmul.f32 %v1917, %v1930
      %v1938 = vmul.f32 %v1921, %v1934
      %v1939 = vmul.f32 %v1918, %v1930
      %v1940 = vmul.f32 %v1922, %v1934
      %v1941 = vmul.f32 %v1919, %v1930
      %v1942 = vmul.f32 %v1923, %v1934
      %v1943 = vmul.f32 %v1920, %v1930
      %v1944 = vmul.f32 %v1924, %v1934
      %v1945 = vld [vmem:[%s1092 + $0x20] sm:$0xff]
      %v1946 = vld [vmem:[%s1092 + $0x28] sm:$0xff]
      %v1947 = vld [vmem:[%s1092 + $0x30] sm:$0xff]
      %v1948 = vld [vmem:[%s1092 + $0x38] sm:$0xff]
      %1950 = vset.pattern.permute.xlu0 0
      %1951 = vperm.xlu0 %1950, %v1945
      %v1952 = vpop.permute.xlu0 %1951
      %1955 = vset.pattern.permute.xlu0 0
      %1956 = vperm.xlu0 %1955, %v1946
      %v1957 = vpop.permute.xlu0 %1956
      %1960 = vset.pattern.permute.xlu0 0
      %1961 = vperm.xlu0 %1960, %v1947
      %v1962 = vpop.permute.xlu0 %1961
      %1965 = vset.pattern.permute.xlu0 0
      %1966 = vperm.xlu0 %1965, %v1948
      %v1967 = vpop.permute.xlu0 %1966
      %v1969 = vmul.f32 %v1937, %v1952
      %v1970 = vmul.f32 %v1938, %v1952
      %v1971 = vmul.f32 %v1939, %v1957
      %v1972 = vmul.f32 %v1940, %v1957
      %v1973 = vmul.f32 %v1941, %v1962
      %v1974 = vmul.f32 %v1942, %v1962
      %v1975 = vmul.f32 %v1943, %v1967
      %v1976 = vmul.f32 %v1944, %v1967
      %v1977 = vadd.f32 %v1893, %v1969
      %v1978 = vadd.f32 %v1894, %v1970
      %v1979 = vadd.f32 %v1895, %v1971
      %v1980 = vadd.f32 %v1896, %v1972
      %v1981 = vadd.f32 %v1897, %v1973
      %v1982 = vadd.f32 %v1898, %v1974
      %v1983 = vadd.f32 %v1899, %v1975
      %v1984 = vadd.f32 %v1900, %v1976
      %1985 = vrot.lane.b32.xlu0 %v1339, 111
      %v1986 = vpop.permute.xlu0 %1985
      %1987 = vrot.lane.b32.xlu0 %v1343, 111
      %v1988 = vpop.permute.xlu0 %1987
      %1989 = vrot.lane.b32.xlu0 %v1349, 111
      %v1990 = vpop.permute.xlu0 %1989
      %1991 = vrot.lane.b32.xlu0 %v1353, 111
      %v1992 = vpop.permute.xlu0 %1991
      %1993 = vrot.lane.b32.xlu0 %v1341, 111
      %v1994 = vpop.permute.xlu0 %1993
      %1995 = vrot.lane.b32.xlu0 %v1345, 111
      %v1996 = vpop.permute.xlu0 %1995
      %1997 = vrot.lane.b32.xlu0 %v1351, 111
      %v1998 = vpop.permute.xlu0 %1997
      %1999 = vrot.lane.b32.xlu0 %v1355, 111
      %v2000 = vpop.permute.xlu0 %1999
      %v2001 = vsel %vm1149, %v1986, %v1994
      %v2002 = vsel %vm1149, %v1988, %v1996
      %v2003 = vsel %vm1149, %v1990, %v1998
      %v2004 = vsel %vm1149, %v1992, %v2000
      %v2005 = vsel %vm1149, %v1994, %v1986
      %v2006 = vsel %vm1149, %v1996, %v1988
      %v2007 = vsel %vm1149, %v1998, %v1990
      %v2008 = vsel %vm1149, %v2000, %v1992
      %v2009 = vld [vmem:[%s1158] sm:$0x3]
      %v2011 = vlaneseq
      %v2012 = vshrl.u32 %v2011, 7
      %v2013 = vsub.s32 0, %v2012
      %v2014 = vrot.slane %v2009, %v2013
      %v2015 = vlaneseq
      %v2016 = vshrl.u32 %v2015, 7
      %v2017 = vsub.s32 1, %v2016
      %v2018 = vrot.slane %v2009, %v2017
      %v2021 = vmul.f32 %v2001, %v2014
      %v2022 = vmul.f32 %v2005, %v2018
      %v2023 = vmul.f32 %v2002, %v2014
      %v2024 = vmul.f32 %v2006, %v2018
      %v2025 = vmul.f32 %v2003, %v2014
      %v2026 = vmul.f32 %v2007, %v2018
      %v2027 = vmul.f32 %v2004, %v2014
      %v2028 = vmul.f32 %v2008, %v2018
      %v2029 = vld [vmem:[%s1179 + $0x20] sm:$0xff]
      %v2030 = vld [vmem:[%s1179 + $0x28] sm:$0xff]
      %v2031 = vld [vmem:[%s1179 + $0x30] sm:$0xff]
      %v2032 = vld [vmem:[%s1179 + $0x38] sm:$0xff]
      %2034 = vset.pattern.permute.xlu0 0
      %2035 = vperm.xlu0 %2034, %v2029
      %v2036 = vpop.permute.xlu0 %2035
      %2039 = vset.pattern.permute.xlu0 0
      %2040 = vperm.xlu0 %2039, %v2030
      %v2041 = vpop.permute.xlu0 %2040
      %2044 = vset.pattern.permute.xlu0 0
      %2045 = vperm.xlu0 %2044, %v2031
      %v2046 = vpop.permute.xlu0 %2045
      %2049 = vset.pattern.permute.xlu0 0
      %2050 = vperm.xlu0 %2049, %v2032
      %v2051 = vpop.permute.xlu0 %2050
      %v2053 = vmul.f32 %v2021, %v2036
      %v2054 = vmul.f32 %v2022, %v2036
      %v2055 = vmul.f32 %v2023, %v2041
      %v2056 = vmul.f32 %v2024, %v2041
      %v2057 = vmul.f32 %v2025, %v2046
      %v2058 = vmul.f32 %v2026, %v2046
      %v2059 = vmul.f32 %v2027, %v2051
      %v2060 = vmul.f32 %v2028, %v2051
      %v2061 = vadd.f32 %v1977, %v2053
      %v2062 = vadd.f32 %v1978, %v2054
      %v2063 = vadd.f32 %v1979, %v2055
      %v2064 = vadd.f32 %v1980, %v2056
      %v2065 = vadd.f32 %v1981, %v2057
      %v2066 = vadd.f32 %v1982, %v2058
      %v2067 = vadd.f32 %v1983, %v2059
      %v2068 = vadd.f32 %v1984, %v2060
      %v2069 = vld [vmem:[%s4 + $0x20] sm:$0xff]
      %v2070 = vld [vmem:[%s4 + $0x28] sm:$0xff]
      %v2071 = vld [vmem:[%s4 + $0x30] sm:$0xff]
      %v2072 = vld [vmem:[%s4 + $0x38] sm:$0xff]
      %2074 = vset.pattern.permute.xlu0 0
      %2075 = vperm.xlu0 %2074, %v2069
      %v2076 = vpop.permute.xlu0 %2075
      %2079 = vset.pattern.permute.xlu0 0
      %2080 = vperm.xlu0 %2079, %v2070
      %v2081 = vpop.permute.xlu0 %2080
      %2084 = vset.pattern.permute.xlu0 0
      %2085 = vperm.xlu0 %2084, %v2071
      %v2086 = vpop.permute.xlu0 %2085
      %2089 = vset.pattern.permute.xlu0 0
      %2090 = vperm.xlu0 %2089, %v2072
      %v2091 = vpop.permute.xlu0 %2090
      %v2093 = vadd.f32 %v2061, %v2076
      %v2094 = vadd.f32 %v2062, %v2076
      %v2095 = vadd.f32 %v2063, %v2081
      %v2096 = vadd.f32 %v2064, %v2081
      %v2097 = vadd.f32 %v2065, %v2086
      %v2098 = vadd.f32 %v2066, %v2086
      %v2099 = vadd.f32 %v2067, %v2091
      %v2100 = vadd.f32 %v2068, %v2091
      %2101 = vst [vmem:[#allocation2 + $0x40] sm:$0xff] %v2093
      %2102 = vst [vmem:[#allocation2 + $0x48] sm:$0xff] %v2094
      %2103 = vst [vmem:[#allocation2 + $0x50] sm:$0xff] %v2095
      %2104 = vst [vmem:[#allocation2 + $0x58] sm:$0xff] %v2096
      %2105 = vst [vmem:[#allocation2 + $0x60] sm:$0xff] %v2097
      %2106 = vst [vmem:[#allocation2 + $0x68] sm:$0xff] %v2098
      %2107 = vst [vmem:[#allocation2 + $0x70] sm:$0xff] %v2099
      %2108 = vst [vmem:[#allocation2 + $0x78] sm:$0xff] %v2100
      %v2109 = vld [vmem:[%s1 + $0x20] sm:$0xf]
      %v2110 = vld [vmem:[%s1 + $0x24] sm:$0xf]
      %v2111 = vld [vmem:[%s1 + $0x28] sm:$0xf]
      %v2112 = vld [vmem:[%s1 + $0x2c] sm:$0xf]
      %v2113 = vld [vmem:[%s2 + $0x40] sm:$0xff]
      %v2114 = vld [vmem:[%s2 + $0x48] sm:$0xff]
      %v2115 = vld [vmem:[%s2 + $0x50] sm:$0xff]
      %v2116 = vld [vmem:[%s2 + $0x58] sm:$0xff]
      %2118 = vset.pattern.permute.xlu0 0
      %2119 = vperm.xlu0 %2118, %v2113
      %v2120 = vpop.permute.xlu0 %2119
      %2123 = vset.pattern.permute.xlu0 0
      %2124 = vperm.xlu0 %2123, %v2114
      %v2125 = vpop.permute.xlu0 %2124
      %2128 = vset.pattern.permute.xlu0 0
      %2129 = vperm.xlu0 %2128, %v2115
      %v2130 = vpop.permute.xlu0 %2129
      %2133 = vset.pattern.permute.xlu0 0
      %2134 = vperm.xlu0 %2133, %v2116
      %v2135 = vpop.permute.xlu0 %2134
      %v2141 = vunpack.c.l.b16 %v2109
      %v2142 = vunpack.c.l.b16 %v2110
      %v2143 = vunpack.c.l.b16 %v2111
      %v2144 = vunpack.c.l.b16 %v2112
      %v2145 = vpack.c.b16 %v2142, %v2141
      %v2146 = vpack.c.b16 %v2144, %v2143
      %v2148 = vsel %vm423, %v2145, 0
      %v2151 = vsel %vm423, %v2146, 0
      %2153 = vmatprep.subr.bf16.mxu0 0
      %2154 = vmatpush1.bf16.msra.mxu0 0
      %2155 = vmatprep.subr.bf16.mxu0 0
      %2156 = vmatpush1.bf16.msra.mxu0 0
      %2157 = vmatprep.subr.bf16.mxu0 0
      %2158 = vmatpush1.bf16.msra.mxu0 0
      %2159 = vmatprep.subr.bf16.mxu0 0
      %2160 = vmatpush1.bf16.msra.mxu0 0
      %2161 = vmatprep.subr.bf16.mxu0 0
      %2162 = vmatpush1.bf16.msra.mxu0 0
      %2163 = vmatprep.subr.bf16.mxu0 0
      %2164 = vmatpush1.bf16.msra.mxu0 0
      %2165 = vmatprep.subr.bf16.mxu0 %v418
      %2166 = vmatpush1.bf16.msra.mxu0 %v417
      %2167 = vmatprep.subr.bf16.mxu0 %v416
      %2168 = vmatpush1.bf16.msra.mxu0 %v415
      %2169 = vmatprep.subr.bf16.mxu0 0
      %2170 = vmatpush2.bf16.msra.mxu0 0
      %2171 = vmatprep.subr.bf16.mxu0 0
      %2172 = vmatpush2.bf16.msra.mxu0 0
      %2173 = vmatprep.subr.bf16.mxu0 0
      %2174 = vmatpush2.bf16.msra.mxu0 0
      %2175 = vmatprep.subr.bf16.mxu0 0
      %2176 = vmatpush2.bf16.msra.mxu0 0
      %2177 = vmatprep.subr.bf16.mxu0 0
      %2178 = vmatpush2.bf16.msra.mxu0 0
      %2179 = vmatprep.subr.bf16.mxu0 0
      %2180 = vmatpush2.bf16.msra.mxu0 0
      %2181 = vmatprep.subr.bf16.mxu0 0
      %2182 = vmatpush2.bf16.msra.mxu0 0
      %2183 = vmatprep.subr.bf16.mxu0 0
      %2184 = vmatpush2.bf16.msra.mxu0 0
      %2185 = vmatprep.mubr.bf16.mxu0 0
      %2186 = vmatmul.mubr.bf16.gmra.mxu0 %v2148
      %v2187 = vpop.f32.mrf.mxu0
      %v2188 = vadd.f32 %v2120, %v2187
      %v2189 = vpop.f32.mrf.mxu0
      %v2190 = vadd.f32 %v2120, %v2189
      %v2191 = vpop.f32.mrf.mxu0
      %v2192 = vadd.f32 %v2125, %v2191
      %v2193 = vpop.f32.mrf.mxu0
      %v2194 = vadd.f32 %v2125, %v2193
      %2195 = vmatprep.mubr.bf16.mxu0 0
      %2196 = vmatmul.mubr.bf16.gmra.mxu0 %v2151
      %v2197 = vpop.f32.mrf.mxu0
      %v2198 = vadd.f32 %v2130, %v2197
      %v2199 = vpop.f32.mrf.mxu0
      %v2200 = vadd.f32 %v2130, %v2199
      %v2201 = vpop.f32.mrf.mxu0
      %v2202 = vadd.f32 %v2135, %v2201
      %v2203 = vpop.f32.mrf.mxu0
      %v2204 = vadd.f32 %v2135, %v2203
      %2205 = vdwg.mxu0
      %2206 = vrot.lane.b32.xlu0 %v2188, 17
      %v2207 = vpop.permute.xlu0 %2206
      %2208 = vrot.lane.b32.xlu0 %v2192, 17
      %v2209 = vpop.permute.xlu0 %2208
      %2210 = vrot.lane.b32.xlu0 %v2198, 17
      %v2211 = vpop.permute.xlu0 %2210
      %2212 = vrot.lane.b32.xlu0 %v2202, 17
      %v2213 = vpop.permute.xlu0 %2212
      %2214 = vrot.lane.b32.xlu0 %v2190, 17
      %v2215 = vpop.permute.xlu0 %2214
      %2216 = vrot.lane.b32.xlu0 %v2194, 17
      %v2217 = vpop.permute.xlu0 %2216
      %2218 = vrot.lane.b32.xlu0 %v2200, 17
      %v2219 = vpop.permute.xlu0 %2218
      %2220 = vrot.lane.b32.xlu0 %v2204, 17
      %v2221 = vpop.permute.xlu0 %2220
      %v2222 = vsel %vm501, %v2207, %v2215
      %v2223 = vsel %vm501, %v2209, %v2217
      %v2224 = vsel %vm501, %v2211, %v2219
      %v2225 = vsel %vm501, %v2213, %v2221
      %v2226 = vsel %vm501, %v2215, %v2207
      %v2227 = vsel %vm501, %v2217, %v2209
      %v2228 = vsel %vm501, %v2219, %v2211
      %v2229 = vsel %vm501, %v2221, %v2213
      %v2230 = vld [vmem:[%s5] sm:$0x3]
      %v2232 = vlaneseq
      %v2233 = vshrl.u32 %v2232, 7
      %v2234 = vsub.s32 0, %v2233
      %v2235 = vrot.slane %v2230, %v2234
      %v2236 = vlaneseq
      %v2237 = vshrl.u32 %v2236, 7
      %v2238 = vsub.s32 1, %v2237
      %v2239 = vrot.slane %v2230, %v2238
      %v2242 = vmul.f32 %v2226, %v2235
      %v2243 = vmul.f32 %v2222, %v2239
      %v2244 = vmul.f32 %v2227, %v2235
      %v2245 = vmul.f32 %v2223, %v2239
      %v2246 = vmul.f32 %v2228, %v2235
      %v2247 = vmul.f32 %v2224, %v2239
      %v2248 = vmul.f32 %v2229, %v2235
      %v2249 = vmul.f32 %v2225, %v2239
      %v2250 = vld [vmem:[%s3 + $0x40] sm:$0xff]
      %v2251 = vld [vmem:[%s3 + $0x48] sm:$0xff]
      %v2252 = vld [vmem:[%s3 + $0x50] sm:$0xff]
      %v2253 = vld [vmem:[%s3 + $0x58] sm:$0xff]
      %2255 = vset.pattern.permute.xlu0 0
      %2256 = vperm.xlu0 %2255, %v2250
      %v2257 = vpop.permute.xlu0 %2256
      %2260 = vset.pattern.permute.xlu0 0
      %2261 = vperm.xlu0 %2260, %v2251
      %v2262 = vpop.permute.xlu0 %2261
      %2265 = vset.pattern.permute.xlu0 0
      %2266 = vperm.xlu0 %2265, %v2252
      %v2267 = vpop.permute.xlu0 %2266
      %2270 = vset.pattern.permute.xlu0 0
      %2271 = vperm.xlu0 %2270, %v2253
      %v2272 = vpop.permute.xlu0 %2271
      %v2274 = vmul.f32 %v2242, %v2257
      %v2275 = vmul.f32 %v2243, %v2257
      %v2276 = vmul.f32 %v2244, %v2262
      %v2277 = vmul.f32 %v2245, %v2262
      %v2278 = vmul.f32 %v2246, %v2267
      %v2279 = vmul.f32 %v2247, %v2267
      %v2280 = vmul.f32 %v2248, %v2272
      %v2281 = vmul.f32 %v2249, %v2272
      %v2282 = vadd.f32 %v2274, 0.0
      %v2283 = vadd.f32 %v2275, 0.0
      %v2284 = vadd.f32 %v2276, 0.0
      %v2285 = vadd.f32 %v2277, 0.0
      %v2286 = vadd.f32 %v2278, 0.0
      %v2287 = vadd.f32 %v2279, 0.0
      %v2288 = vadd.f32 %v2280, 0.0
      %v2289 = vadd.f32 %v2281, 0.0
      %2290 = vrot.lane.b32.xlu0 %v2188, 16
      %v2291 = vpop.permute.xlu0 %2290
      %2292 = vrot.lane.b32.xlu0 %v2192, 16
      %v2293 = vpop.permute.xlu0 %2292
      %2294 = vrot.lane.b32.xlu0 %v2198, 16
      %v2295 = vpop.permute.xlu0 %2294
      %2296 = vrot.lane.b32.xlu0 %v2202, 16
      %v2297 = vpop.permute.xlu0 %2296
      %2298 = vrot.lane.b32.xlu0 %v2190, 16
      %v2299 = vpop.permute.xlu0 %2298
      %2300 = vrot.lane.b32.xlu0 %v2194, 16
      %v2301 = vpop.permute.xlu0 %2300
      %2302 = vrot.lane.b32.xlu0 %v2200, 16
      %v2303 = vpop.permute.xlu0 %2302
      %2304 = vrot.lane.b32.xlu0 %v2204, 16
      %v2305 = vpop.permute.xlu0 %2304
      %v2306 = vsel %vm586, %v2291, %v2299
      %v2307 = vsel %vm586, %v2293, %v2301
      %v2308 = vsel %vm586, %v2295, %v2303
      %v2309 = vsel %vm586, %v2297, %v2305
      %v2310 = vsel %vm586, %v2299, %v2291
      %v2311 = vsel %vm586, %v2301, %v2293
      %v2312 = vsel %vm586, %v2303, %v2295
      %v2313 = vsel %vm586, %v2305, %v2297
      %v2314 = vld [vmem:[%s595] sm:$0x3]
      %v2316 = vlaneseq
      %v2317 = vshrl.u32 %v2316, 7
      %v2318 = vsub.s32 0, %v2317
      %v2319 = vrot.slane %v2314, %v2318
      %v2320 = vlaneseq
      %v2321 = vshrl.u32 %v2320, 7
      %v2322 = vsub.s32 1, %v2321
      %v2323 = vrot.slane %v2314, %v2322
      %v2326 = vmul.f32 %v2310, %v2319
      %v2327 = vmul.f32 %v2306, %v2323
      %v2328 = vmul.f32 %v2311, %v2319
      %v2329 = vmul.f32 %v2307, %v2323
      %v2330 = vmul.f32 %v2312, %v2319
      %v2331 = vmul.f32 %v2308, %v2323
      %v2332 = vmul.f32 %v2313, %v2319
      %v2333 = vmul.f32 %v2309, %v2323
      %v2334 = vld [vmem:[%s616 + $0x40] sm:$0xff]
      %v2335 = vld [vmem:[%s616 + $0x48] sm:$0xff]
      %v2336 = vld [vmem:[%s616 + $0x50] sm:$0xff]
      %v2337 = vld [vmem:[%s616 + $0x58] sm:$0xff]
      %2339 = vset.pattern.permute.xlu0 0
      %2340 = vperm.xlu0 %2339, %v2334
      %v2341 = vpop.permute.xlu0 %2340
      %2344 = vset.pattern.permute.xlu0 0
      %2345 = vperm.xlu0 %2344, %v2335
      %v2346 = vpop.permute.xlu0 %2345
      %2349 = vset.pattern.permute.xlu0 0
      %2350 = vperm.xlu0 %2349, %v2336
      %v2351 = vpop.permute.xlu0 %2350
      %2354 = vset.pattern.permute.xlu0 0
      %2355 = vperm.xlu0 %2354, %v2337
      %v2356 = vpop.permute.xlu0 %2355
      %v2358 = vmul.f32 %v2326, %v2341
      %v2359 = vmul.f32 %v2327, %v2341
      %v2360 = vmul.f32 %v2328, %v2346
      %v2361 = vmul.f32 %v2329, %v2346
      %v2362 = vmul.f32 %v2330, %v2351
      %v2363 = vmul.f32 %v2331, %v2351
      %v2364 = vmul.f32 %v2332, %v2356
      %v2365 = vmul.f32 %v2333, %v2356
      %v2366 = vadd.f32 %v2282, %v2358
      %v2367 = vadd.f32 %v2283, %v2359
      %v2368 = vadd.f32 %v2284, %v2360
      %v2369 = vadd.f32 %v2285, %v2361
      %v2370 = vadd.f32 %v2286, %v2362
      %v2371 = vadd.f32 %v2287, %v2363
      %v2372 = vadd.f32 %v2288, %v2364
      %v2373 = vadd.f32 %v2289, %v2365
      %2374 = vrot.lane.b32.xlu0 %v2188, 15
      %v2375 = vpop.permute.xlu0 %2374
      %2376 = vrot.lane.b32.xlu0 %v2192, 15
      %v2377 = vpop.permute.xlu0 %2376
      %2378 = vrot.lane.b32.xlu0 %v2198, 15
      %v2379 = vpop.permute.xlu0 %2378
      %2380 = vrot.lane.b32.xlu0 %v2202, 15
      %v2381 = vpop.permute.xlu0 %2380
      %2382 = vrot.lane.b32.xlu0 %v2190, 15
      %v2383 = vpop.permute.xlu0 %2382
      %2384 = vrot.lane.b32.xlu0 %v2194, 15
      %v2385 = vpop.permute.xlu0 %2384
      %2386 = vrot.lane.b32.xlu0 %v2200, 15
      %v2387 = vpop.permute.xlu0 %2386
      %2388 = vrot.lane.b32.xlu0 %v2204, 15
      %v2389 = vpop.permute.xlu0 %2388
      %v2390 = vsel %vm673, %v2375, %v2383
      %v2391 = vsel %vm673, %v2377, %v2385
      %v2392 = vsel %vm673, %v2379, %v2387
      %v2393 = vsel %vm673, %v2381, %v2389
      %v2394 = vsel %vm673, %v2383, %v2375
      %v2395 = vsel %vm673, %v2385, %v2377
      %v2396 = vsel %vm673, %v2387, %v2379
      %v2397 = vsel %vm673, %v2389, %v2381
      %v2398 = vld [vmem:[%s682] sm:$0x3]
      %v2400 = vlaneseq
      %v2401 = vshrl.u32 %v2400, 7
      %v2402 = vsub.s32 0, %v2401
      %v2403 = vrot.slane %v2398, %v2402
      %v2404 = vlaneseq
      %v2405 = vshrl.u32 %v2404, 7
      %v2406 = vsub.s32 1, %v2405
      %v2407 = vrot.slane %v2398, %v2406
      %v2410 = vmul.f32 %v2394, %v2403
      %v2411 = vmul.f32 %v2390, %v2407
      %v2412 = vmul.f32 %v2395, %v2403
      %v2413 = vmul.f32 %v2391, %v2407
      %v2414 = vmul.f32 %v2396, %v2403
      %v2415 = vmul.f32 %v2392, %v2407
      %v2416 = vmul.f32 %v2397, %v2403
      %v2417 = vmul.f32 %v2393, %v2407
      %v2418 = vld [vmem:[%s703 + $0x40] sm:$0xff]
      %v2419 = vld [vmem:[%s703 + $0x48] sm:$0xff]
      %v2420 = vld [vmem:[%s703 + $0x50] sm:$0xff]
      %v2421 = vld [vmem:[%s703 + $0x58] sm:$0xff]
      %2423 = vset.pattern.permute.xlu0 0
      %2424 = vperm.xlu0 %2423, %v2418
      %v2425 = vpop.permute.xlu0 %2424
      %2428 = vset.pattern.permute.xlu0 0
      %2429 = vperm.xlu0 %2428, %v2419
      %v2430 = vpop.permute.xlu0 %2429
      %2433 = vset.pattern.permute.xlu0 0
      %2434 = vperm.xlu0 %2433, %v2420
      %v2435 = vpop.permute.xlu0 %2434
      %2438 = vset.pattern.permute.xlu0 0
      %2439 = vperm.xlu0 %2438, %v2421
      %v2440 = vpop.permute.xlu0 %2439
      %v2442 = vmul.f32 %v2410, %v2425
      %v2443 = vmul.f32 %v2411, %v2425
      %v2444 = vmul.f32 %v2412, %v2430
      %v2445 = vmul.f32 %v2413, %v2430
      %v2446 = vmul.f32 %v2414, %v2435
      %v2447 = vmul.f32 %v2415, %v2435
      %v2448 = vmul.f32 %v2416, %v2440
      %v2449 = vmul.f32 %v2417, %v2440
      %v2450 = vadd.f32 %v2366, %v2442
      %v2451 = vadd.f32 %v2367, %v2443
      %v2452 = vadd.f32 %v2368, %v2444
      %v2453 = vadd.f32 %v2369, %v2445
      %v2454 = vadd.f32 %v2370, %v2446
      %v2455 = vadd.f32 %v2371, %v2447
      %v2456 = vadd.f32 %v2372, %v2448
      %v2457 = vadd.f32 %v2373, %v2449
      %2458 = vrot.lane.b32.xlu0 %v2188, 1
      %v2459 = vpop.permute.xlu0 %2458
      %2460 = vrot.lane.b32.xlu0 %v2192, 1
      %v2461 = vpop.permute.xlu0 %2460
      %2462 = vrot.lane.b32.xlu0 %v2198, 1
      %v2463 = vpop.permute.xlu0 %2462
      %2464 = vrot.lane.b32.xlu0 %v2202, 1
      %v2465 = vpop.permute.xlu0 %2464
      %2466 = vrot.lane.b32.xlu0 %v2190, 1
      %v2467 = vpop.permute.xlu0 %2466
      %2468 = vrot.lane.b32.xlu0 %v2194, 1
      %v2469 = vpop.permute.xlu0 %2468
      %2470 = vrot.lane.b32.xlu0 %v2200, 1
      %v2471 = vpop.permute.xlu0 %2470
      %2472 = vrot.lane.b32.xlu0 %v2204, 1
      %v2473 = vpop.permute.xlu0 %2472
      %v2474 = vsel %vm760, %v2459, %v2467
      %v2475 = vsel %vm760, %v2461, %v2469
      %v2476 = vsel %vm760, %v2463, %v2471
      %v2477 = vsel %vm760, %v2465, %v2473
      %v2478 = vsel %vm760, %v2467, %v2459
      %v2479 = vsel %vm760, %v2469, %v2461
      %v2480 = vsel %vm760, %v2471, %v2463
      %v2481 = vsel %vm760, %v2473, %v2465
      %v2482 = vld [vmem:[%s769] sm:$0x3]
      %v2484 = vlaneseq
      %v2485 = vshrl.u32 %v2484, 7
      %v2486 = vsub.s32 0, %v2485
      %v2487 = vrot.slane %v2482, %v2486
      %v2488 = vlaneseq
      %v2489 = vshrl.u32 %v2488, 7
      %v2490 = vsub.s32 1, %v2489
      %v2491 = vrot.slane %v2482, %v2490
      %v2494 = vmul.f32 %v2478, %v2487
      %v2495 = vmul.f32 %v2474, %v2491
      %v2496 = vmul.f32 %v2479, %v2487
      %v2497 = vmul.f32 %v2475, %v2491
      %v2498 = vmul.f32 %v2480, %v2487
      %v2499 = vmul.f32 %v2476, %v2491
      %v2500 = vmul.f32 %v2481, %v2487
      %v2501 = vmul.f32 %v2477, %v2491
      %v2502 = vld [vmem:[%s790 + $0x40] sm:$0xff]
      %v2503 = vld [vmem:[%s790 + $0x48] sm:$0xff]
      %v2504 = vld [vmem:[%s790 + $0x50] sm:$0xff]
      %v2505 = vld [vmem:[%s790 + $0x58] sm:$0xff]
      %2507 = vset.pattern.permute.xlu0 0
      %2508 = vperm.xlu0 %2507, %v2502
      %v2509 = vpop.permute.xlu0 %2508
      %2512 = vset.pattern.permute.xlu0 0
      %2513 = vperm.xlu0 %2512, %v2503
      %v2514 = vpop.permute.xlu0 %2513
      %2517 = vset.pattern.permute.xlu0 0
      %2518 = vperm.xlu0 %2517, %v2504
      %v2519 = vpop.permute.xlu0 %2518
      %2522 = vset.pattern.permute.xlu0 0
      %2523 = vperm.xlu0 %2522, %v2505
      %v2524 = vpop.permute.xlu0 %2523
      %v2526 = vmul.f32 %v2494, %v2509
      %v2527 = vmul.f32 %v2495, %v2509
      %v2528 = vmul.f32 %v2496, %v2514
      %v2529 = vmul.f32 %v2497, %v2514
      %v2530 = vmul.f32 %v2498, %v2519
      %v2531 = vmul.f32 %v2499, %v2519
      %v2532 = vmul.f32 %v2500, %v2524
      %v2533 = vmul.f32 %v2501, %v2524
      %v2534 = vadd.f32 %v2450, %v2526
      %v2535 = vadd.f32 %v2451, %v2527
      %v2536 = vadd.f32 %v2452, %v2528
      %v2537 = vadd.f32 %v2453, %v2529
      %v2538 = vadd.f32 %v2454, %v2530
      %v2539 = vadd.f32 %v2455, %v2531
      %v2540 = vadd.f32 %v2456, %v2532
      %v2541 = vadd.f32 %v2457, %v2533
      %v2542 = vld [vmem:[%s831 + $0x40] sm:$0xff]
      %v2543 = vld [vmem:[%s831 + $0x48] sm:$0xff]
      %v2544 = vld [vmem:[%s831 + $0x50] sm:$0xff]
      %v2545 = vld [vmem:[%s831 + $0x58] sm:$0xff]
      %2547 = vset.pattern.permute.xlu0 0
      %2548 = vperm.xlu0 %2547, %v2542
      %v2549 = vpop.permute.xlu0 %2548
      %2552 = vset.pattern.permute.xlu0 0
      %2553 = vperm.xlu0 %2552, %v2543
      %v2554 = vpop.permute.xlu0 %2553
      %2557 = vset.pattern.permute.xlu0 0
      %2558 = vperm.xlu0 %2557, %v2544
      %v2559 = vpop.permute.xlu0 %2558
      %2562 = vset.pattern.permute.xlu0 0
      %2563 = vperm.xlu0 %2562, %v2545
      %v2564 = vpop.permute.xlu0 %2563
      %v2566 = vmul.f32 %v2188, %v2549
      %v2567 = vmul.f32 %v2190, %v2549
      %v2568 = vmul.f32 %v2192, %v2554
      %v2569 = vmul.f32 %v2194, %v2554
      %v2570 = vmul.f32 %v2198, %v2559
      %v2571 = vmul.f32 %v2200, %v2559
      %v2572 = vmul.f32 %v2202, %v2564
      %v2573 = vmul.f32 %v2204, %v2564
      %v2574 = vadd.f32 %v2534, %v2566
      %v2575 = vadd.f32 %v2535, %v2567
      %v2576 = vadd.f32 %v2536, %v2568
      %v2577 = vadd.f32 %v2537, %v2569
      %v2578 = vadd.f32 %v2538, %v2570
      %v2579 = vadd.f32 %v2539, %v2571
      %v2580 = vadd.f32 %v2540, %v2572
      %v2581 = vadd.f32 %v2541, %v2573
      %2582 = vrot.lane.b32.xlu0 %v2188, 127
      %v2583 = vpop.permute.xlu0 %2582
      %2584 = vrot.lane.b32.xlu0 %v2192, 127
      %v2585 = vpop.permute.xlu0 %2584
      %2586 = vrot.lane.b32.xlu0 %v2198, 127
      %v2587 = vpop.permute.xlu0 %2586
      %2588 = vrot.lane.b32.xlu0 %v2202, 127
      %v2589 = vpop.permute.xlu0 %2588
      %2590 = vrot.lane.b32.xlu0 %v2190, 127
      %v2591 = vpop.permute.xlu0 %2590
      %2592 = vrot.lane.b32.xlu0 %v2194, 127
      %v2593 = vpop.permute.xlu0 %2592
      %2594 = vrot.lane.b32.xlu0 %v2200, 127
      %v2595 = vpop.permute.xlu0 %2594
      %2596 = vrot.lane.b32.xlu0 %v2204, 127
      %v2597 = vpop.permute.xlu0 %2596
      %v2598 = vsel %vm888, %v2583, %v2591
      %v2599 = vsel %vm888, %v2585, %v2593
      %v2600 = vsel %vm888, %v2587, %v2595
      %v2601 = vsel %vm888, %v2589, %v2597
      %v2602 = vsel %vm888, %v2591, %v2583
      %v2603 = vsel %vm888, %v2593, %v2585
      %v2604 = vsel %vm888, %v2595, %v2587
      %v2605 = vsel %vm888, %v2597, %v2589
      %v2606 = vld [vmem:[%s897] sm:$0x3]
      %v2608 = vlaneseq
      %v2609 = vshrl.u32 %v2608, 7
      %v2610 = vsub.s32 0, %v2609
      %v2611 = vrot.slane %v2606, %v2610
      %v2612 = vlaneseq
      %v2613 = vshrl.u32 %v2612, 7
      %v2614 = vsub.s32 1, %v2613
      %v2615 = vrot.slane %v2606, %v2614
      %v2618 = vmul.f32 %v2598, %v2611
      %v2619 = vmul.f32 %v2602, %v2615
      %v2620 = vmul.f32 %v2599, %v2611
      %v2621 = vmul.f32 %v2603, %v2615
      %v2622 = vmul.f32 %v2600, %v2611
      %v2623 = vmul.f32 %v2604, %v2615
      %v2624 = vmul.f32 %v2601, %v2611
      %v2625 = vmul.f32 %v2605, %v2615
      %v2626 = vld [vmem:[%s918 + $0x40] sm:$0xff]
      %v2627 = vld [vmem:[%s918 + $0x48] sm:$0xff]
      %v2628 = vld [vmem:[%s918 + $0x50] sm:$0xff]
      %v2629 = vld [vmem:[%s918 + $0x58] sm:$0xff]
      %2631 = vset.pattern.permute.xlu0 0
      %2632 = vperm.xlu0 %2631, %v2626
      %v2633 = vpop.permute.xlu0 %2632
      %2636 = vset.pattern.permute.xlu0 0
      %2637 = vperm.xlu0 %2636, %v2627
      %v2638 = vpop.permute.xlu0 %2637
      %2641 = vset.pattern.permute.xlu0 0
      %2642 = vperm.xlu0 %2641, %v2628
      %v2643 = vpop.permute.xlu0 %2642
      %2646 = vset.pattern.permute.xlu0 0
      %2647 = vperm.xlu0 %2646, %v2629
      %v2648 = vpop.permute.xlu0 %2647
      %v2650 = vmul.f32 %v2618, %v2633
      %v2651 = vmul.f32 %v2619, %v2633
      %v2652 = vmul.f32 %v2620, %v2638
      %v2653 = vmul.f32 %v2621, %v2638
      %v2654 = vmul.f32 %v2622, %v2643
      %v2655 = vmul.f32 %v2623, %v2643
      %v2656 = vmul.f32 %v2624, %v2648
      %v2657 = vmul.f32 %v2625, %v2648
      %v2658 = vadd.f32 %v2574, %v2650
      %v2659 = vadd.f32 %v2575, %v2651
      %v2660 = vadd.f32 %v2576, %v2652
      %v2661 = vadd.f32 %v2577, %v2653
      %v2662 = vadd.f32 %v2578, %v2654
      %v2663 = vadd.f32 %v2579, %v2655
      %v2664 = vadd.f32 %v2580, %v2656
      %v2665 = vadd.f32 %v2581, %v2657
      %2666 = vrot.lane.b32.xlu0 %v2188, 113
      %v2667 = vpop.permute.xlu0 %2666
      %2668 = vrot.lane.b32.xlu0 %v2192, 113
      %v2669 = vpop.permute.xlu0 %2668
      %2670 = vrot.lane.b32.xlu0 %v2198, 113
      %v2671 = vpop.permute.xlu0 %2670
      %2672 = vrot.lane.b32.xlu0 %v2202, 113
      %v2673 = vpop.permute.xlu0 %2672
      %2674 = vrot.lane.b32.xlu0 %v2190, 113
      %v2675 = vpop.permute.xlu0 %2674
      %2676 = vrot.lane.b32.xlu0 %v2194, 113
      %v2677 = vpop.permute.xlu0 %2676
      %2678 = vrot.lane.b32.xlu0 %v2200, 113
      %v2679 = vpop.permute.xlu0 %2678
      %2680 = vrot.lane.b32.xlu0 %v2204, 113
      %v2681 = vpop.permute.xlu0 %2680
      %v2682 = vsel %vm975, %v2667, %v2675
      %v2683 = vsel %vm975, %v2669, %v2677
      %v2684 = vsel %vm975, %v2671, %v2679
      %v2685 = vsel %vm975, %v2673, %v2681
      %v2686 = vsel %vm975, %v2675, %v2667
      %v2687 = vsel %vm975, %v2677, %v2669
      %v2688 = vsel %vm975, %v2679, %v2671
      %v2689 = vsel %vm975, %v2681, %v2673
      %v2690 = vld [vmem:[%s984] sm:$0x3]
      %v2692 = vlaneseq
      %v2693 = vshrl.u32 %v2692, 7
      %v2694 = vsub.s32 0, %v2693
      %v2695 = vrot.slane %v2690, %v2694
      %v2696 = vlaneseq
      %v2697 = vshrl.u32 %v2696, 7
      %v2698 = vsub.s32 1, %v2697
      %v2699 = vrot.slane %v2690, %v2698
      %v2702 = vmul.f32 %v2682, %v2695
      %v2703 = vmul.f32 %v2686, %v2699
      %v2704 = vmul.f32 %v2683, %v2695
      %v2705 = vmul.f32 %v2687, %v2699
      %v2706 = vmul.f32 %v2684, %v2695
      %v2707 = vmul.f32 %v2688, %v2699
      %v2708 = vmul.f32 %v2685, %v2695
      %v2709 = vmul.f32 %v2689, %v2699
      %v2710 = vld [vmem:[%s1005 + $0x40] sm:$0xff]
      %v2711 = vld [vmem:[%s1005 + $0x48] sm:$0xff]
      %v2712 = vld [vmem:[%s1005 + $0x50] sm:$0xff]
      %v2713 = vld [vmem:[%s1005 + $0x58] sm:$0xff]
      %2715 = vset.pattern.permute.xlu0 0
      %2716 = vperm.xlu0 %2715, %v2710
      %v2717 = vpop.permute.xlu0 %2716
      %2720 = vset.pattern.permute.xlu0 0
      %2721 = vperm.xlu0 %2720, %v2711
      %v2722 = vpop.permute.xlu0 %2721
      %2725 = vset.pattern.permute.xlu0 0
      %2726 = vperm.xlu0 %2725, %v2712
      %v2727 = vpop.permute.xlu0 %2726
      %2730 = vset.pattern.permute.xlu0 0
      %2731 = vperm.xlu0 %2730, %v2713
      %v2732 = vpop.permute.xlu0 %2731
      %v2734 = vmul.f32 %v2702, %v2717
      %v2735 = vmul.f32 %v2703, %v2717
      %v2736 = vmul.f32 %v2704, %v2722
      %v2737 = vmul.f32 %v2705, %v2722
      %v2738 = vmul.f32 %v2706, %v2727
      %v2739 = vmul.f32 %v2707, %v2727
      %v2740 = vmul.f32 %v2708, %v2732
      %v2741 = vmul.f32 %v2709, %v2732
      %v2742 = vadd.f32 %v2658, %v2734
      %v2743 = vadd.f32 %v2659, %v2735
      %v2744 = vadd.f32 %v2660, %v2736
      %v2745 = vadd.f32 %v2661, %v2737
      %v2746 = vadd.f32 %v2662, %v2738
      %v2747 = vadd.f32 %v2663, %v2739
      %v2748 = vadd.f32 %v2664, %v2740
      %v2749 = vadd.f32 %v2665, %v2741
      %2750 = vrot.lane.b32.xlu0 %v2188, 112
      %v2751 = vpop.permute.xlu0 %2750
      %2752 = vrot.lane.b32.xlu0 %v2192, 112
      %v2753 = vpop.permute.xlu0 %2752
      %2754 = vrot.lane.b32.xlu0 %v2198, 112
      %v2755 = vpop.permute.xlu0 %2754
      %2756 = vrot.lane.b32.xlu0 %v2202, 112
      %v2757 = vpop.permute.xlu0 %2756
      %2758 = vrot.lane.b32.xlu0 %v2190, 112
      %v2759 = vpop.permute.xlu0 %2758
      %2760 = vrot.lane.b32.xlu0 %v2194, 112
      %v2761 = vpop.permute.xlu0 %2760
      %2762 = vrot.lane.b32.xlu0 %v2200, 112
      %v2763 = vpop.permute.xlu0 %2762
      %2764 = vrot.lane.b32.xlu0 %v2204, 112
      %v2765 = vpop.permute.xlu0 %2764
      %v2766 = vsel %vm1062, %v2751, %v2759
      %v2767 = vsel %vm1062, %v2753, %v2761
      %v2768 = vsel %vm1062, %v2755, %v2763
      %v2769 = vsel %vm1062, %v2757, %v2765
      %v2770 = vsel %vm1062, %v2759, %v2751
      %v2771 = vsel %vm1062, %v2761, %v2753
      %v2772 = vsel %vm1062, %v2763, %v2755
      %v2773 = vsel %vm1062, %v2765, %v2757
      %v2774 = vld [vmem:[%s1071] sm:$0x3]
      %v2776 = vlaneseq
      %v2777 = vshrl.u32 %v2776, 7
      %v2778 = vsub.s32 0, %v2777
      %v2779 = vrot.slane %v2774, %v2778
      %v2780 = vlaneseq
      %v2781 = vshrl.u32 %v2780, 7
      %v2782 = vsub.s32 1, %v2781
      %v2783 = vrot.slane %v2774, %v2782
      %v2786 = vmul.f32 %v2766, %v2779
      %v2787 = vmul.f32 %v2770, %v2783
      %v2788 = vmul.f32 %v2767, %v2779
      %v2789 = vmul.f32 %v2771, %v2783
      %v2790 = vmul.f32 %v2768, %v2779
      %v2791 = vmul.f32 %v2772, %v2783
      %v2792 = vmul.f32 %v2769, %v2779
      %v2793 = vmul.f32 %v2773, %v2783
      %v2794 = vld [vmem:[%s1092 + $0x40] sm:$0xff]
      %v2795 = vld [vmem:[%s1092 + $0x48] sm:$0xff]
      %v2796 = vld [vmem:[%s1092 + $0x50] sm:$0xff]
      %v2797 = vld [vmem:[%s1092 + $0x58] sm:$0xff]
      %2799 = vset.pattern.permute.xlu0 0
      %2800 = vperm.xlu0 %2799, %v2794
      %v2801 = vpop.permute.xlu0 %2800
      %2804 = vset.pattern.permute.xlu0 0
      %2805 = vperm.xlu0 %2804, %v2795
      %v2806 = vpop.permute.xlu0 %2805
      %2809 = vset.pattern.permute.xlu0 0
      %2810 = vperm.xlu0 %2809, %v2796
      %v2811 = vpop.permute.xlu0 %2810
      %2814 = vset.pattern.permute.xlu0 0
      %2815 = vperm.xlu0 %2814, %v2797
      %v2816 = vpop.permute.xlu0 %2815
      %v2818 = vmul.f32 %v2786, %v2801
      %v2819 = vmul.f32 %v2787, %v2801
      %v2820 = vmul.f32 %v2788, %v2806
      %v2821 = vmul.f32 %v2789, %v2806
      %v2822 = vmul.f32 %v2790, %v2811
      %v2823 = vmul.f32 %v2791, %v2811
      %v2824 = vmul.f32 %v2792, %v2816
      %v2825 = vmul.f32 %v2793, %v2816
      %v2826 = vadd.f32 %v2742, %v2818
      %v2827 = vadd.f32 %v2743, %v2819
      %v2828 = vadd.f32 %v2744, %v2820
      %v2829 = vadd.f32 %v2745, %v2821
      %v2830 = vadd.f32 %v2746, %v2822
      %v2831 = vadd.f32 %v2747, %v2823
      %v2832 = vadd.f32 %v2748, %v2824
      %v2833 = vadd.f32 %v2749, %v2825
      %2834 = vrot.lane.b32.xlu0 %v2188, 111
      %v2835 = vpop.permute.xlu0 %2834
      %2836 = vrot.lane.b32.xlu0 %v2192, 111
      %v2837 = vpop.permute.xlu0 %2836
      %2838 = vrot.lane.b32.xlu0 %v2198, 111
      %v2839 = vpop.permute.xlu0 %2838
      %2840 = vrot.lane.b32.xlu0 %v2202, 111
      %v2841 = vpop.permute.xlu0 %2840
      %2842 = vrot.lane.b32.xlu0 %v2190, 111
      %v2843 = vpop.permute.xlu0 %2842
      %2844 = vrot.lane.b32.xlu0 %v2194, 111
      %v2845 = vpop.permute.xlu0 %2844
      %2846 = vrot.lane.b32.xlu0 %v2200, 111
      %v2847 = vpop.permute.xlu0 %2846
      %2848 = vrot.lane.b32.xlu0 %v2204, 111
      %v2849 = vpop.permute.xlu0 %2848
      %v2850 = vsel %vm1149, %v2835, %v2843
      %v2851 = vsel %vm1149, %v2837, %v2845
      %v2852 = vsel %vm1149, %v2839, %v2847
      %v2853 = vsel %vm1149, %v2841, %v2849
      %v2854 = vsel %vm1149, %v2843, %v2835
      %v2855 = vsel %vm1149, %v2845, %v2837
      %v2856 = vsel %vm1149, %v2847, %v2839
      %v2857 = vsel %vm1149, %v2849, %v2841
      %v2858 = vld [vmem:[%s1158] sm:$0x3]
      %v2860 = vlaneseq
      %v2861 = vshrl.u32 %v2860, 7
      %v2862 = vsub.s32 0, %v2861
      %v2863 = vrot.slane %v2858, %v2862
      %v2864 = vlaneseq
      %v2865 = vshrl.u32 %v2864, 7
      %v2866 = vsub.s32 1, %v2865
      %v2867 = vrot.slane %v2858, %v2866
      %v2870 = vmul.f32 %v2850, %v2863
      %v2871 = vmul.f32 %v2854, %v2867
      %v2872 = vmul.f32 %v2851, %v2863
      %v2873 = vmul.f32 %v2855, %v2867
      %v2874 = vmul.f32 %v2852, %v2863
      %v2875 = vmul.f32 %v2856, %v2867
      %v2876 = vmul.f32 %v2853, %v2863
      %v2877 = vmul.f32 %v2857, %v2867
      %v2878 = vld [vmem:[%s1179 + $0x40] sm:$0xff]
      %v2879 = vld [vmem:[%s1179 + $0x48] sm:$0xff]
      %v2880 = vld [vmem:[%s1179 + $0x50] sm:$0xff]
      %v2881 = vld [vmem:[%s1179 + $0x58] sm:$0xff]
      %2883 = vset.pattern.permute.xlu0 0
      %2884 = vperm.xlu0 %2883, %v2878
      %v2885 = vpop.permute.xlu0 %2884
      %2888 = vset.pattern.permute.xlu0 0
      %2889 = vperm.xlu0 %2888, %v2879
      %v2890 = vpop.permute.xlu0 %2889
      %2893 = vset.pattern.permute.xlu0 0
      %2894 = vperm.xlu0 %2893, %v2880
      %v2895 = vpop.permute.xlu0 %2894
      %2898 = vset.pattern.permute.xlu0 0
      %2899 = vperm.xlu0 %2898, %v2881
      %v2900 = vpop.permute.xlu0 %2899
      %v2902 = vmul.f32 %v2870, %v2885
      %v2903 = vmul.f32 %v2871, %v2885
      %v2904 = vmul.f32 %v2872, %v2890
      %v2905 = vmul.f32 %v2873, %v2890
      %v2906 = vmul.f32 %v2874, %v2895
      %v2907 = vmul.f32 %v2875, %v2895
      %v2908 = vmul.f32 %v2876, %v2900
      %v2909 = vmul.f32 %v2877, %v2900
      %v2910 = vadd.f32 %v2826, %v2902
      %v2911 = vadd.f32 %v2827, %v2903
      %v2912 = vadd.f32 %v2828, %v2904
      %v2913 = vadd.f32 %v2829, %v2905
      %v2914 = vadd.f32 %v2830, %v2906
      %v2915 = vadd.f32 %v2831, %v2907
      %v2916 = vadd.f32 %v2832, %v2908
      %v2917 = vadd.f32 %v2833, %v2909
      %v2918 = vld [vmem:[%s4 + $0x40] sm:$0xff]
      %v2919 = vld [vmem:[%s4 + $0x48] sm:$0xff]
      %v2920 = vld [vmem:[%s4 + $0x50] sm:$0xff]
      %v2921 = vld [vmem:[%s4 + $0x58] sm:$0xff]
      %2923 = vset.pattern.permute.xlu0 0
      %2924 = vperm.xlu0 %2923, %v2918
      %v2925 = vpop.permute.xlu0 %2924
      %2928 = vset.pattern.permute.xlu0 0
      %2929 = vperm.xlu0 %2928, %v2919
      %v2930 = vpop.permute.xlu0 %2929
      %2933 = vset.pattern.permute.xlu0 0
      %2934 = vperm.xlu0 %2933, %v2920
      %v2935 = vpop.permute.xlu0 %2934
      %2938 = vset.pattern.permute.xlu0 0
      %2939 = vperm.xlu0 %2938, %v2921
      %v2940 = vpop.permute.xlu0 %2939
      %v2942 = vadd.f32 %v2910, %v2925
      %v2943 = vadd.f32 %v2911, %v2925
      %v2944 = vadd.f32 %v2912, %v2930
      %v2945 = vadd.f32 %v2913, %v2930
      %v2946 = vadd.f32 %v2914, %v2935
      %v2947 = vadd.f32 %v2915, %v2935
      %v2948 = vadd.f32 %v2916, %v2940
      %v2949 = vadd.f32 %v2917, %v2940
      %2950 = vst [vmem:[#allocation2 + $0x80] sm:$0xff] %v2942
      %2951 = vst [vmem:[#allocation2 + $0x88] sm:$0xff] %v2943
      %2952 = vst [vmem:[#allocation2 + $0x90] sm:$0xff] %v2944
      %2953 = vst [vmem:[#allocation2 + $0x98] sm:$0xff] %v2945
      %2954 = vst [vmem:[#allocation2 + $0xa0] sm:$0xff] %v2946
      %2955 = vst [vmem:[#allocation2 + $0xa8] sm:$0xff] %v2947
      %2956 = vst [vmem:[#allocation2 + $0xb0] sm:$0xff] %v2948
      %2957 = vst [vmem:[#allocation2 + $0xb8] sm:$0xff] %v2949
      %v2958 = vld [vmem:[#allocation2] sm:$0xff]
      %v2959 = vld [vmem:[#allocation2 + $0x8] sm:$0xff]
      %v2960 = vld [vmem:[#allocation2 + $0x10] sm:$0xff]
      %v2961 = vld [vmem:[#allocation2 + $0x18] sm:$0xff]
      %v2962 = vld [vmem:[#allocation2 + $0x20] sm:$0xff]
      %v2963 = vld [vmem:[#allocation2 + $0x28] sm:$0xff]
      %v2964 = vld [vmem:[#allocation2 + $0x30] sm:$0xff]
      %v2965 = vld [vmem:[#allocation2 + $0x38] sm:$0xff]
      %v2966 = vld [vmem:[#allocation2 + $0x40] sm:$0xff]
      %v2967 = vld [vmem:[#allocation2 + $0x48] sm:$0xff]
      %v2968 = vld [vmem:[#allocation2 + $0x50] sm:$0xff]
      %v2969 = vld [vmem:[#allocation2 + $0x58] sm:$0xff]
      %v2970 = vld [vmem:[#allocation2 + $0x60] sm:$0xff]
      %v2971 = vld [vmem:[#allocation2 + $0x68] sm:$0xff]
      %v2972 = vld [vmem:[#allocation2 + $0x70] sm:$0xff]
      %v2973 = vld [vmem:[#allocation2 + $0x78] sm:$0xff]
      %v2974 = vld [vmem:[#allocation2 + $0x80] sm:$0xff]
      %v2975 = vld [vmem:[#allocation2 + $0x88] sm:$0xff]
      %v2976 = vld [vmem:[#allocation2 + $0x90] sm:$0xff]
      %v2977 = vld [vmem:[#allocation2 + $0x98] sm:$0xff]
      %v2978 = vld [vmem:[#allocation2 + $0xa0] sm:$0xff]
      %v2979 = vld [vmem:[#allocation2 + $0xa8] sm:$0xff]
      %v2980 = vld [vmem:[#allocation2 + $0xb0] sm:$0xff]
      %v2981 = vld [vmem:[#allocation2 + $0xb8] sm:$0xff]
      %v2982 = vmul.f32 %v2958, %v2958
      %v2983 = vmul.f32 %v2959, %v2959
      %v2984 = vmul.f32 %v2960, %v2960
      %v2985 = vmul.f32 %v2961, %v2961
      %v2986 = vmul.f32 %v2962, %v2962
      %v2987 = vmul.f32 %v2963, %v2963
      %v2988 = vmul.f32 %v2964, %v2964
      %v2989 = vmul.f32 %v2965, %v2965
      %v2990 = vadd.f32 %v2982, %v2983
      %2991 = vadd.xlane.f32.xlu0 %v2990
      %v2992 = vpop.xlane.xlu0 %2991
      %v2993 = vadd.f32 %v2984, %v2985
      %2994 = vadd.xlane.f32.xlu0 %v2993
      %v2995 = vpop.xlane.xlu0 %2994
      %v2996 = vadd.f32 %v2986, %v2987
      %2997 = vadd.xlane.f32.xlu0 %v2996
      %v2998 = vpop.xlane.xlu0 %2997
      %v2999 = vadd.f32 %v2988, %v2989
      %3000 = vadd.xlane.f32.xlu0 %v2999
      %v3001 = vpop.xlane.xlu0 %3000
      %v3002 = vmax.f32 %v2992, 1e-24
      %v3003 = vmax.f32 %v2995, 1e-24
      %v3004 = vmax.f32 %v2998, 1e-24
      %v3005 = vmax.f32 %v3001, 1e-24
      %v3006 = vrsqrt.pop %v3002
      %v3007 = vrsqrt.pop %v3003
      %v3008 = vrsqrt.pop %v3004
      %v3009 = vrsqrt.pop %v3005
      %v3010 = vld [vmem:[%s6] sm:$0xff]
      %v3011 = vld [vmem:[%s6 + $0x8] sm:$0xff]
      %v3012 = vld [vmem:[%s6 + $0x10] sm:$0xff]
      %v3013 = vld [vmem:[%s6 + $0x18] sm:$0xff]
      %v3014 = vmul.f32 %v3006, %v3010
      %v3015 = vmul.f32 %v3007, %v3011
      %v3016 = vmul.f32 %v3008, %v3012
      %v3017 = vmul.f32 %v3009, %v3013
      %v3018 = vmul.f32 %v2966, %v2966
      %v3019 = vmul.f32 %v2967, %v2967
      %v3020 = vmul.f32 %v2968, %v2968
      %v3021 = vmul.f32 %v2969, %v2969
      %v3022 = vmul.f32 %v2970, %v2970
      %v3023 = vmul.f32 %v2971, %v2971
      %v3024 = vmul.f32 %v2972, %v2972
      %v3025 = vmul.f32 %v2973, %v2973
      %v3026 = vadd.f32 %v3018, %v3019
      %3027 = vadd.xlane.f32.xlu0 %v3026
      %v3028 = vpop.xlane.xlu0 %3027
      %v3029 = vadd.f32 %v3020, %v3021
      %3030 = vadd.xlane.f32.xlu0 %v3029
      %v3031 = vpop.xlane.xlu0 %3030
      %v3032 = vadd.f32 %v3022, %v3023
      %3033 = vadd.xlane.f32.xlu0 %v3032
      %v3034 = vpop.xlane.xlu0 %3033
      %v3035 = vadd.f32 %v3024, %v3025
      %3036 = vadd.xlane.f32.xlu0 %v3035
      %v3037 = vpop.xlane.xlu0 %3036
      %v3038 = vmax.f32 %v3028, 1e-24
      %v3039 = vmax.f32 %v3031, 1e-24
      %v3040 = vmax.f32 %v3034, 1e-24
      %v3041 = vmax.f32 %v3037, 1e-24
      %v3042 = vrsqrt.pop %v3038
      %v3043 = vrsqrt.pop %v3039
      %v3044 = vrsqrt.pop %v3040
      %v3045 = vrsqrt.pop %v3041
      %3047 = vset.pattern.permute.xlu0 0
      %3048 = vperm.xlu0 %3047, %v3014
      %v3049 = vpop.permute.xlu0 %3048
      %3052 = vset.pattern.permute.xlu0 0
      %3053 = vperm.xlu0 %3052, %v3015
      %v3054 = vpop.permute.xlu0 %3053
      %3057 = vset.pattern.permute.xlu0 0
      %3058 = vperm.xlu0 %3057, %v3016
      %v3059 = vpop.permute.xlu0 %3058
      %3062 = vset.pattern.permute.xlu0 0
      %3063 = vperm.xlu0 %3062, %v3017
      %v3064 = vpop.permute.xlu0 %3063
      %v3066 = vmul.f32 %v2958, %v3049
      %v3067 = vmul.f32 %v2959, %v3049
      %v3068 = vmul.f32 %v2960, %v3054
      %v3069 = vmul.f32 %v2961, %v3054
      %v3070 = vmul.f32 %v2962, %v3059
      %v3071 = vmul.f32 %v2963, %v3059
      %v3072 = vmul.f32 %v2964, %v3064
      %v3073 = vmul.f32 %v2965, %v3064
      %v3074 = vpack.c.bf16 %v3068, %v3066
      %v3075 = vpack.c.bf16 %v3069, %v3067
      %v3076 = vpack.c.bf16 %v3072, %v3070
      %v3077 = vpack.c.bf16 %v3073, %v3071
      %v3078 = vmul.f32 %v2966, %v3042
      %v3079 = vmul.f32 %v2967, %v3042
      %v3080 = vmul.f32 %v2968, %v3043
      %v3081 = vmul.f32 %v2969, %v3043
      %v3082 = vmul.f32 %v2970, %v3044
      %v3083 = vmul.f32 %v2971, %v3044
      %v3084 = vmul.f32 %v2972, %v3045
      %v3085 = vmul.f32 %v2973, %v3045
      %v3086 = vpack.c.bf16 %v3080, %v3078
      %v3087 = vpack.c.bf16 %v3081, %v3079
      %v3088 = vpack.c.bf16 %v3084, %v3082
      %v3089 = vpack.c.bf16 %v3085, %v3083
      %v3090 = vld [vmem:[%s7] sm:$0xff]
      %v3091 = vld [vmem:[%s7 + $0x8] sm:$0xff]
      %v3092 = vld [vmem:[%s7 + $0x10] sm:$0xff]
      %v3093 = vld [vmem:[%s7 + $0x18] sm:$0xff]
      %3094 = vmatprep.subr.bf16.mxu0 0
      %3095 = vmatpush1.bf16.xpose.msra.mxu0 0
      %3096 = vmatprep.subr.bf16.mxu0 0
      %3097 = vmatpush1.bf16.xpose.msra.mxu0 0
      %3098 = vmatprep.subr.bf16.mxu0 0
      %3099 = vmatpush1.bf16.xpose.msra.mxu0 0
      %3100 = vmatprep.subr.bf16.mxu0 0
      %3101 = vmatpush1.bf16.xpose.msra.mxu0 0
      %3102 = vmatprep.subr.bf16.mxu0 0
      %3103 = vmatpush1.bf16.xpose.msra.mxu0 0
      %3104 = vmatprep.subr.bf16.mxu0 0
      %3105 = vmatpush1.bf16.xpose.msra.mxu0 0
      %3106 = vmatprep.subr.bf16.mxu0 %v3089
      %3107 = vmatpush1.bf16.xpose.msra.mxu0 %v3088
      %3108 = vmatprep.subr.bf16.mxu0 %v3087
      %3109 = vmatpush1.bf16.xpose.msra.mxu0 %v3086
      %3110 = vmatprep.subr.bf16.mxu0 0
      %3111 = vmatpush2.bf16.xpose.msra.mxu0 0
      %3112 = vmatprep.subr.bf16.mxu0 0
      %3113 = vmatpush2.bf16.xpose.msra.mxu0 0
      %3114 = vmatprep.subr.bf16.mxu0 0
      %3115 = vmatpush2.bf16.xpose.msra.mxu0 0
      %3116 = vmatprep.subr.bf16.mxu0 0
      %3117 = vmatpush2.bf16.xpose.msra.mxu0 0
      %3118 = vmatprep.subr.bf16.mxu0 0
      %3119 = vmatpush2.bf16.xpose.msra.mxu0 0
      %3120 = vmatprep.subr.bf16.mxu0 0
      %3121 = vmatpush2.bf16.xpose.msra.mxu0 0
      %3122 = vmatprep.subr.bf16.mxu0 0
      %3123 = vmatpush2.bf16.xpose.msra.mxu0 0
      %3124 = vmatprep.subr.bf16.mxu0 0
      %3125 = vmatpush2.bf16.xpose.msra.mxu0 0
      %3126 = vmatprep.mubr.bf16.mxu0 %v3075
      %3127 = vmatmul.mubr.bf16.gmra.mxu0 %v3074
      %v3128 = vpop.f32.mrf.mxu0
      %v3129 = vadd.f32 %v3090, %v3128
      %v3130 = vpop.f32.mrf.mxu0
      %v3131 = vpop.f32.mrf.mxu0
      %v3132 = vadd.f32 %v3091, %v3131
      %v3133 = vpop.f32.mrf.mxu0
      %3134 = vmatprep.mubr.bf16.mxu0 %v3077
      %3135 = vmatmul.mubr.bf16.gmra.mxu0 %v3076
      %v3136 = vpop.f32.mrf.mxu0
      %v3137 = vadd.f32 %v3092, %v3136
      %v3138 = vpop.f32.mrf.mxu0
      %v3139 = vpop.f32.mrf.mxu0
      %v3140 = vadd.f32 %v3093, %v3139
      %v3141 = vpop.f32.mrf.mxu0
      %3142 = vdwg.mxu0
      %v3143 = vsel %vm423, %v3129, -inf
      %3144 = vmax.xlane.f32.xlu0 %v3143
      %v3145 = vpop.xlane.xlu0 %3144
      %v3146 = vsel %vm423, %v3132, -inf
      %3147 = vmax.xlane.f32.xlu0 %v3146
      %v3148 = vpop.xlane.xlu0 %3147
      %v3149 = vsel %vm423, %v3137, -inf
      %3150 = vmax.xlane.f32.xlu0 %v3149
      %v3151 = vpop.xlane.xlu0 %3150
      %v3152 = vsel %vm423, %v3140, -inf
      %3153 = vmax.xlane.f32.xlu0 %v3152
      %v3154 = vpop.xlane.xlu0 %3153
      %v3155 = vsub.f32 %v3129, %v3145
      %v3156 = vsub.f32 %v3132, %v3148
      %v3157 = vsub.f32 %v3137, %v3151
      %v3158 = vsub.f32 %v3140, %v3154
      %v3159 = vmul.f32 %v3155, 1.442695
      %v3160 = vpow.pop %v3159
      %v3161 = vmul.f32 %v3156, 1.442695
      %v3162 = vpow.pop %v3161
      %v3163 = vmul.f32 %v3157, 1.442695
      %v3164 = vpow.pop %v3163
      %v3165 = vmul.f32 %v3158, 1.442695
      %v3166 = vpow.pop %v3165
      %v3167 = vsel %vm423, %v3160, 0.0
      %3168 = vadd.xlane.f32.xlu0 %v3167
      %v3169 = vpop.xlane.xlu0 %3168
      %v3170 = vsel %vm423, %v3162, 0.0
      %3171 = vadd.xlane.f32.xlu0 %v3170
      %v3172 = vpop.xlane.xlu0 %3171
      %v3173 = vsel %vm423, %v3164, 0.0
      %3174 = vadd.xlane.f32.xlu0 %v3173
      %v3175 = vpop.xlane.xlu0 %3174
      %v3176 = vsel %vm423, %v3166, 0.0
      %3177 = vadd.xlane.f32.xlu0 %v3176
      %v3178 = vpop.xlane.xlu0 %3177
      %v3179 = vrcp.pop %v3169
      %v3180 = vrcp.pop %v3172
      %v3181 = vrcp.pop %v3175
      %v3182 = vrcp.pop %v3178
      %v3183 = vmul.f32 %v3160, %v3179
      %v3184 = vmul.f32 %v3162, %v3180
      %v3185 = vmul.f32 %v3164, %v3181
      %v3186 = vmul.f32 %v3166, %v3182
      %v3187 = vpack.c.bf16 %v3184, %v3183
      %v3188 = vpack.c.bf16 %v3186, %v3185
      %v3189 = vpack.c.bf16 %v2976, %v2974
      %v3190 = vpack.c.bf16 %v2977, %v2975
      %v3191 = vpack.c.bf16 %v2980, %v2978
      %v3192 = vpack.c.bf16 %v2981, %v2979
      %v3194 = vsel %vm423, %v3187, 0
      %v3197 = vsel %vm423, %v3188, 0
      %3199 = vmatprep.subr.bf16.mxu0 0
      %3200 = vmatpush1.bf16.msra.mxu0 0
      %3201 = vmatprep.subr.bf16.mxu0 0
      %3202 = vmatpush1.bf16.msra.mxu0 0
      %3203 = vmatprep.subr.bf16.mxu0 0
      %3204 = vmatpush1.bf16.msra.mxu0 0
      %3205 = vmatprep.subr.bf16.mxu0 0
      %3206 = vmatpush1.bf16.msra.mxu0 0
      %3207 = vmatprep.subr.bf16.mxu0 0
      %3208 = vmatpush1.bf16.msra.mxu0 0
      %3209 = vmatprep.subr.bf16.mxu0 0
      %3210 = vmatpush1.bf16.msra.mxu0 0
      %3211 = vmatprep.subr.bf16.mxu0 %v3192
      %3212 = vmatpush1.bf16.msra.mxu0 %v3191
      %3213 = vmatprep.subr.bf16.mxu0 %v3190
      %3214 = vmatpush1.bf16.msra.mxu0 %v3189
      %3215 = vmatprep.subr.bf16.mxu0 0
      %3216 = vmatpush2.bf16.msra.mxu0 0
      %3217 = vmatprep.subr.bf16.mxu0 0
      %3218 = vmatpush2.bf16.msra.mxu0 0
      %3219 = vmatprep.subr.bf16.mxu0 0
      %3220 = vmatpush2.bf16.msra.mxu0 0
      %3221 = vmatprep.subr.bf16.mxu0 0
      %3222 = vmatpush2.bf16.msra.mxu0 0
      %3223 = vmatprep.subr.bf16.mxu0 0
      %3224 = vmatpush2.bf16.msra.mxu0 0
      %3225 = vmatprep.subr.bf16.mxu0 0
      %3226 = vmatpush2.bf16.msra.mxu0 0
      %3227 = vmatprep.subr.bf16.mxu0 0
      %3228 = vmatpush2.bf16.msra.mxu0 0
      %3229 = vmatprep.subr.bf16.mxu0 0
      %3230 = vmatpush2.bf16.msra.mxu0 0
      %3231 = vmatprep.mubr.bf16.mxu0 0
      %3232 = vmatmul.mubr.bf16.gmra.mxu0 %v3194
      %v3233 = vpop.f32.mrf.mxu0
      %v3234 = vadd.f32 0.0, %v3233
      %v3235 = vpop.f32.mrf.mxu0
      %v3236 = vadd.f32 0.0, %v3235
      %v3237 = vpop.f32.mrf.mxu0
      %v3238 = vadd.f32 0.0, %v3237
      %v3239 = vpop.f32.mrf.mxu0
      %v3240 = vadd.f32 0.0, %v3239
      %3241 = vmatprep.mubr.bf16.mxu0 0
      %3242 = vmatmul.mubr.bf16.gmra.mxu0 %v3197
      %v3243 = vpop.f32.mrf.mxu0
      %v3244 = vadd.f32 0.0, %v3243
      %v3245 = vpop.f32.mrf.mxu0
      %v3246 = vadd.f32 0.0, %v3245
      %v3247 = vpop.f32.mrf.mxu0
      %v3248 = vadd.f32 0.0, %v3247
      %v3249 = vpop.f32.mrf.mxu0
      %v3250 = vadd.f32 0.0, %v3249
      %3251 = vdwg.mxu0
      %v3252 = vld [vmem:[%s8] sm:$0xf]
      %v3253 = vld [vmem:[%s8 + $0x4] sm:$0xf]
      %v3254 = vpack.c.bf16 %v3238, %v3234
      %v3255 = vpack.c.bf16 %v3240, %v3236
      %v3256 = vpack.c.bf16 %v3248, %v3244
      %v3257 = vpack.c.bf16 %v3250, %v3246
      %v3258 = vld [vmem:[%s9] sm:$0xff]
      %v3259 = vld [vmem:[%s9 + $0x8] sm:$0xff]
      %3261 = vset.pattern.permute.xlu0 0
      %3262 = vperm.xlu0 %3261, %v3258
      %v3263 = vpop.permute.xlu0 %3262
      %3266 = vset.pattern.permute.xlu0 0
      %3267 = vperm.xlu0 %3266, %v3259
      %v3268 = vpop.permute.xlu0 %3267
      %v3272 = vunpack.c.l.b16 %v3252
      %v3273 = vunpack.c.l.b16 %v3253
      %v3274 = vpack.c.b16 %v3273, %v3272
      %v3276 = vsel %vm423, %v3274, 0
      %3278 = vmatprep.subr.bf16.mxu0 0
      %3279 = vmatpush1.bf16.msra.mxu0 0
      %3280 = vmatprep.subr.bf16.mxu0 0
      %3281 = vmatpush1.bf16.msra.mxu0 0
      %3282 = vmatprep.subr.bf16.mxu0 0
      %3283 = vmatpush1.bf16.msra.mxu0 0
      %3284 = vmatprep.subr.bf16.mxu0 0
      %3285 = vmatpush1.bf16.msra.mxu0 0
      %3286 = vmatprep.subr.bf16.mxu0 0
      %3287 = vmatpush1.bf16.msra.mxu0 0
      %3288 = vmatprep.subr.bf16.mxu0 0
      %3289 = vmatpush1.bf16.msra.mxu0 0
      %3290 = vmatprep.subr.bf16.mxu0 %v3257
      %3291 = vmatpush1.bf16.msra.mxu0 %v3256
      %3292 = vmatprep.subr.bf16.mxu0 %v3255
      %3293 = vmatpush1.bf16.msra.mxu0 %v3254
      %3294 = vmatprep.subr.bf16.mxu0 0
      %3295 = vmatpush2.bf16.msra.mxu0 0
      %3296 = vmatprep.subr.bf16.mxu0 0
      %3297 = vmatpush2.bf16.msra.mxu0 0
      %3298 = vmatprep.subr.bf16.mxu0 0
      %3299 = vmatpush2.bf16.msra.mxu0 0
      %3300 = vmatprep.subr.bf16.mxu0 0
      %3301 = vmatpush2.bf16.msra.mxu0 0
      %3302 = vmatprep.subr.bf16.mxu0 0
      %3303 = vmatpush2.bf16.msra.mxu0 0
      %3304 = vmatprep.subr.bf16.mxu0 0
      %3305 = vmatpush2.bf16.msra.mxu0 0
      %3306 = vmatprep.subr.bf16.mxu0 0
      %3307 = vmatpush2.bf16.msra.mxu0 0
      %3308 = vmatprep.subr.bf16.mxu0 0
      %3309 = vmatpush2.bf16.msra.mxu0 0
      %3310 = vmatprep.mubr.bf16.mxu0 0
      %3311 = vmatmul.mubr.bf16.gmra.mxu0 %v3276
      %v3312 = vpop.f32.mrf.mxu0
      %v3313 = vadd.f32 %v3263, %v3312
      %v3314 = vpop.f32.mrf.mxu0
      %v3315 = vadd.f32 %v3263, %v3314
      %v3316 = vpop.f32.mrf.mxu0
      %v3317 = vadd.f32 %v3268, %v3316
      %v3318 = vpop.f32.mrf.mxu0
      %v3319 = vadd.f32 %v3268, %v3318
      %3320 = vdwg.mxu0
      %3321 = vst [vmem:[%s359] sm:$0xff] %v3313
      %3322 = vst [vmem:[%s359 + $0x8] sm:$0xff] %v3315
      %3323 = vst [vmem:[%s359 + $0x10] sm:$0xff] %v3317
      %3324 = vst [vmem:[%s359 + $0x18] sm:$0xff] %v3319
      %p3325 = scmp.lt.s32.totalorder %s21, 1
      %s3326 = scalar_select %p3325, %s21, 1
      %s3327 = smul.addr %s3326, 4
      %s3328 = smul.addr %s3327, 8
      %s3329 = scalar_lea.vmem %s10, %s3328
      // Predicated region
      $region61: #{self_attention_forward.1} parent=59 // pred_check
        %p3330 = pneg %p254
      $region62: #{self_attention_forward.1} parent=59 // pred_check_branch
        %3332 = sbr.rel (%p3330) target = $region64
      $region63: #{self_attention_forward.1} parent=59 // pred_region
        _
      $region64: #{self_attention_forward.1} parent=59 // pred_fallthru
        _
    $region60: #{self_attention_forward.1} parent=5 // pred_fallthru
      _
    %p3333 = scmp.le.s32.totalorder 2, %s16
    // Predicated region
    $region65: #{self_attention_forward.1} parent=5 // pred_check
      %p3334 = pneg %p3333
    $region66: #{self_attention_forward.1} parent=5 // pred_check_branch
      %3336 = sbr.rel (%p3334) target = $region68
    $region67: #{self_attention_forward.1} parent=5 // pred_region
      %s3337 = ssub.s32 %s16, 2
      // Predicated region
      $region69: #{self_attention_forward.1} parent=67 // pred_check
        %p3338 = pneg %p260
      $region70: #{self_attention_forward.1} parent=67 // pred_check_branch
        %3340 = sbr.rel (%p3338) target = $region72
      $region71: #{self_attention_forward.1} parent=67 // pred_region
        %p3341 = scmp.lt.s32.totalorder %s22, 1
        %s3342 = scalar_select %p3341, %s22, 1
        %s3343 = smul.addr %s3342, 4
        %s3344 = smul.addr %s3343, 8
        %s3345 = scalar_lea.vmem %s10, %s3344
      $region72: #{self_attention_forward.1} parent=67 // pred_fallthru
        _
    $region68: #{self_attention_forward.1} parent=5 // pred_fallthru
      _
  $region6: #{self_attention_forward.1} parent=0 // loop_footer
    %s20 = sadd.s32 1, %s16
  $region7: #{self_attention_forward.1} parent=0 // loop_footer_branch
    %15 = sbr.rel target = $region3
  $region8: #{self_attention_forward.1} parent=0 // loop_exit
    _

</llo_original>
